<compile_context>
chip_gen: v7x
topology: tpu7x:2x2x1
jax: 0.10.0
libtpu: 0.0.40
codegen_flags: <defaults>
</compile_context>

<pallas_src>
import math

import jax
import jax.numpy as jnp
from jax.experimental import pallas as pl
from jax.experimental.pallas import tpu as pltpu


# ------------------------------ fused Pallas kernel ------------------------------

def _lenet_fused_kernel(x_ref, m1_ref, bc1_ref, p1_ref, q1_ref,
                        m2_ref, bc2_ref, p2_ref, q2_ref,
                        m3_ref, bc3_ref, e_ref,
                        w1_ref, b1_ref, w2_ref, b2_ref,
                        out_ref, z1_ref, z2_ref):
    """Whole LeNetv2 forward on VMEM-resident operands."""

    def conv_relu(in_ref, m_ref, bias_ref):
        # in_ref: (R_in, Win*Cin) rows = b*S + i; m_ref: (K, Win*Cin, Wout*Cout)
        k = m_ref.shape[0]
        rout = in_ref.shape[0] - (k - 1)
        acc = jnp.dot(in_ref[0:rout, :], m_ref[0],
                      preferred_element_type=jnp.float32)
        for dy in range(1, k):                       # static unroll over the 5 taps
            acc = acc + jnp.dot(in_ref[dy:dy + rout, :], m_ref[dy],
                                preferred_element_type=jnp.float32)
        return jnp.maximum(acc + bias_ref[...], 0.0)

    # conv1(1->6) + ReLU : (B*32, 32) -> (B*32-4, 28*6)
    c1 = conv_relu(x_ref, m1_ref, bc1_ref)
    # avgpool1 (2x2/2) as P1 @ c1 @ Q1 : -> (B*16, 14*6)
    z1_ref[...] = jnp.dot(jnp.dot(p1_ref[...], c1, preferred_element_type=jnp.float32),
                          q1_ref[...], preferred_element_type=jnp.float32)

    # conv2(6->16) + ReLU : -> (B*16-4, 10*16)
    c2 = conv_relu(z1_ref, m2_ref, bc2_ref)
    # avgpool2 : -> (B*8, 5*16)
    z2_ref[...] = jnp.dot(jnp.dot(p2_ref[...], c2, preferred_element_type=jnp.float32),
                          q2_ref[...], preferred_element_type=jnp.float32)

    # conv3(16->120) + ReLU : -> (B*8-4, 120)   (1x1 spatial => lanes are channels)
    c3 = conv_relu(z2_ref, m3_ref, bc3_ref)

    # flatten == select row b*8 of each batch block : (B, 120)
    feat = jnp.dot(e_ref[...], c3, preferred_element_type=jnp.float32)

    # classifier
    h1 = jnp.maximum(
        jnp.dot(feat, w1_ref[...], preferred_element_type=jnp.float32) + b1_ref[...],
        0.0)
    logits = jnp.dot(h1, w2_ref[...], preferred_element_type=jnp.float32) + b2_ref[...]

    # softmax over dim=0 (the batch axis), as in the PyTorch spec
    m = jnp.max(logits, axis=0, keepdims=True)
    e = jnp.exp(logits - m)
    denom = jnp.sum(e, axis=0, keepdims=True)
    out_ref[...] = (e * pl.reciprocal(denom, approx=True)).astype(out_ref.dtype)


# ------------------------- plan: weight-derived constants -------------------------

def _conv_band_matrices(w_oihw, win):
    """Banded matmul weights: M[dy, j_in*Cin+ci, j_out*Cout+co] = w[co,ci,dy,j_in-j_out]."""
    cout, cin, k, _ = w_oihw.shape
    wout = win - k + 1
    w_t = jnp.transpose(w_oihw, (2, 3, 1, 0))               # (k_dy, k_dx, cin, cout)
    j_in = jnp.arange(win)[:, None]
    j_out = jnp.arange(wout)[None, :]
    dx = j_in - j_out                                       # (win, wout)
    valid = (dx >= 0) & (dx < k)
    blk = w_t[:, jnp.clip(dx, 0, k - 1)]                    # (k, win, wout, cin, cout)
    blk = jnp.where(valid[None, :, :, None, None], blk, 0.0)
    return jnp.transpose(blk, (0, 1, 3, 2, 4)).reshape(k, win * cin, wout * cout)


def _pool_row_matrix(batch, stride_in, rows_in, stride_out):
    """(batch*stride_out, rows_in): 0.5 at [b*stride_out+i2, b*stride_in+2*i2+di]."""
    r_out = jnp.arange(batch * stride_out)
    base = (r_out // stride_out) * stride_in + 2 * (r_out % stride_out)
    cols = jnp.arange(rows_in)[None, :]
    hit = (cols == base[:, None]) | (cols == base[:, None] + 1)
    return 0.5 * hit.astype(jnp.float32)


def _pool_col_matrix(w_in, w_out, c):
    """(w_in*c, w_out*c): 0.5 at [(2*j2+dj)*c + ch, j2*c + ch]."""
    lin, lout = jnp.arange(w_in * c), jnp.arange(w_out * c)
    j_in, c_in = lin // c, lin % c
    j_out, c_out = lout // c, lout % c
    hit = ((j_in[:, None] == 2 * j_out[None, :]) |
           (j_in[:, None] == 2 * j_out[None, :] + 1)) & (c_in[:, None] == c_out[None, :])
    return 0.5 * hit.astype(jnp.float32)


def _row_select_matrix(batch, stride, rows_in):
    """(batch, rows_in): 1 at [b, b*stride] — extracts the single valid conv3 row."""
    cols = jnp.arange(rows_in)[None, :]
    rows = (jnp.arange(batch) * stride)[:, None]
    return (cols == rows).astype(jnp.float32)


def build_plan(params, batch):
    """One-time (init-time) transform of the PyTorch-layout params into the
    lane-dense constant matrices the fused kernel consumes. 32x32x1 input only."""
    return {
        # conv1: 32 -> 28, pool -> 14
        "m1": _conv_band_matrices(params["c1_w"], win=32),          # (5, 32, 168)
        "bc1": jnp.tile(params["c1_b"], 28)[None, :],               # (1, 168)
        "p1": _pool_row_matrix(batch, 32, batch * 32 - 4, 16),      # (B*16, B*32-4)
        "q1": _pool_col_matrix(28, 14, 6),                          # (168, 84)
        # conv2: 14 -> 10, pool -> 5
        "m2": _conv_band_matrices(params["c2_w"], win=14),          # (5, 84, 160)
        "bc2": jnp.tile(params["c2_b"], 10)[None, :],               # (1, 160)
        "p2": _pool_row_matrix(batch, 16, batch * 16 - 4, 8),       # (B*8, B*16-4)
        "q2": _pool_col_matrix(10, 5, 16),                          # (160, 80)
        # conv3: 5 -> 1
        "m3": _conv_band_matrices(params["c3_w"], win=5),           # (5, 80, 120)
        "bc3": params["c3_b"][None, :],                             # (1, 120)
        "e": _row_select_matrix(batch, 8, batch * 8 - 4),           # (B, B*8-4)
        # classifier (torch (out,in) -> (in,out))
        "w1": params["f1_w"].T, "b1": params["f1_b"][None, :],
        "w2": params["f2_w"].T, "b2": params["f2_b"][None, :],
    }


# --------------------------------- forward wrapper --------------------------------

@jax.jit
def lenet_forward(x_nchw, plan):
    b, c, h, w = x_nchw.shape
    assert c == 1 and h == 32 and w == 32, "LeNetv2 expects (B, 1, 32, 32) input"
    assert plan["e"].shape[0] == b, "plan was built for a different batch size"
    out_features = plan["w2"].shape[1]

    # rows = b*32 + h, lanes = w (Cin=1): a free, contiguous reshape of NCHW.
    x2d = x_nchw.astype(jnp.float32).reshape(b * h, w)

    args = (x2d, plan["m1"], plan["bc1"], plan["p1"], plan["q1"],
            plan["m2"], plan["bc2"], plan["p2"], plan["q2"],
            plan["m3"], plan["bc3"], plan["e"],
            plan["w1"], plan["b1"], plan["w2"], plan["b2"])
    vmem = pl.BlockSpec(memory_space=pltpu.MemorySpace.VMEM)

    return pl.pallas_call(
        _lenet_fused_kernel,
        out_shape=jax.ShapeDtypeStruct((b, out_features), jnp.float32),
        in_specs=[vmem] * len(args),
        out_specs=vmem,
        scratch_shapes=[pltpu.VMEM((b * 16, 14 * 6), jnp.float32),   # pooled act 1
                        pltpu.VMEM((b * 8, 5 * 16), jnp.float32)],   # pooled act 2
    )(*args)


# ------------------------------ pure-JAX reference --------------------------------

def _conv_ref(x, w, b):
    y = jax.lax.conv_general_dilated(x, w, (1, 1), "VALID",
                                     dimension_numbers=("NCHW", "OIHW", "NCHW"))
    return y + b[None, :, None, None]


def _avgpool2_ref(a):
    b, c, h, w = a.shape
    return a.reshape(b, c, h // 2, 2, w // 2, 2).mean(axis=(3, 5))


def lenet_reference(x, p):
    a = _avgpool2_ref(jax.nn.relu(_conv_ref(x, p["c1_w"], p["c1_b"])))
    a = _avgpool2_ref(jax.nn.relu(_conv_ref(a, p["c2_w"], p["c2_b"])))
    a = jax.nn.relu(_conv_ref(a, p["c3_w"], p["c3_b"]))
    a = a.reshape(a.shape[0], -1)                                   # (B, 120)
    a = jax.nn.relu(a @ p["f1_w"].T + p["f1_b"])
    logits = a @ p["f2_w"].T + p["f2_b"]
    return jax.nn.softmax(logits, axis=0)                           # dim=0, per spec


# ----------------------------------- param init ------------------------------------

def init_params(key, out_features=10):
    ks = jax.random.split(key, 10)

    def u(k, shape, fan_in):
        bound = 1.0 / math.sqrt(fan_in)
        return jax.random.uniform(k, shape, jnp.float32, -bound, bound)

    return {
        "c1_w": u(ks[0], (6, 1, 5, 5), 25),     "c1_b": u(ks[1], (6,), 25),
        "c2_w": u(ks[2], (16, 6, 5, 5), 150),   "c2_b": u(ks[3], (16,), 150),
        "c3_w": u(ks[4], (120, 16, 5, 5), 400), "c3_b": u(ks[5], (120,), 400),
        "f1_w": u(ks[6], (84, 120), 120),       "f1_b": u(ks[7], (84,), 120),
        "f2_w": u(ks[8], (out_features, 84), 84), "f2_b": u(ks[9], (out_features,), 84),
    }


# --------------------------------------- main ---------------------------------------

if __name__ == "__main__":
    key = jax.random.PRNGKey(0)
    k_x, k_p = jax.random.split(key)

    out_features = 10
    x = jax.random.normal(k_x, (2, 1, 32, 32), dtype=jnp.float32)
    params = init_params(k_p, out_features=out_features)
    plan = build_plan(params, batch=x.shape[0])          # one-time weight transform

    y = jax.block_until_ready(lenet_forward(x, plan))

    assert y.shape == (2, out_features), y.shape
    # softmax over dim=0 -> every column sums to 1 (approx reciprocal => loose tol)
    assert bool(jnp.all(jnp.abs(jnp.sum(y, axis=0) - 1.0) < 5e-3))
    # cross-check against a plain-JAX reference of the same module
    y_ref = lenet_reference(x, params)
    assert bool(jnp.max(jnp.abs(y - y_ref)) < 3e-2), float(jnp.max(jnp.abs(y - y_ref)))

    print("KERNEL_OK")
</pallas_src>

<mosaic_0001>
module attributes {stable_mosaic.version = 11 : i64} {
  func.func @_lenet_fused_kernel(%arg0: memref<64x32xf32, #tpu.memory_space<vmem>>, %arg1: memref<5x32x168xf32, #tpu.memory_space<vmem>>, %arg2: memref<1x168xf32, #tpu.memory_space<vmem>>, %arg3: memref<32x60xf32, #tpu.memory_space<vmem>>, %arg4: memref<168x84xf32, #tpu.memory_space<vmem>>, %arg5: memref<5x84x160xf32, #tpu.memory_space<vmem>>, %arg6: memref<1x160xf32, #tpu.memory_space<vmem>>, %arg7: memref<16x28xf32, #tpu.memory_space<vmem>>, %arg8: memref<160x80xf32, #tpu.memory_space<vmem>>, %arg9: memref<5x80x120xf32, #tpu.memory_space<vmem>>, %arg10: memref<1x120xf32, #tpu.memory_space<vmem>>, %arg11: memref<2x12xf32, #tpu.memory_space<vmem>>, %arg12: memref<120x84xf32, #tpu.memory_space<vmem>>, %arg13: memref<1x84xf32, #tpu.memory_space<vmem>>, %arg14: memref<84x10xf32, #tpu.memory_space<vmem>>, %arg15: memref<1x10xf32, #tpu.memory_space<vmem>>, %arg16: memref<2x10xf32, #tpu.memory_space<vmem>>, %arg17: memref<32x84xf32, #tpu.memory_space<vmem>>, %arg18: memref<16x80xf32, #tpu.memory_space<vmem>>) attributes {dimension_semantics = [], scalar_prefetch = 0 : i64, scratch_operands = 2 : i64, tpu.core_type = #tpu.core_type<tc>} {
    %c0 = arith.constant 0 : index
    %c0_0 = arith.constant 0 : index
    %0 = vector.load %arg0[%c0, %c0_0] : memref<64x32xf32, #tpu.memory_space<vmem>>, vector<60x32xf32>
    %c0_1 = arith.constant 0 : index
    %c0_2 = arith.constant 0 : index
    %c0_3 = arith.constant 0 : index
    %1 = vector.load %arg1[%c0_1, %c0_2, %c0_3] : memref<5x32x168xf32, #tpu.memory_space<vmem>>, vector<1x32x168xf32>
    %2 = vector.shape_cast %1 : vector<1x32x168xf32> to vector<32x168xf32>
    %cst = arith.constant dense<0.000000e+00> : vector<60x168xf32>
    %3 = tpu.matmul %0, %2, %cst {dimension_numbers = #tpu.dot_dimension_numbers<[1], [0], [0], [1], [0, 0, 1, 1], [], []>} : vector<60x32xf32>, vector<32x168xf32>, vector<60x168xf32> -> vector<60x168xf32>
    %c1 = arith.constant 1 : index
    %c0_4 = arith.constant 0 : index
    %4 = vector.load %arg0[%c1, %c0_4] : memref<64x32xf32, #tpu.memory_space<vmem>>, vector<60x32xf32>
    %c1_5 = arith.constant 1 : index
    %c0_6 = arith.constant 0 : index
    %c0_7 = arith.constant 0 : index
    %5 = vector.load %arg1[%c1_5, %c0_6, %c0_7] : memref<5x32x168xf32, #tpu.memory_space<vmem>>, vector<1x32x168xf32>
    %6 = vector.shape_cast %5 : vector<1x32x168xf32> to vector<32x168xf32>
    %cst_8 = arith.constant dense<0.000000e+00> : vector<60x168xf32>
    %7 = tpu.matmul %4, %6, %cst_8 {dimension_numbers = #tpu.dot_dimension_numbers<[1], [0], [0], [1], [0, 0, 1, 1], [], []>} : vector<60x32xf32>, vector<32x168xf32>, vector<60x168xf32> -> vector<60x168xf32>
    %8 = arith.addf %3, %7 : vector<60x168xf32>
    %c2 = arith.constant 2 : index
    %c0_9 = arith.constant 0 : index
    %9 = vector.load %arg0[%c2, %c0_9] : memref<64x32xf32, #tpu.memory_space<vmem>>, vector<60x32xf32>
    %c2_10 = arith.constant 2 : index
    %c0_11 = arith.constant 0 : index
    %c0_12 = arith.constant 0 : index
    %10 = vector.load %arg1[%c2_10, %c0_11, %c0_12] : memref<5x32x168xf32, #tpu.memory_space<vmem>>, vector<1x32x168xf32>
    %11 = vector.shape_cast %10 : vector<1x32x168xf32> to vector<32x168xf32>
    %cst_13 = arith.constant dense<0.000000e+00> : vector<60x168xf32>
    %12 = tpu.matmul %9, %11, %cst_13 {dimension_numbers = #tpu.dot_dimension_numbers<[1], [0], [0], [1], [0, 0, 1, 1], [], []>} : vector<60x32xf32>, vector<32x168xf32>, vector<60x168xf32> -> vector<60x168xf32>
    %13 = arith.addf %8, %12 : vector<60x168xf32>
    %c3 = arith.constant 3 : index
    %c0_14 = arith.constant 0 : index
    %14 = vector.load %arg0[%c3, %c0_14] : memref<64x32xf32, #tpu.memory_space<vmem>>, vector<60x32xf32>
    %c3_15 = arith.constant 3 : index
    %c0_16 = arith.constant 0 : index
    %c0_17 = arith.constant 0 : index
    %15 = vector.load %arg1[%c3_15, %c0_16, %c0_17] : memref<5x32x168xf32, #tpu.memory_space<vmem>>, vector<1x32x168xf32>
    %16 = vector.shape_cast %15 : vector<1x32x168xf32> to vector<32x168xf32>
    %cst_18 = arith.constant dense<0.000000e+00> : vector<60x168xf32>
    %17 = tpu.matmul %14, %16, %cst_18 {dimension_numbers = #tpu.dot_dimension_numbers<[1], [0], [0], [1], [0, 0, 1, 1], [], []>} : vector<60x32xf32>, vector<32x168xf32>, vector<60x168xf32> -> vector<60x168xf32>
    %18 = arith.addf %13, %17 : vector<60x168xf32>
    %c4 = arith.constant 4 : index
    %c0_19 = arith.constant 0 : index
    %19 = vector.load %arg0[%c4, %c0_19] : memref<64x32xf32, #tpu.memory_space<vmem>>, vector<60x32xf32>
    %c4_20 = arith.constant 4 : index
    %c0_21 = arith.constant 0 : index
    %c0_22 = arith.constant 0 : index
    %20 = vector.load %arg1[%c4_20, %c0_21, %c0_22] : memref<5x32x168xf32, #tpu.memory_space<vmem>>, vector<1x32x168xf32>
    %21 = vector.shape_cast %20 : vector<1x32x168xf32> to vector<32x168xf32>
    %cst_23 = arith.constant dense<0.000000e+00> : vector<60x168xf32>
    %22 = tpu.matmul %19, %21, %cst_23 {dimension_numbers = #tpu.dot_dimension_numbers<[1], [0], [0], [1], [0, 0, 1, 1], [], []>} : vector<60x32xf32>, vector<32x168xf32>, vector<60x168xf32> -> vector<60x168xf32>
    %23 = arith.addf %18, %22 : vector<60x168xf32>
    %c0_24 = arith.constant 0 : index
    %c0_25 = arith.constant 0 : index
    %24 = vector.load %arg2[%c0_24, %c0_25] : memref<1x168xf32, #tpu.memory_space<vmem>>, vector<1x168xf32>
    %25 = vector.broadcast %24 : vector<1x168xf32> to vector<60x168xf32>
    %26 = arith.addf %23, %25 : vector<60x168xf32>
    %cst_26 = arith.constant 0.000000e+00 : f32
    %27 = vector.broadcast %cst_26 : f32 to vector<60x168xf32>
    %28 = arith.maximumf %26, %27 : vector<60x168xf32>
    %c0_27 = arith.constant 0 : index
    %c0_28 = arith.constant 0 : index
    %29 = vector.load %arg3[%c0_27, %c0_28] : memref<32x60xf32, #tpu.memory_space<vmem>>, vector<32x60xf32>
    %cst_29 = arith.constant dense<0.000000e+00> : vector<32x168xf32>
    %30 = tpu.matmul %29, %28, %cst_29 {dimension_numbers = #tpu.dot_dimension_numbers<[1], [0], [0], [1], [0, 0, 1, 1], [], []>} : vector<32x60xf32>, vector<60x168xf32>, vector<32x168xf32> -> vector<32x168xf32>
    %c0_30 = arith.constant 0 : index
    %c0_31 = arith.constant 0 : index
    %31 = vector.load %arg4[%c0_30, %c0_31] : memref<168x84xf32, #tpu.memory_space<vmem>>, vector<168x84xf32>
    %cst_32 = arith.constant dense<0.000000e+00> : vector<32x84xf32>
    %32 = tpu.matmul %30, %31, %cst_32 {dimension_numbers = #tpu.dot_dimension_numbers<[1], [0], [0], [1], [0, 0, 1, 1], [], []>} : vector<32x168xf32>, vector<168x84xf32>, vector<32x84xf32> -> vector<32x84xf32>
    %c0_33 = arith.constant 0 : index
    %c0_34 = arith.constant 0 : index
    %33 = vector.load %arg17[%c0_33, %c0_34] : memref<32x84xf32, #tpu.memory_space<vmem>>, vector<32x84xf32>
    tpu.vector_store %arg17[%c0_33, %c0_34], %32 {strides = array<i32>} : memref<32x84xf32, #tpu.memory_space<vmem>>, vector<32x84xf32>,
    %c0_35 = arith.constant 0 : index
    %c0_36 = arith.constant 0 : index
    %34 = vector.load %arg17[%c0_35, %c0_36] : memref<32x84xf32, #tpu.memory_space<vmem>>, vector<28x84xf32>
    %c0_37 = arith.constant 0 : index
    %c0_38 = arith.constant 0 : index
    %c0_39 = arith.constant 0 : index
    %35 = vector.load %arg5[%c0_37, %c0_38, %c0_39] : memref<5x84x160xf32, #tpu.memory_space<vmem>>, vector<1x84x160xf32>
    %36 = vector.shape_cast %35 : vector<1x84x160xf32> to vector<84x160xf32>
    %cst_40 = arith.constant dense<0.000000e+00> : vector<28x160xf32>
    %37 = tpu.matmul %34, %36, %cst_40 {dimension_numbers = #tpu.dot_dimension_numbers<[1], [0], [0], [1], [0, 0, 1, 1], [], []>} : vector<28x84xf32>, vector<84x160xf32>, vector<28x160xf32> -> vector<28x160xf32>
    %c1_41 = arith.constant 1 : index
    %c0_42 = arith.constant 0 : index
    %38 = vector.load %arg17[%c1_41, %c0_42] : memref<32x84xf32, #tpu.memory_space<vmem>>, vector<28x84xf32>
    %c1_43 = arith.constant 1 : index
    %c0_44 = arith.constant 0 : index
    %c0_45 = arith.constant 0 : index
    %39 = vector.load %arg5[%c1_43, %c0_44, %c0_45] : memref<5x84x160xf32, #tpu.memory_space<vmem>>, vector<1x84x160xf32>
    %40 = vector.shape_cast %39 : vector<1x84x160xf32> to vector<84x160xf32>
    %cst_46 = arith.constant dense<0.000000e+00> : vector<28x160xf32>
    %41 = tpu.matmul %38, %40, %cst_46 {dimension_numbers = #tpu.dot_dimension_numbers<[1], [0], [0], [1], [0, 0, 1, 1], [], []>} : vector<28x84xf32>, vector<84x160xf32>, vector<28x160xf32> -> vector<28x160xf32>
    %42 = arith.addf %37, %41 : vector<28x160xf32>
    %c2_47 = arith.constant 2 : index
    %c0_48 = arith.constant 0 : index
    %43 = vector.load %arg17[%c2_47, %c0_48] : memref<32x84xf32, #tpu.memory_space<vmem>>, vector<28x84xf32>
    %c2_49 = arith.constant 2 : index
    %c0_50 = arith.constant 0 : index
    %c0_51 = arith.constant 0 : index
    %44 = vector.load %arg5[%c2_49, %c0_50, %c0_51] : memref<5x84x160xf32, #tpu.memory_space<vmem>>, vector<1x84x160xf32>
    %45 = vector.shape_cast %44 : vector<1x84x160xf32> to vector<84x160xf32>
    %cst_52 = arith.constant dense<0.000000e+00> : vector<28x160xf32>
    %46 = tpu.matmul %43, %45, %cst_52 {dimension_numbers = #tpu.dot_dimension_numbers<[1], [0], [0], [1], [0, 0, 1, 1], [], []>} : vector<28x84xf32>, vector<84x160xf32>, vector<28x160xf32> -> vector<28x160xf32>
    %47 = arith.addf %42, %46 : vector<28x160xf32>
    %c3_53 = arith.constant 3 : index
    %c0_54 = arith.constant 0 : index
    %48 = vector.load %arg17[%c3_53, %c0_54] : memref<32x84xf32, #tpu.memory_space<vmem>>, vector<28x84xf32>
    %c3_55 = arith.constant 3 : index
    %c0_56 = arith.constant 0 : index
    %c0_57 = arith.constant 0 : index
    %49 = vector.load %arg5[%c3_55, %c0_56, %c0_57] : memref<5x84x160xf32, #tpu.memory_space<vmem>>, vector<1x84x160xf32>
    %50 = vector.shape_cast %49 : vector<1x84x160xf32> to vector<84x160xf32>
    %cst_58 = arith.constant dense<0.000000e+00> : vector<28x160xf32>
    %51 = tpu.matmul %48, %50, %cst_58 {dimension_numbers = #tpu.dot_dimension_numbers<[1], [0], [0], [1], [0, 0, 1, 1], [], []>} : vector<28x84xf32>, vector<84x160xf32>, vector<28x160xf32> -> vector<28x160xf32>
    %52 = arith.addf %47, %51 : vector<28x160xf32>
    %c4_59 = arith.constant 4 : index
    %c0_60 = arith.constant 0 : index
    %53 = vector.load %arg17[%c4_59, %c0_60] : memref<32x84xf32, #tpu.memory_space<vmem>>, vector<28x84xf32>
    %c4_61 = arith.constant 4 : index
    %c0_62 = arith.constant 0 : index
    %c0_63 = arith.constant 0 : index
    %54 = vector.load %arg5[%c4_61, %c0_62, %c0_63] : memref<5x84x160xf32, #tpu.memory_space<vmem>>, vector<1x84x160xf32>
    %55 = vector.shape_cast %54 : vector<1x84x160xf32> to vector<84x160xf32>
    %cst_64 = arith.constant dense<0.000000e+00> : vector<28x160xf32>
    %56 = tpu.matmul %53, %55, %cst_64 {dimension_numbers = #tpu.dot_dimension_numbers<[1], [0], [0], [1], [0, 0, 1, 1], [], []>} : vector<28x84xf32>, vector<84x160xf32>, vector<28x160xf32> -> vector<28x160xf32>
    %57 = arith.addf %52, %56 : vector<28x160xf32>
    %c0_65 = arith.constant 0 : index
    %c0_66 = arith.constant 0 : index
    %58 = vector.load %arg6[%c0_65, %c0_66] : memref<1x160xf32, #tpu.memory_space<vmem>>, vector<1x160xf32>
    %59 = vector.broadcast %58 : vector<1x160xf32> to vector<28x160xf32>
    %60 = arith.addf %57, %59 : vector<28x160xf32>
    %cst_67 = arith.constant 0.000000e+00 : f32
    %61 = vector.broadcast %cst_67 : f32 to vector<28x160xf32>
    %62 = arith.maximumf %60, %61 : vector<28x160xf32>
    %c0_68 = arith.constant 0 : index
    %c0_69 = arith.constant 0 : index
    %63 = vector.load %arg7[%c0_68, %c0_69] : memref<16x28xf32, #tpu.memory_space<vmem>>, vector<16x28xf32>
    %cst_70 = arith.constant dense<0.000000e+00> : vector<16x160xf32>
    %64 = tpu.matmul %63, %62, %cst_70 {dimension_numbers = #tpu.dot_dimension_numbers<[1], [0], [0], [1], [0, 0, 1, 1], [], []>} : vector<16x28xf32>, vector<28x160xf32>, vector<16x160xf32> -> vector<16x160xf32>
    %c0_71 = arith.constant 0 : index
    %c0_72 = arith.constant 0 : index
    %65 = vector.load %arg8[%c0_71, %c0_72] : memref<160x80xf32, #tpu.memory_space<vmem>>, vector<160x80xf32>
    %cst_73 = arith.constant dense<0.000000e+00> : vector<16x80xf32>
    %66 = tpu.matmul %64, %65, %cst_73 {dimension_numbers = #tpu.dot_dimension_numbers<[1], [0], [0], [1], [0, 0, 1, 1], [], []>} : vector<16x160xf32>, vector<160x80xf32>, vector<16x80xf32> -> vector<16x80xf32>
    %c0_74 = arith.constant 0 : index
    %c0_75 = arith.constant 0 : index
    %67 = vector.load %arg18[%c0_74, %c0_75] : memref<16x80xf32, #tpu.memory_space<vmem>>, vector<16x80xf32>
    tpu.vector_store %arg18[%c0_74, %c0_75], %66 {strides = array<i32>} : memref<16x80xf32, #tpu.memory_space<vmem>>, vector<16x80xf32>,
    %c0_76 = arith.constant 0 : index
    %c0_77 = arith.constant 0 : index
    %68 = vector.load %arg18[%c0_76, %c0_77] : memref<16x80xf32, #tpu.memory_space<vmem>>, vector<12x80xf32>
    %c0_78 = arith.constant 0 : index
    %c0_79 = arith.constant 0 : index
    %c0_80 = arith.constant 0 : index
    %69 = vector.load %arg9[%c0_78, %c0_79, %c0_80] : memref<5x80x120xf32, #tpu.memory_space<vmem>>, vector<1x80x120xf32>
    %70 = vector.shape_cast %69 : vector<1x80x120xf32> to vector<80x120xf32>
    %cst_81 = arith.constant dense<0.000000e+00> : vector<12x120xf32>
    %71 = tpu.matmul %68, %70, %cst_81 {dimension_numbers = #tpu.dot_dimension_numbers<[1], [0], [0], [1], [0, 0, 1, 1], [], []>} : vector<12x80xf32>, vector<80x120xf32>, vector<12x120xf32> -> vector<12x120xf32>
    %c1_82 = arith.constant 1 : index
    %c0_83 = arith.constant 0 : index
    %72 = vector.load %arg18[%c1_82, %c0_83] : memref<16x80xf32, #tpu.memory_space<vmem>>, vector<12x80xf32>
    %c1_84 = arith.constant 1 : index
    %c0_85 = arith.constant 0 : index
    %c0_86 = arith.constant 0 : index
    %73 = vector.load %arg9[%c1_84, %c0_85, %c0_86] : memref<5x80x120xf32, #tpu.memory_space<vmem>>, vector<1x80x120xf32>
    %74 = vector.shape_cast %73 : vector<1x80x120xf32> to vector<80x120xf32>
    %cst_87 = arith.constant dense<0.000000e+00> : vector<12x120xf32>
    %75 = tpu.matmul %72, %74, %cst_87 {dimension_numbers = #tpu.dot_dimension_numbers<[1], [0], [0], [1], [0, 0, 1, 1], [], []>} : vector<12x80xf32>, vector<80x120xf32>, vector<12x120xf32> -> vector<12x120xf32>
    %76 = arith.addf %71, %75 : vector<12x120xf32>
    %c2_88 = arith.constant 2 : index
    %c0_89 = arith.constant 0 : index
    %77 = vector.load %arg18[%c2_88, %c0_89] : memref<16x80xf32, #tpu.memory_space<vmem>>, vector<12x80xf32>
    %c2_90 = arith.constant 2 : index
    %c0_91 = arith.constant 0 : index
    %c0_92 = arith.constant 0 : index
    %78 = vector.load %arg9[%c2_90, %c0_91, %c0_92] : memref<5x80x120xf32, #tpu.memory_space<vmem>>, vector<1x80x120xf32>
    %79 = vector.shape_cast %78 : vector<1x80x120xf32> to vector<80x120xf32>
    %cst_93 = arith.constant dense<0.000000e+00> : vector<12x120xf32>
    %80 = tpu.matmul %77, %79, %cst_93 {dimension_numbers = #tpu.dot_dimension_numbers<[1], [0], [0], [1], [0, 0, 1, 1], [], []>} : vector<12x80xf32>, vector<80x120xf32>, vector<12x120xf32> -> vector<12x120xf32>
    %81 = arith.addf %76, %80 : vector<12x120xf32>
    %c3_94 = arith.constant 3 : index
    %c0_95 = arith.constant 0 : index
    %82 = vector.load %arg18[%c3_94, %c0_95] : memref<16x80xf32, #tpu.memory_space<vmem>>, vector<12x80xf32>
    %c3_96 = arith.constant 3 : index
    %c0_97 = arith.constant 0 : index
    %c0_98 = arith.constant 0 : index
    %83 = vector.load %arg9[%c3_96, %c0_97, %c0_98] : memref<5x80x120xf32, #tpu.memory_space<vmem>>, vector<1x80x120xf32>
    %84 = vector.shape_cast %83 : vector<1x80x120xf32> to vector<80x120xf32>
    %cst_99 = arith.constant dense<0.000000e+00> : vector<12x120xf32>
    %85 = tpu.matmul %82, %84, %cst_99 {dimension_numbers = #tpu.dot_dimension_numbers<[1], [0], [0], [1], [0, 0, 1, 1], [], []>} : vector<12x80xf32>, vector<80x120xf32>, vector<12x120xf32> -> vector<12x120xf32>
    %86 = arith.addf %81, %85 : vector<12x120xf32>
    %c4_100 = arith.constant 4 : index
    %c0_101 = arith.constant 0 : index
    %87 = vector.load %arg18[%c4_100, %c0_101] : memref<16x80xf32, #tpu.memory_space<vmem>>, vector<12x80xf32>
    %c4_102 = arith.constant 4 : index
    %c0_103 = arith.constant 0 : index
    %c0_104 = arith.constant 0 : index
    %88 = vector.load %arg9[%c4_102, %c0_103, %c0_104] : memref<5x80x120xf32, #tpu.memory_space<vmem>>, vector<1x80x120xf32>
    %89 = vector.shape_cast %88 : vector<1x80x120xf32> to vector<80x120xf32>
    %cst_105 = arith.constant dense<0.000000e+00> : vector<12x120xf32>
    %90 = tpu.matmul %87, %89, %cst_105 {dimension_numbers = #tpu.dot_dimension_numbers<[1], [0], [0], [1], [0, 0, 1, 1], [], []>} : vector<12x80xf32>, vector<80x120xf32>, vector<12x120xf32> -> vector<12x120xf32>
    %91 = arith.addf %86, %90 : vector<12x120xf32>
    %c0_106 = arith.constant 0 : index
    %c0_107 = arith.constant 0 : index
    %92 = vector.load %arg10[%c0_106, %c0_107] : memref<1x120xf32, #tpu.memory_space<vmem>>, vector<1x120xf32>
    %93 = vector.broadcast %92 : vector<1x120xf32> to vector<12x120xf32>
    %94 = arith.addf %91, %93 : vector<12x120xf32>
    %cst_108 = arith.constant 0.000000e+00 : f32
    %95 = vector.broadcast %cst_108 : f32 to vector<12x120xf32>
    %96 = arith.maximumf %94, %95 : vector<12x120xf32>
    %c0_109 = arith.constant 0 : index
    %c0_110 = arith.constant 0 : index
    %97 = vector.load %arg11[%c0_109, %c0_110] : memref<2x12xf32, #tpu.memory_space<vmem>>, vector<2x12xf32>
    %cst_111 = arith.constant dense<0.000000e+00> : vector<2x120xf32>
    %98 = tpu.matmul %97, %96, %cst_111 {dimension_numbers = #tpu.dot_dimension_numbers<[1], [0], [0], [1], [0, 0, 1, 1], [], []>} : vector<2x12xf32>, vector<12x120xf32>, vector<2x120xf32> -> vector<2x120xf32>
    %c0_112 = arith.constant 0 : index
    %c0_113 = arith.constant 0 : index
    %99 = vector.load %arg12[%c0_112, %c0_113] : memref<120x84xf32, #tpu.memory_space<vmem>>, vector<120x84xf32>
    %cst_114 = arith.constant dense<0.000000e+00> : vector<2x84xf32>
    %100 = tpu.matmul %98, %99, %cst_114 {dimension_numbers = #tpu.dot_dimension_numbers<[1], [0], [0], [1], [0, 0, 1, 1], [], []>} : vector<2x120xf32>, vector<120x84xf32>, vector<2x84xf32> -> vector<2x84xf32>
    %c0_115 = arith.constant 0 : index
    %c0_116 = arith.constant 0 : index
    %101 = vector.load %arg13[%c0_115, %c0_116] : memref<1x84xf32, #tpu.memory_space<vmem>>, vector<1x84xf32>
    %102 = vector.broadcast %101 : vector<1x84xf32> to vector<2x84xf32>
    %103 = arith.addf %100, %102 : vector<2x84xf32>
    %cst_117 = arith.constant 0.000000e+00 : f32
    %104 = vector.broadcast %cst_117 : f32 to vector<2x84xf32>
    %105 = arith.maximumf %103, %104 : vector<2x84xf32>
    %c0_118 = arith.constant 0 : index
    %c0_119 = arith.constant 0 : index
    %106 = vector.load %arg14[%c0_118, %c0_119] : memref<84x10xf32, #tpu.memory_space<vmem>>, vector<84x10xf32>
    %cst_120 = arith.constant dense<0.000000e+00> : vector<2x10xf32>
    %107 = tpu.matmul %105, %106, %cst_120 {dimension_numbers = #tpu.dot_dimension_numbers<[1], [0], [0], [1], [0, 0, 1, 1], [], []>} : vector<2x84xf32>, vector<84x10xf32>, vector<2x10xf32> -> vector<2x10xf32>
    %c0_121 = arith.constant 0 : index
    %c0_122 = arith.constant 0 : index
    %108 = vector.load %arg15[%c0_121, %c0_122] : memref<1x10xf32, #tpu.memory_space<vmem>>, vector<1x10xf32>
    %109 = vector.broadcast %108 : vector<1x10xf32> to vector<2x10xf32>
    %110 = arith.addf %107, %109 : vector<2x10xf32>
    %cst_123 = arith.constant dense<0xFF800000> : vector<10xf32>
    %111 = vector.multi_reduction <maximumf>, %110, %cst_123 [0] : vector<2x10xf32> to vector<10xf32>
    %112 = vector.shape_cast %111 : vector<10xf32> to vector<1x10xf32>
    %113 = vector.broadcast %112 : vector<1x10xf32> to vector<2x10xf32>
    %114 = arith.subf %110, %113 : vector<2x10xf32>
    %115 = math.exp %114 : vector<2x10xf32>
    %cst_124 = arith.constant dense<0.000000e+00> : vector<10xf32>
    %116 = vector.multi_reduction <add>, %115, %cst_124 [0] : vector<2x10xf32> to vector<10xf32>
    %117 = vector.shape_cast %116 : vector<10xf32> to vector<1x10xf32>
    %118 = tpu.reciprocal %117 {approx = true} : vector<1x10xf32> -> vector<1x10xf32>
    %119 = vector.broadcast %118 : vector<1x10xf32> to vector<2x10xf32>
    %120 = arith.mulf %115, %119 : vector<2x10xf32>
    %c0_125 = arith.constant 0 : index
    %c0_126 = arith.constant 0 : index
    %121 = vector.load %arg16[%c0_125, %c0_126] : memref<2x10xf32, #tpu.memory_space<vmem>>, vector<2x10xf32>
    tpu.vector_store %arg16[%c0_125, %c0_126], %120 {strides = array<i32>} : memref<2x10xf32, #tpu.memory_space<vmem>>, vector<2x10xf32>,
    return
  }
}

</mosaic_0001>

<llo_original>
// kernel: lenet_forward.1
$region0: #{lenet_forward.1}
  #allocation0 [shape = 'u32[]', space=smem, size = 0x4, offset = 0x4, fixed_abs, tag = 'smem constant byte address 0x4 - core index']
  #allocation1 [shape = 'u32[144,128]{1,0:T(1,128)}', space=vmem, size = 0x12000, scoped, tag = 'internal scratch']
  #allocation2 [shape = 'f32[32,84]{1,0:T(8,128)}', space=vmem, size = 0x4000, scoped, tag = 'scratch operand']
  #allocation3 [shape = 'f32[16,80]{1,0:T(8,128)}', space=vmem, size = 0x2000, scoped, tag = 'scratch operand']
  %s0 = inlined_call_operand.vmem [shape: f32[64,32], index: 0, kind: input, shape index: {}]
  %s1 = inlined_call_operand.vmem [shape: f32[5,32,168], index: 1, kind: input, shape index: {}]
  %s2 = inlined_call_operand.vmem [shape: f32[1,168], index: 2, kind: input, shape index: {}]
  %s3 = inlined_call_operand.vmem [shape: f32[32,60], index: 3, kind: input, shape index: {}]
  %s4 = inlined_call_operand.vmem [shape: f32[168,84], index: 4, kind: input, shape index: {}]
  %s5 = inlined_call_operand.vmem [shape: f32[5,84,160], index: 5, kind: input, shape index: {}]
  %s6 = inlined_call_operand.vmem [shape: f32[1,160], index: 6, kind: input, shape index: {}]
  %s7 = inlined_call_operand.vmem [shape: f32[16,28], index: 7, kind: input, shape index: {}]
  %s8 = inlined_call_operand.vmem [shape: f32[160,80], index: 8, kind: input, shape index: {}]
  %s9 = inlined_call_operand.vmem [shape: f32[5,80,120], index: 9, kind: input, shape index: {}]
  %s10 = inlined_call_operand.vmem [shape: f32[1,120], index: 10, kind: input, shape index: {}]
  %s11 = inlined_call_operand.vmem [shape: f32[2,12], index: 11, kind: input, shape index: {}]
  %s12 = inlined_call_operand.vmem [shape: f32[120,84], index: 12, kind: input, shape index: {}]
  %s13 = inlined_call_operand.vmem [shape: f32[1,84], index: 13, kind: input, shape index: {}]
  %s14 = inlined_call_operand.vmem [shape: f32[84,10], index: 14, kind: input, shape index: {}]
  %s15 = inlined_call_operand.vmem [shape: f32[1,10], index: 15, kind: input, shape index: {}]
  %s16 = inlined_call_operand.hbm [shape: f32[2,10], index: 16, kind: output, shape index: {}]
  %s17 = sld [smem:[#allocation0]]
  $region74: #{lenet_forward.1} parent=0
    _
  %s19 = ssub.s32 1, %s17
  %s20 = scalar_select 0, %s19, %s17
  $region1: #{lenet_forward.1} parent=0
    #allocation4 [shape = 'u8[1024]{0}', space=vmem, size = 0x400, scoped, tag = 'output window, operand 0, single buffered']
    #allocation5 [shape = 's32[1]{0}', space=sflag, size = 0x4, scoped, tag = 'scoped memory for lenet_forward.1']
    %21 = vsyncpa [#allocation5], 0
    // Predicated region
    $region2: #{lenet_forward.1} parent=1 // pred_check
      _
    $region3: #{lenet_forward.1} parent=1 // pred_check_branch
      %23 = sbr.rel (0) target = $region5
    $region4: #{lenet_forward.1} parent=1 // pred_region
      _
    $region5: #{lenet_forward.1} parent=1 // pred_fallthru
      _
    // Predicated region
    $region6: #{lenet_forward.1} parent=1 // pred_check
      _
    $region7: #{lenet_forward.1} parent=1 // pred_check_branch
      %25 = sbr.rel (0) target = $region9
    $region8: #{lenet_forward.1} parent=1 // pred_region
      _
    $region9: #{lenet_forward.1} parent=1 // pred_fallthru
      _
    // Predicated region
    $region10: #{lenet_forward.1} parent=1 // pred_check
      _
    $region11: #{lenet_forward.1} parent=1 // pred_check_branch
      %27 = sbr.rel (0) target = $region13
    $region12: #{lenet_forward.1} parent=1 // pred_region
      _
    $region13: #{lenet_forward.1} parent=1 // pred_fallthru
      _
    // Predicated region
    $region14: #{lenet_forward.1} parent=1 // pred_check
      _
    $region15: #{lenet_forward.1} parent=1 // pred_check_branch
      %29 = sbr.rel (0) target = $region17
    $region16: #{lenet_forward.1} parent=1 // pred_region
      _
    $region17: #{lenet_forward.1} parent=1 // pred_fallthru
      _
    // Predicated region
    $region18: #{lenet_forward.1} parent=1 // pred_check
      _
    $region19: #{lenet_forward.1} parent=1 // pred_check_branch
      %31 = sbr.rel (0) target = $region21
    $region20: #{lenet_forward.1} parent=1 // pred_region
      _
    $region21: #{lenet_forward.1} parent=1 // pred_fallthru
      _
    // Predicated region
    $region22: #{lenet_forward.1} parent=1 // pred_check
      _
    $region23: #{lenet_forward.1} parent=1 // pred_check_branch
      %33 = sbr.rel (0) target = $region25
    $region24: #{lenet_forward.1} parent=1 // pred_region
      _
    $region25: #{lenet_forward.1} parent=1 // pred_fallthru
      _
    // Predicated region
    $region26: #{lenet_forward.1} parent=1 // pred_check
      _
    $region27: #{lenet_forward.1} parent=1 // pred_check_branch
      %35 = sbr.rel (0) target = $region29
    $region28: #{lenet_forward.1} parent=1 // pred_region
      _
    $region29: #{lenet_forward.1} parent=1 // pred_fallthru
      _
    // Predicated region
    $region30: #{lenet_forward.1} parent=1 // pred_check
      _
    $region31: #{lenet_forward.1} parent=1 // pred_check_branch
      %37 = sbr.rel (0) target = $region33
    $region32: #{lenet_forward.1} parent=1 // pred_region
      _
    $region33: #{lenet_forward.1} parent=1 // pred_fallthru
      _
    // Predicated region
    $region34: #{lenet_forward.1} parent=1 // pred_check
      _
    $region35: #{lenet_forward.1} parent=1 // pred_check_branch
      %39 = sbr.rel (0) target = $region37
    $region36: #{lenet_forward.1} parent=1 // pred_region
      _
    $region37: #{lenet_forward.1} parent=1 // pred_fallthru
      _
    // Predicated region
    $region38: #{lenet_forward.1} parent=1 // pred_check
      _
    $region39: #{lenet_forward.1} parent=1 // pred_check_branch
      %41 = sbr.rel (0) target = $region41
    $region40: #{lenet_forward.1} parent=1 // pred_region
      _
    $region41: #{lenet_forward.1} parent=1 // pred_fallthru
      _
    // Predicated region
    $region42: #{lenet_forward.1} parent=1 // pred_check
      _
    $region43: #{lenet_forward.1} parent=1 // pred_check_branch
      %43 = sbr.rel (0) target = $region45
    $region44: #{lenet_forward.1} parent=1 // pred_region
      _
    $region45: #{lenet_forward.1} parent=1 // pred_fallthru
      _
    // Predicated region
    $region46: #{lenet_forward.1} parent=1 // pred_check
      _
    $region47: #{lenet_forward.1} parent=1 // pred_check_branch
      %45 = sbr.rel (0) target = $region49
    $region48: #{lenet_forward.1} parent=1 // pred_region
      _
    $region49: #{lenet_forward.1} parent=1 // pred_fallthru
      _
    // Predicated region
    $region50: #{lenet_forward.1} parent=1 // pred_check
      _
    $region51: #{lenet_forward.1} parent=1 // pred_check_branch
      %47 = sbr.rel (0) target = $region53
    $region52: #{lenet_forward.1} parent=1 // pred_region
      _
    $region53: #{lenet_forward.1} parent=1 // pred_fallthru
      _
    // Predicated region
    $region54: #{lenet_forward.1} parent=1 // pred_check
      _
    $region55: #{lenet_forward.1} parent=1 // pred_check_branch
      %49 = sbr.rel (0) target = $region57
    $region56: #{lenet_forward.1} parent=1 // pred_region
      _
    $region57: #{lenet_forward.1} parent=1 // pred_fallthru
      _
    // Predicated region
    $region58: #{lenet_forward.1} parent=1 // pred_check
      _
    $region59: #{lenet_forward.1} parent=1 // pred_check_branch
      %51 = sbr.rel (0) target = $region61
    $region60: #{lenet_forward.1} parent=1 // pred_region
      _
    $region61: #{lenet_forward.1} parent=1 // pred_fallthru
      _
    // Predicated region
    $region62: #{lenet_forward.1} parent=1 // pred_check
      _
    $region63: #{lenet_forward.1} parent=1 // pred_check_branch
      %53 = sbr.rel (0) target = $region65
    $region64: #{lenet_forward.1} parent=1 // pred_region
      _
    $region65: #{lenet_forward.1} parent=1 // pred_fallthru
      _
    %v54 = vld [vmem:[%s0] sm:$0xff]
    %v55 = vld [vmem:[%s0 + $0x8] sm:$0xff]
    %v56 = vld [vmem:[%s0 + $0x10] sm:$0xff]
    %v57 = vld [vmem:[%s0 + $0x18] sm:$0xff]
    %v58 = vld [vmem:[%s0 + $0x20] sm:$0xff]
    %v59 = vld [vmem:[%s0 + $0x28] sm:$0xff]
    %v60 = vld [vmem:[%s0 + $0x30] sm:$0xff]
    %v61 = vld [vmem:[%s0 + $0x38] sm:$0xf]
    %v62 = vld [vmem:[%s1] sm:$0xff]
    %v63 = vld [vmem:[%s1 + $0x8] sm:$0xff]
    %v64 = vld [vmem:[%s1 + $0x10] sm:$0xff]
    %v65 = vld [vmem:[%s1 + $0x18] sm:$0xff]
    %v66 = vld [vmem:[%s1 + $0x20] sm:$0xff]
    %v67 = vld [vmem:[%s1 + $0x28] sm:$0xff]
    %v68 = vld [vmem:[%s1 + $0x30] sm:$0xff]
    %v69 = vld [vmem:[%s1 + $0x38] sm:$0xff]
    %v70 = vld [vmem:[%s0 + $0x1] sm:$0xff]
    %v71 = vld [vmem:[%s0 + $0x9] sm:$0xff]
    %v72 = vld [vmem:[%s0 + $0x11] sm:$0xff]
    %v73 = vld [vmem:[%s0 + $0x19] sm:$0xff]
    %v74 = vld [vmem:[%s0 + $0x21] sm:$0xff]
    %v75 = vld [vmem:[%s0 + $0x29] sm:$0xff]
    %v76 = vld [vmem:[%s0 + $0x31] sm:$0xff]
    %v77 = vld [vmem:[%s0 + $0x39] sm:$0xf]
    %s78 = scalar_lea.vmem %s1, 64
    %v79 = vld [vmem:[%s78] sm:$0xff]
    %v80 = vld [vmem:[%s78 + $0x8] sm:$0xff]
    %v81 = vld [vmem:[%s78 + $0x10] sm:$0xff]
    %v82 = vld [vmem:[%s78 + $0x18] sm:$0xff]
    %v83 = vld [vmem:[%s78 + $0x20] sm:$0xff]
    %v84 = vld [vmem:[%s78 + $0x28] sm:$0xff]
    %v85 = vld [vmem:[%s78 + $0x30] sm:$0xff]
    %v86 = vld [vmem:[%s78 + $0x38] sm:$0xff]
    %vm87 = vcmask 261120
    %v89 = vsel %vm87, %v70, 0
    %v92 = vsel %vm87, %v71, 0
    %v95 = vsel %vm87, %v72, 0
    %v98 = vsel %vm87, %v73, 0
    %v101 = vsel %vm87, %v74, 0
    %v104 = vsel %vm87, %v75, 0
    %v107 = vsel %vm87, %v76, 0
    %v110 = vsel %vm87, %v77, 0
    %112 = vmatprep.subr.mxu0 %v80
    %113 = vmatpush1.msra.mxu0 %v79
    %114 = vmatprep.subr.mxu0 %v82
    %115 = vmatpush1.msra.mxu0 %v81
    %116 = vmatprep.subr.mxu0 %v84
    %117 = vmatpush1.msra.mxu0 %v83
    %118 = vmatprep.subr.mxu0 %v86
    %119 = vmatpush1.msra.mxu0 %v85
    %120 = vmatprep.subr.mxu0 0.0
    %121 = vmatpush1.msra.mxu0 0.0
    %122 = vmatprep.subr.mxu0 0.0
    %123 = vmatpush1.msra.mxu0 0.0
    %124 = vmatprep.subr.mxu0 0.0
    %125 = vmatpush1.msra.mxu0 0.0
    %126 = vmatprep.subr.mxu0 0.0
    %127 = vmatpush1.msra.mxu0 0.0
    %128 = vmatprep.subr.mxu0 0.0
    %129 = vmatpush1.msra.mxu0 0.0
    %130 = vmatprep.subr.mxu0 0.0
    %131 = vmatpush1.msra.mxu0 0.0
    %132 = vmatprep.subr.mxu0 0.0
    %133 = vmatpush1.msra.mxu0 0.0
    %134 = vmatprep.subr.mxu0 0.0
    %135 = vmatpush1.msra.mxu0 0.0
    %136 = vmatprep.subr.mxu0 0.0
    %137 = vmatpush1.msra.mxu0 0.0
    %138 = vmatprep.subr.mxu0 0.0
    %139 = vmatpush1.msra.mxu0 0.0
    %140 = vmatprep.subr.mxu0 0.0
    %141 = vmatpush1.msra.mxu0 0.0
    %142 = vmatprep.subr.mxu0 0.0
    %143 = vmatpush1.msra.mxu0 0.0
    %144 = vmatprep.subr.mxu0 0.0
    %145 = vmatpush1.msra.mxu0 0.0
    %146 = vmatprep.subr.mxu0 0.0
    %147 = vmatpush1.msra.mxu0 0.0
    %148 = vmatprep.subr.mxu0 0.0
    %149 = vmatpush1.msra.mxu0 0.0
    %150 = vmatprep.subr.mxu0 0.0
    %151 = vmatpush1.msra.mxu0 0.0
    %152 = vmatprep.subr.mxu0 0.0
    %153 = vmatpush1.msra.mxu0 0.0
    %154 = vmatprep.subr.mxu0 0.0
    %155 = vmatpush1.msra.mxu0 0.0
    %156 = vmatprep.subr.mxu0 0.0
    %157 = vmatpush1.msra.mxu0 0.0
    %158 = vmatprep.subr.mxu0 0.0
    %159 = vmatpush1.msra.mxu0 0.0
    %160 = vmatprep.subr.mxu0 0.0
    %161 = vmatpush1.msra.mxu0 0.0
    %162 = vmatprep.subr.mxu0 0.0
    %163 = vmatpush1.msra.mxu0 0.0
    %164 = vmatprep.subr.mxu0 0.0
    %165 = vmatpush1.msra.mxu0 0.0
    %166 = vmatprep.subr.mxu0 0.0
    %167 = vmatpush1.msra.mxu0 0.0
    %168 = vmatprep.subr.mxu0 0.0
    %169 = vmatpush1.msra.mxu0 0.0
    %170 = vmatprep.subr.mxu0 0.0
    %171 = vmatpush1.msra.mxu0 0.0
    %172 = vmatprep.subr.mxu0 0.0
    %173 = vmatpush1.msra.mxu0 0.0
    %174 = vmatprep.subr.mxu0 0.0
    %175 = vmatpush1.msra.mxu0 0.0
    %176 = vmatprep.mubr.f32.mxu0 0.0
    %177 = vmatmul.mubr.f32.gmra.mrb[0].mxu0 %v89
    %v178 = vpop.f32.mrb[0].mxu0
    %v179 = vadd.f32 0.0, %v178
    %v180 = vpop.f32.mrb[0].mxu0
    %v181 = vadd.f32 0.0, %v180
    %182 = vmatprep.mubr.f32.mxu0 0.0
    %183 = vmatmul.mubr.f32.gmra.mrb[0].mxu0 %v92
    %v184 = vpop.f32.mrb[0].mxu0
    %v185 = vadd.f32 0.0, %v184
    %v186 = vpop.f32.mrb[0].mxu0
    %v187 = vadd.f32 0.0, %v186
    %188 = vmatprep.mubr.f32.mxu0 0.0
    %189 = vmatmul.mubr.f32.gmra.mrb[0].mxu0 %v95
    %v190 = vpop.f32.mrb[0].mxu0
    %v191 = vadd.f32 0.0, %v190
    %v192 = vpop.f32.mrb[0].mxu0
    %v193 = vadd.f32 0.0, %v192
    %194 = vmatprep.mubr.f32.mxu0 0.0
    %195 = vmatmul.mubr.f32.gmra.mrb[0].mxu0 %v98
    %v196 = vpop.f32.mrb[0].mxu0
    %v197 = vadd.f32 0.0, %v196
    %v198 = vpop.f32.mrb[0].mxu0
    %v199 = vadd.f32 0.0, %v198
    %200 = vmatprep.mubr.f32.mxu0 0.0
    %201 = vmatmul.mubr.f32.gmra.mrb[0].mxu0 %v101
    %v202 = vpop.f32.mrb[0].mxu0
    %v203 = vadd.f32 0.0, %v202
    %v204 = vpop.f32.mrb[0].mxu0
    %v205 = vadd.f32 0.0, %v204
    %206 = vmatprep.mubr.f32.mxu0 0.0
    %207 = vmatmul.mubr.f32.gmra.mrb[0].mxu0 %v104
    %v208 = vpop.f32.mrb[0].mxu0
    %v209 = vadd.f32 0.0, %v208
    %v210 = vpop.f32.mrb[0].mxu0
    %v211 = vadd.f32 0.0, %v210
    %212 = vmatprep.mubr.f32.mxu0 0.0
    %213 = vmatmul.mubr.f32.gmra.mrb[0].mxu0 %v107
    %v214 = vpop.f32.mrb[0].mxu0
    %v215 = vadd.f32 0.0, %v214
    %v216 = vpop.f32.mrb[0].mxu0
    %v217 = vadd.f32 0.0, %v216
    %218 = vmatprep.mubr.f32.mxu0 0.0
    %219 = vmatmul.mubr.f32.gmra.mrb[0].mxu0 %v110
    %v220 = vpop.f32.mrb[0].mxu0
    %v221 = vadd.f32 0.0, %v220
    %v222 = vpop.f32.mrb[0].mxu0
    %v223 = vadd.f32 0.0, %v222
    %224 = vdwg.mxu0
    %v226 = vsel %vm87, %v54, 0
    %v229 = vsel %vm87, %v55, 0
    %v232 = vsel %vm87, %v56, 0
    %v235 = vsel %vm87, %v57, 0
    %v238 = vsel %vm87, %v58, 0
    %v241 = vsel %vm87, %v59, 0
    %v244 = vsel %vm87, %v60, 0
    %v247 = vsel %vm87, %v61, 0
    %249 = vmatprep.subr.mxu0 %v63
    %250 = vmatpush1.msra.mxu0 %v62
    %251 = vmatprep.subr.mxu0 %v65
    %252 = vmatpush1.msra.mxu0 %v64
    %253 = vmatprep.subr.mxu0 %v67
    %254 = vmatpush1.msra.mxu0 %v66
    %255 = vmatprep.subr.mxu0 %v69
    %256 = vmatpush1.msra.mxu0 %v68
    %257 = vmatprep.subr.mxu0 0.0
    %258 = vmatpush1.msra.mxu0 0.0
    %259 = vmatprep.subr.mxu0 0.0
    %260 = vmatpush1.msra.mxu0 0.0
    %261 = vmatprep.subr.mxu0 0.0
    %262 = vmatpush1.msra.mxu0 0.0
    %263 = vmatprep.subr.mxu0 0.0
    %264 = vmatpush1.msra.mxu0 0.0
    %265 = vmatprep.subr.mxu0 0.0
    %266 = vmatpush1.msra.mxu0 0.0
    %267 = vmatprep.subr.mxu0 0.0
    %268 = vmatpush1.msra.mxu0 0.0
    %269 = vmatprep.subr.mxu0 0.0
    %270 = vmatpush1.msra.mxu0 0.0
    %271 = vmatprep.subr.mxu0 0.0
    %272 = vmatpush1.msra.mxu0 0.0
    %273 = vmatprep.subr.mxu0 0.0
    %274 = vmatpush1.msra.mxu0 0.0
    %275 = vmatprep.subr.mxu0 0.0
    %276 = vmatpush1.msra.mxu0 0.0
    %277 = vmatprep.subr.mxu0 0.0
    %278 = vmatpush1.msra.mxu0 0.0
    %279 = vmatprep.subr.mxu0 0.0
    %280 = vmatpush1.msra.mxu0 0.0
    %281 = vmatprep.subr.mxu0 0.0
    %282 = vmatpush1.msra.mxu0 0.0
    %283 = vmatprep.subr.mxu0 0.0
    %284 = vmatpush1.msra.mxu0 0.0
    %285 = vmatprep.subr.mxu0 0.0
    %286 = vmatpush1.msra.mxu0 0.0
    %287 = vmatprep.subr.mxu0 0.0
    %288 = vmatpush1.msra.mxu0 0.0
    %289 = vmatprep.subr.mxu0 0.0
    %290 = vmatpush1.msra.mxu0 0.0
    %291 = vmatprep.subr.mxu0 0.0
    %292 = vmatpush1.msra.mxu0 0.0
    %293 = vmatprep.subr.mxu0 0.0
    %294 = vmatpush1.msra.mxu0 0.0
    %295 = vmatprep.subr.mxu0 0.0
    %296 = vmatpush1.msra.mxu0 0.0
    %297 = vmatprep.subr.mxu0 0.0
    %298 = vmatpush1.msra.mxu0 0.0
    %299 = vmatprep.subr.mxu0 0.0
    %300 = vmatpush1.msra.mxu0 0.0
    %301 = vmatprep.subr.mxu0 0.0
    %302 = vmatpush1.msra.mxu0 0.0
    %303 = vmatprep.subr.mxu0 0.0
    %304 = vmatpush1.msra.mxu0 0.0
    %305 = vmatprep.subr.mxu0 0.0
    %306 = vmatpush1.msra.mxu0 0.0
    %307 = vmatprep.subr.mxu0 0.0
    %308 = vmatpush1.msra.mxu0 0.0
    %309 = vmatprep.subr.mxu0 0.0
    %310 = vmatpush1.msra.mxu0 0.0
    %311 = vmatprep.subr.mxu0 0.0
    %312 = vmatpush1.msra.mxu0 0.0
    %313 = vmatprep.mubr.f32.mxu0 0.0
    %314 = vmatmul.mubr.f32.gmra.mrb[0].mxu0 %v226
    %v315 = vpop.f32.mrb[0].mxu0
    %v316 = vadd.f32 %v179, %v315
    %v317 = vpop.f32.mrb[0].mxu0
    %v318 = vadd.f32 %v181, %v317
    %319 = vmatprep.mubr.f32.mxu0 0.0
    %320 = vmatmul.mubr.f32.gmra.mrb[0].mxu0 %v229
    %v321 = vpop.f32.mrb[0].mxu0
    %v322 = vadd.f32 %v185, %v321
    %v323 = vpop.f32.mrb[0].mxu0
    %v324 = vadd.f32 %v187, %v323
    %325 = vmatprep.mubr.f32.mxu0 0.0
    %326 = vmatmul.mubr.f32.gmra.mrb[0].mxu0 %v232
    %v327 = vpop.f32.mrb[0].mxu0
    %v328 = vadd.f32 %v191, %v327
    %v329 = vpop.f32.mrb[0].mxu0
    %v330 = vadd.f32 %v193, %v329
    %331 = vmatprep.mubr.f32.mxu0 0.0
    %332 = vmatmul.mubr.f32.gmra.mrb[0].mxu0 %v235
    %v333 = vpop.f32.mrb[0].mxu0
    %v334 = vadd.f32 %v197, %v333
    %v335 = vpop.f32.mrb[0].mxu0
    %v336 = vadd.f32 %v199, %v335
    %337 = vmatprep.mubr.f32.mxu0 0.0
    %338 = vmatmul.mubr.f32.gmra.mrb[0].mxu0 %v238
    %v339 = vpop.f32.mrb[0].mxu0
    %v340 = vadd.f32 %v203, %v339
    %v341 = vpop.f32.mrb[0].mxu0
    %v342 = vadd.f32 %v205, %v341
    %343 = vmatprep.mubr.f32.mxu0 0.0
    %344 = vmatmul.mubr.f32.gmra.mrb[0].mxu0 %v241
    %v345 = vpop.f32.mrb[0].mxu0
    %v346 = vadd.f32 %v209, %v345
    %v347 = vpop.f32.mrb[0].mxu0
    %v348 = vadd.f32 %v211, %v347
    %349 = vmatprep.mubr.f32.mxu0 0.0
    %350 = vmatmul.mubr.f32.gmra.mrb[0].mxu0 %v244
    %v351 = vpop.f32.mrb[0].mxu0
    %v352 = vadd.f32 %v215, %v351
    %v353 = vpop.f32.mrb[0].mxu0
    %v354 = vadd.f32 %v217, %v353
    %355 = vmatprep.mubr.f32.mxu0 0.0
    %356 = vmatmul.mubr.f32.gmra.mrb[0].mxu0 %v247
    %v357 = vpop.f32.mrb[0].mxu0
    %v358 = vadd.f32 %v221, %v357
    %v359 = vpop.f32.mrb[0].mxu0
    %v360 = vadd.f32 %v223, %v359
    %361 = vdwg.mxu0
    %v362 = vld [vmem:[%s0 + $0x2] sm:$0xff]
    %v363 = vld [vmem:[%s0 + $0xa] sm:$0xff]
    %v364 = vld [vmem:[%s0 + $0x12] sm:$0xff]
    %v365 = vld [vmem:[%s0 + $0x1a] sm:$0xff]
    %v366 = vld [vmem:[%s0 + $0x22] sm:$0xff]
    %v367 = vld [vmem:[%s0 + $0x2a] sm:$0xff]
    %v368 = vld [vmem:[%s0 + $0x32] sm:$0xff]
    %v369 = vld [vmem:[%s0 + $0x3a] sm:$0xf]
    %s370 = scalar_lea.vmem %s1, 128
    %v371 = vld [vmem:[%s370] sm:$0xff]
    %v372 = vld [vmem:[%s370 + $0x8] sm:$0xff]
    %v373 = vld [vmem:[%s370 + $0x10] sm:$0xff]
    %v374 = vld [vmem:[%s370 + $0x18] sm:$0xff]
    %v375 = vld [vmem:[%s370 + $0x20] sm:$0xff]
    %v376 = vld [vmem:[%s370 + $0x28] sm:$0xff]
    %v377 = vld [vmem:[%s370 + $0x30] sm:$0xff]
    %v378 = vld [vmem:[%s370 + $0x38] sm:$0xff]
    %v380 = vsel %vm87, %v362, 0
    %v383 = vsel %vm87, %v363, 0
    %v386 = vsel %vm87, %v364, 0
    %v389 = vsel %vm87, %v365, 0
    %v392 = vsel %vm87, %v366, 0
    %v395 = vsel %vm87, %v367, 0
    %v398 = vsel %vm87, %v368, 0
    %v401 = vsel %vm87, %v369, 0
    %403 = vmatprep.subr.mxu0 %v372
    %404 = vmatpush1.msra.mxu0 %v371
    %405 = vmatprep.subr.mxu0 %v374
    %406 = vmatpush1.msra.mxu0 %v373
    %407 = vmatprep.subr.mxu0 %v376
    %408 = vmatpush1.msra.mxu0 %v375
    %409 = vmatprep.subr.mxu0 %v378
    %410 = vmatpush1.msra.mxu0 %v377
    %411 = vmatprep.subr.mxu0 0.0
    %412 = vmatpush1.msra.mxu0 0.0
    %413 = vmatprep.subr.mxu0 0.0
    %414 = vmatpush1.msra.mxu0 0.0
    %415 = vmatprep.subr.mxu0 0.0
    %416 = vmatpush1.msra.mxu0 0.0
    %417 = vmatprep.subr.mxu0 0.0
    %418 = vmatpush1.msra.mxu0 0.0
    %419 = vmatprep.subr.mxu0 0.0
    %420 = vmatpush1.msra.mxu0 0.0
    %421 = vmatprep.subr.mxu0 0.0
    %422 = vmatpush1.msra.mxu0 0.0
    %423 = vmatprep.subr.mxu0 0.0
    %424 = vmatpush1.msra.mxu0 0.0
    %425 = vmatprep.subr.mxu0 0.0
    %426 = vmatpush1.msra.mxu0 0.0
    %427 = vmatprep.subr.mxu0 0.0
    %428 = vmatpush1.msra.mxu0 0.0
    %429 = vmatprep.subr.mxu0 0.0
    %430 = vmatpush1.msra.mxu0 0.0
    %431 = vmatprep.subr.mxu0 0.0
    %432 = vmatpush1.msra.mxu0 0.0
    %433 = vmatprep.subr.mxu0 0.0
    %434 = vmatpush1.msra.mxu0 0.0
    %435 = vmatprep.subr.mxu0 0.0
    %436 = vmatpush1.msra.mxu0 0.0
    %437 = vmatprep.subr.mxu0 0.0
    %438 = vmatpush1.msra.mxu0 0.0
    %439 = vmatprep.subr.mxu0 0.0
    %440 = vmatpush1.msra.mxu0 0.0
    %441 = vmatprep.subr.mxu0 0.0
    %442 = vmatpush1.msra.mxu0 0.0
    %443 = vmatprep.subr.mxu0 0.0
    %444 = vmatpush1.msra.mxu0 0.0
    %445 = vmatprep.subr.mxu0 0.0
    %446 = vmatpush1.msra.mxu0 0.0
    %447 = vmatprep.subr.mxu0 0.0
    %448 = vmatpush1.msra.mxu0 0.0
    %449 = vmatprep.subr.mxu0 0.0
    %450 = vmatpush1.msra.mxu0 0.0
    %451 = vmatprep.subr.mxu0 0.0
    %452 = vmatpush1.msra.mxu0 0.0
    %453 = vmatprep.subr.mxu0 0.0
    %454 = vmatpush1.msra.mxu0 0.0
    %455 = vmatprep.subr.mxu0 0.0
    %456 = vmatpush1.msra.mxu0 0.0
    %457 = vmatprep.subr.mxu0 0.0
    %458 = vmatpush1.msra.mxu0 0.0
    %459 = vmatprep.subr.mxu0 0.0
    %460 = vmatpush1.msra.mxu0 0.0
    %461 = vmatprep.subr.mxu0 0.0
    %462 = vmatpush1.msra.mxu0 0.0
    %463 = vmatprep.subr.mxu0 0.0
    %464 = vmatpush1.msra.mxu0 0.0
    %465 = vmatprep.subr.mxu0 0.0
    %466 = vmatpush1.msra.mxu0 0.0
    %467 = vmatprep.mubr.f32.mxu0 0.0
    %468 = vmatmul.mubr.f32.gmra.mrb[0].mxu0 %v380
    %v469 = vpop.f32.mrb[0].mxu0
    %v470 = vadd.f32 0.0, %v469
    %v471 = vpop.f32.mrb[0].mxu0
    %v472 = vadd.f32 0.0, %v471
    %473 = vmatprep.mubr.f32.mxu0 0.0
    %474 = vmatmul.mubr.f32.gmra.mrb[0].mxu0 %v383
    %v475 = vpop.f32.mrb[0].mxu0
    %v476 = vadd.f32 0.0, %v475
    %v477 = vpop.f32.mrb[0].mxu0
    %v478 = vadd.f32 0.0, %v477
    %479 = vmatprep.mubr.f32.mxu0 0.0
    %480 = vmatmul.mubr.f32.gmra.mrb[0].mxu0 %v386
    %v481 = vpop.f32.mrb[0].mxu0
    %v482 = vadd.f32 0.0, %v481
    %v483 = vpop.f32.mrb[0].mxu0
    %v484 = vadd.f32 0.0, %v483
    %485 = vmatprep.mubr.f32.mxu0 0.0
    %486 = vmatmul.mubr.f32.gmra.mrb[0].mxu0 %v389
    %v487 = vpop.f32.mrb[0].mxu0
    %v488 = vadd.f32 0.0, %v487
    %v489 = vpop.f32.mrb[0].mxu0
    %v490 = vadd.f32 0.0, %v489
    %491 = vmatprep.mubr.f32.mxu0 0.0
    %492 = vmatmul.mubr.f32.gmra.mrb[0].mxu0 %v392
    %v493 = vpop.f32.mrb[0].mxu0
    %v494 = vadd.f32 0.0, %v493
    %v495 = vpop.f32.mrb[0].mxu0
    %v496 = vadd.f32 0.0, %v495
    %497 = vmatprep.mubr.f32.mxu0 0.0
    %498 = vmatmul.mubr.f32.gmra.mrb[0].mxu0 %v395
    %v499 = vpop.f32.mrb[0].mxu0
    %v500 = vadd.f32 0.0, %v499
    %v501 = vpop.f32.mrb[0].mxu0
    %v502 = vadd.f32 0.0, %v501
    %503 = vmatprep.mubr.f32.mxu0 0.0
    %504 = vmatmul.mubr.f32.gmra.mrb[0].mxu0 %v398
    %v505 = vpop.f32.mrb[0].mxu0
    %v506 = vadd.f32 0.0, %v505
    %v507 = vpop.f32.mrb[0].mxu0
    %v508 = vadd.f32 0.0, %v507
    %509 = vmatprep.mubr.f32.mxu0 0.0
    %510 = vmatmul.mubr.f32.gmra.mrb[0].mxu0 %v401
    %v511 = vpop.f32.mrb[0].mxu0
    %v512 = vadd.f32 0.0, %v511
    %v513 = vpop.f32.mrb[0].mxu0
    %v514 = vadd.f32 0.0, %v513
    %515 = vdwg.mxu0
    %v516 = vadd.f32 %v316, %v470
    %v517 = vadd.f32 %v318, %v472
    %v518 = vadd.f32 %v322, %v476
    %v519 = vadd.f32 %v324, %v478
    %v520 = vadd.f32 %v328, %v482
    %v521 = vadd.f32 %v330, %v484
    %v522 = vadd.f32 %v334, %v488
    %v523 = vadd.f32 %v336, %v490
    %v524 = vadd.f32 %v340, %v494
    %v525 = vadd.f32 %v342, %v496
    %v526 = vadd.f32 %v346, %v500
    %v527 = vadd.f32 %v348, %v502
    %v528 = vadd.f32 %v352, %v506
    %v529 = vadd.f32 %v354, %v508
    %v530 = vadd.f32 %v358, %v512
    %v531 = vadd.f32 %v360, %v514
    %v532 = vld [vmem:[%s0 + $0x3] sm:$0xff]
    %v533 = vld [vmem:[%s0 + $0xb] sm:$0xff]
    %v534 = vld [vmem:[%s0 + $0x13] sm:$0xff]
    %v535 = vld [vmem:[%s0 + $0x1b] sm:$0xff]
    %v536 = vld [vmem:[%s0 + $0x23] sm:$0xff]
    %v537 = vld [vmem:[%s0 + $0x2b] sm:$0xff]
    %v538 = vld [vmem:[%s0 + $0x33] sm:$0xff]
    %v539 = vld [vmem:[%s0 + $0x3b] sm:$0xf]
    %s540 = scalar_lea.vmem %s1, 192
    %v541 = vld [vmem:[%s540] sm:$0xff]
    %v542 = vld [vmem:[%s540 + $0x8] sm:$0xff]
    %v543 = vld [vmem:[%s540 + $0x10] sm:$0xff]
    %v544 = vld [vmem:[%s540 + $0x18] sm:$0xff]
    %v545 = vld [vmem:[%s540 + $0x20] sm:$0xff]
    %v546 = vld [vmem:[%s540 + $0x28] sm:$0xff]
    %v547 = vld [vmem:[%s540 + $0x30] sm:$0xff]
    %v548 = vld [vmem:[%s540 + $0x38] sm:$0xff]
    %v550 = vsel %vm87, %v532, 0
    %v553 = vsel %vm87, %v533, 0
    %v556 = vsel %vm87, %v534, 0
    %v559 = vsel %vm87, %v535, 0
    %v562 = vsel %vm87, %v536, 0
    %v565 = vsel %vm87, %v537, 0
    %v568 = vsel %vm87, %v538, 0
    %v571 = vsel %vm87, %v539, 0
    %573 = vmatprep.subr.mxu0 %v542
    %574 = vmatpush1.msra.mxu0 %v541
    %575 = vmatprep.subr.mxu0 %v544
    %576 = vmatpush1.msra.mxu0 %v543
    %577 = vmatprep.subr.mxu0 %v546
    %578 = vmatpush1.msra.mxu0 %v545
    %579 = vmatprep.subr.mxu0 %v548
    %580 = vmatpush1.msra.mxu0 %v547
    %581 = vmatprep.subr.mxu0 0.0
    %582 = vmatpush1.msra.mxu0 0.0
    %583 = vmatprep.subr.mxu0 0.0
    %584 = vmatpush1.msra.mxu0 0.0
    %585 = vmatprep.subr.mxu0 0.0
    %586 = vmatpush1.msra.mxu0 0.0
    %587 = vmatprep.subr.mxu0 0.0
    %588 = vmatpush1.msra.mxu0 0.0
    %589 = vmatprep.subr.mxu0 0.0
    %590 = vmatpush1.msra.mxu0 0.0
    %591 = vmatprep.subr.mxu0 0.0
    %592 = vmatpush1.msra.mxu0 0.0
    %593 = vmatprep.subr.mxu0 0.0
    %594 = vmatpush1.msra.mxu0 0.0
    %595 = vmatprep.subr.mxu0 0.0
    %596 = vmatpush1.msra.mxu0 0.0
    %597 = vmatprep.subr.mxu0 0.0
    %598 = vmatpush1.msra.mxu0 0.0
    %599 = vmatprep.subr.mxu0 0.0
    %600 = vmatpush1.msra.mxu0 0.0
    %601 = vmatprep.subr.mxu0 0.0
    %602 = vmatpush1.msra.mxu0 0.0
    %603 = vmatprep.subr.mxu0 0.0
    %604 = vmatpush1.msra.mxu0 0.0
    %605 = vmatprep.subr.mxu0 0.0
    %606 = vmatpush1.msra.mxu0 0.0
    %607 = vmatprep.subr.mxu0 0.0
    %608 = vmatpush1.msra.mxu0 0.0
    %609 = vmatprep.subr.mxu0 0.0
    %610 = vmatpush1.msra.mxu0 0.0
    %611 = vmatprep.subr.mxu0 0.0
    %612 = vmatpush1.msra.mxu0 0.0
    %613 = vmatprep.subr.mxu0 0.0
    %614 = vmatpush1.msra.mxu0 0.0
    %615 = vmatprep.subr.mxu0 0.0
    %616 = vmatpush1.msra.mxu0 0.0
    %617 = vmatprep.subr.mxu0 0.0
    %618 = vmatpush1.msra.mxu0 0.0
    %619 = vmatprep.subr.mxu0 0.0
    %620 = vmatpush1.msra.mxu0 0.0
    %621 = vmatprep.subr.mxu0 0.0
    %622 = vmatpush1.msra.mxu0 0.0
    %623 = vmatprep.subr.mxu0 0.0
    %624 = vmatpush1.msra.mxu0 0.0
    %625 = vmatprep.subr.mxu0 0.0
    %626 = vmatpush1.msra.mxu0 0.0
    %627 = vmatprep.subr.mxu0 0.0
    %628 = vmatpush1.msra.mxu0 0.0
    %629 = vmatprep.subr.mxu0 0.0
    %630 = vmatpush1.msra.mxu0 0.0
    %631 = vmatprep.subr.mxu0 0.0
    %632 = vmatpush1.msra.mxu0 0.0
    %633 = vmatprep.subr.mxu0 0.0
    %634 = vmatpush1.msra.mxu0 0.0
    %635 = vmatprep.subr.mxu0 0.0
    %636 = vmatpush1.msra.mxu0 0.0
    %637 = vmatprep.mubr.f32.mxu0 0.0
    %638 = vmatmul.mubr.f32.gmra.mrb[0].mxu0 %v550
    %v639 = vpop.f32.mrb[0].mxu0
    %v640 = vadd.f32 0.0, %v639
    %v641 = vpop.f32.mrb[0].mxu0
    %v642 = vadd.f32 0.0, %v641
    %643 = vmatprep.mubr.f32.mxu0 0.0
    %644 = vmatmul.mubr.f32.gmra.mrb[0].mxu0 %v553
    %v645 = vpop.f32.mrb[0].mxu0
    %v646 = vadd.f32 0.0, %v645
    %v647 = vpop.f32.mrb[0].mxu0
    %v648 = vadd.f32 0.0, %v647
    %649 = vmatprep.mubr.f32.mxu0 0.0
    %650 = vmatmul.mubr.f32.gmra.mrb[0].mxu0 %v556
    %v651 = vpop.f32.mrb[0].mxu0
    %v652 = vadd.f32 0.0, %v651
    %v653 = vpop.f32.mrb[0].mxu0
    %v654 = vadd.f32 0.0, %v653
    %655 = vmatprep.mubr.f32.mxu0 0.0
    %656 = vmatmul.mubr.f32.gmra.mrb[0].mxu0 %v559
    %v657 = vpop.f32.mrb[0].mxu0
    %v658 = vadd.f32 0.0, %v657
    %v659 = vpop.f32.mrb[0].mxu0
    %v660 = vadd.f32 0.0, %v659
    %661 = vmatprep.mubr.f32.mxu0 0.0
    %662 = vmatmul.mubr.f32.gmra.mrb[0].mxu0 %v562
    %v663 = vpop.f32.mrb[0].mxu0
    %v664 = vadd.f32 0.0, %v663
    %v665 = vpop.f32.mrb[0].mxu0
    %v666 = vadd.f32 0.0, %v665
    %667 = vmatprep.mubr.f32.mxu0 0.0
    %668 = vmatmul.mubr.f32.gmra.mrb[0].mxu0 %v565
    %v669 = vpop.f32.mrb[0].mxu0
    %v670 = vadd.f32 0.0, %v669
    %v671 = vpop.f32.mrb[0].mxu0
    %v672 = vadd.f32 0.0, %v671
    %673 = vmatprep.mubr.f32.mxu0 0.0
    %674 = vmatmul.mubr.f32.gmra.mrb[0].mxu0 %v568
    %v675 = vpop.f32.mrb[0].mxu0
    %v676 = vadd.f32 0.0, %v675
    %v677 = vpop.f32.mrb[0].mxu0
    %v678 = vadd.f32 0.0, %v677
    %679 = vmatprep.mubr.f32.mxu0 0.0
    %680 = vmatmul.mubr.f32.gmra.mrb[0].mxu0 %v571
    %v681 = vpop.f32.mrb[0].mxu0
    %v682 = vadd.f32 0.0, %v681
    %v683 = vpop.f32.mrb[0].mxu0
    %v684 = vadd.f32 0.0, %v683
    %685 = vdwg.mxu0
    %v686 = vadd.f32 %v516, %v640
    %v687 = vadd.f32 %v517, %v642
    %v688 = vadd.f32 %v518, %v646
    %v689 = vadd.f32 %v519, %v648
    %v690 = vadd.f32 %v520, %v652
    %v691 = vadd.f32 %v521, %v654
    %v692 = vadd.f32 %v522, %v658
    %v693 = vadd.f32 %v523, %v660
    %v694 = vadd.f32 %v524, %v664
    %v695 = vadd.f32 %v525, %v666
    %v696 = vadd.f32 %v526, %v670
    %v697 = vadd.f32 %v527, %v672
    %v698 = vadd.f32 %v528, %v676
    %v699 = vadd.f32 %v529, %v678
    %v700 = vadd.f32 %v530, %v682
    %v701 = vadd.f32 %v531, %v684
    %v702 = vld [vmem:[%s0 + $0x4] sm:$0xff]
    %v703 = vld [vmem:[%s0 + $0xc] sm:$0xff]
    %v704 = vld [vmem:[%s0 + $0x14] sm:$0xff]
    %v705 = vld [vmem:[%s0 + $0x1c] sm:$0xff]
    %v706 = vld [vmem:[%s0 + $0x24] sm:$0xff]
    %v707 = vld [vmem:[%s0 + $0x2c] sm:$0xff]
    %v708 = vld [vmem:[%s0 + $0x34] sm:$0xff]
    %v709 = vld [vmem:[%s0 + $0x3c] sm:$0xf]
    %s710 = scalar_lea.vmem %s1, 256
    %v711 = vld [vmem:[%s710] sm:$0xff]
    %v712 = vld [vmem:[%s710 + $0x8] sm:$0xff]
    %v713 = vld [vmem:[%s710 + $0x10] sm:$0xff]
    %v714 = vld [vmem:[%s710 + $0x18] sm:$0xff]
    %v715 = vld [vmem:[%s710 + $0x20] sm:$0xff]
    %v716 = vld [vmem:[%s710 + $0x28] sm:$0xff]
    %v717 = vld [vmem:[%s710 + $0x30] sm:$0xff]
    %v718 = vld [vmem:[%s710 + $0x38] sm:$0xff]
    %v720 = vsel %vm87, %v702, 0
    %v723 = vsel %vm87, %v703, 0
    %v726 = vsel %vm87, %v704, 0
    %v729 = vsel %vm87, %v705, 0
    %v732 = vsel %vm87, %v706, 0
    %v735 = vsel %vm87, %v707, 0
    %v738 = vsel %vm87, %v708, 0
    %v741 = vsel %vm87, %v709, 0
    %743 = vmatprep.subr.mxu0 %v712
    %744 = vmatpush1.msra.mxu0 %v711
    %745 = vmatprep.subr.mxu0 %v714
    %746 = vmatpush1.msra.mxu0 %v713
    %747 = vmatprep.subr.mxu0 %v716
    %748 = vmatpush1.msra.mxu0 %v715
    %749 = vmatprep.subr.mxu0 %v718
    %750 = vmatpush1.msra.mxu0 %v717
    %751 = vmatprep.subr.mxu0 0.0
    %752 = vmatpush1.msra.mxu0 0.0
    %753 = vmatprep.subr.mxu0 0.0
    %754 = vmatpush1.msra.mxu0 0.0
    %755 = vmatprep.subr.mxu0 0.0
    %756 = vmatpush1.msra.mxu0 0.0
    %757 = vmatprep.subr.mxu0 0.0
    %758 = vmatpush1.msra.mxu0 0.0
    %759 = vmatprep.subr.mxu0 0.0
    %760 = vmatpush1.msra.mxu0 0.0
    %761 = vmatprep.subr.mxu0 0.0
    %762 = vmatpush1.msra.mxu0 0.0
    %763 = vmatprep.subr.mxu0 0.0
    %764 = vmatpush1.msra.mxu0 0.0
    %765 = vmatprep.subr.mxu0 0.0
    %766 = vmatpush1.msra.mxu0 0.0
    %767 = vmatprep.subr.mxu0 0.0
    %768 = vmatpush1.msra.mxu0 0.0
    %769 = vmatprep.subr.mxu0 0.0
    %770 = vmatpush1.msra.mxu0 0.0
    %771 = vmatprep.subr.mxu0 0.0
    %772 = vmatpush1.msra.mxu0 0.0
    %773 = vmatprep.subr.mxu0 0.0
    %774 = vmatpush1.msra.mxu0 0.0
    %775 = vmatprep.subr.mxu0 0.0
    %776 = vmatpush1.msra.mxu0 0.0
    %777 = vmatprep.subr.mxu0 0.0
    %778 = vmatpush1.msra.mxu0 0.0
    %779 = vmatprep.subr.mxu0 0.0
    %780 = vmatpush1.msra.mxu0 0.0
    %781 = vmatprep.subr.mxu0 0.0
    %782 = vmatpush1.msra.mxu0 0.0
    %783 = vmatprep.subr.mxu0 0.0
    %784 = vmatpush1.msra.mxu0 0.0
    %785 = vmatprep.subr.mxu0 0.0
    %786 = vmatpush1.msra.mxu0 0.0
    %787 = vmatprep.subr.mxu0 0.0
    %788 = vmatpush1.msra.mxu0 0.0
    %789 = vmatprep.subr.mxu0 0.0
    %790 = vmatpush1.msra.mxu0 0.0
    %791 = vmatprep.subr.mxu0 0.0
    %792 = vmatpush1.msra.mxu0 0.0
    %793 = vmatprep.subr.mxu0 0.0
    %794 = vmatpush1.msra.mxu0 0.0
    %795 = vmatprep.subr.mxu0 0.0
    %796 = vmatpush1.msra.mxu0 0.0
    %797 = vmatprep.subr.mxu0 0.0
    %798 = vmatpush1.msra.mxu0 0.0
    %799 = vmatprep.subr.mxu0 0.0
    %800 = vmatpush1.msra.mxu0 0.0
    %801 = vmatprep.subr.mxu0 0.0
    %802 = vmatpush1.msra.mxu0 0.0
    %803 = vmatprep.subr.mxu0 0.0
    %804 = vmatpush1.msra.mxu0 0.0
    %805 = vmatprep.subr.mxu0 0.0
    %806 = vmatpush1.msra.mxu0 0.0
    %807 = vmatprep.mubr.f32.mxu0 0.0
    %808 = vmatmul.mubr.f32.gmra.mrb[0].mxu0 %v720
    %v809 = vpop.f32.mrb[0].mxu0
    %v810 = vadd.f32 0.0, %v809
    %v811 = vpop.f32.mrb[0].mxu0
    %v812 = vadd.f32 0.0, %v811
    %813 = vmatprep.mubr.f32.mxu0 0.0
    %814 = vmatmul.mubr.f32.gmra.mrb[0].mxu0 %v723
    %v815 = vpop.f32.mrb[0].mxu0
    %v816 = vadd.f32 0.0, %v815
    %v817 = vpop.f32.mrb[0].mxu0
    %v818 = vadd.f32 0.0, %v817
    %819 = vmatprep.mubr.f32.mxu0 0.0
    %820 = vmatmul.mubr.f32.gmra.mrb[0].mxu0 %v726
    %v821 = vpop.f32.mrb[0].mxu0
    %v822 = vadd.f32 0.0, %v821
    %v823 = vpop.f32.mrb[0].mxu0
    %v824 = vadd.f32 0.0, %v823
    %825 = vmatprep.mubr.f32.mxu0 0.0
    %826 = vmatmul.mubr.f32.gmra.mrb[0].mxu0 %v729
    %v827 = vpop.f32.mrb[0].mxu0
    %v828 = vadd.f32 0.0, %v827
    %v829 = vpop.f32.mrb[0].mxu0
    %v830 = vadd.f32 0.0, %v829
    %831 = vmatprep.mubr.f32.mxu0 0.0
    %832 = vmatmul.mubr.f32.gmra.mrb[0].mxu0 %v732
    %v833 = vpop.f32.mrb[0].mxu0
    %v834 = vadd.f32 0.0, %v833
    %v835 = vpop.f32.mrb[0].mxu0
    %v836 = vadd.f32 0.0, %v835
    %837 = vmatprep.mubr.f32.mxu0 0.0
    %838 = vmatmul.mubr.f32.gmra.mrb[0].mxu0 %v735
    %v839 = vpop.f32.mrb[0].mxu0
    %v840 = vadd.f32 0.0, %v839
    %v841 = vpop.f32.mrb[0].mxu0
    %v842 = vadd.f32 0.0, %v841
    %843 = vmatprep.mubr.f32.mxu0 0.0
    %844 = vmatmul.mubr.f32.gmra.mrb[0].mxu0 %v738
    %v845 = vpop.f32.mrb[0].mxu0
    %v846 = vadd.f32 0.0, %v845
    %v847 = vpop.f32.mrb[0].mxu0
    %v848 = vadd.f32 0.0, %v847
    %849 = vmatprep.mubr.f32.mxu0 0.0
    %850 = vmatmul.mubr.f32.gmra.mrb[0].mxu0 %v741
    %v851 = vpop.f32.mrb[0].mxu0
    %v852 = vadd.f32 0.0, %v851
    %v853 = vpop.f32.mrb[0].mxu0
    %v854 = vadd.f32 0.0, %v853
    %855 = vdwg.mxu0
    %v856 = vadd.f32 %v686, %v810
    %v857 = vadd.f32 %v687, %v812
    %v858 = vadd.f32 %v688, %v816
    %v859 = vadd.f32 %v689, %v818
    %v860 = vadd.f32 %v690, %v822
    %v861 = vadd.f32 %v691, %v824
    %v862 = vadd.f32 %v692, %v828
    %v863 = vadd.f32 %v693, %v830
    %v864 = vadd.f32 %v694, %v834
    %v865 = vadd.f32 %v695, %v836
    %v866 = vadd.f32 %v696, %v840
    %v867 = vadd.f32 %v697, %v842
    %v868 = vadd.f32 %v698, %v846
    %v869 = vadd.f32 %v699, %v848
    %v870 = vadd.f32 %v700, %v852
    %v871 = vadd.f32 %v701, %v854
    %v872 = vld [vmem:[%s2] sm:$0x3]
    %v874 = vlaneseq
    %v875 = vshrl.u32 %v874, 7
    %v876 = vsub.s32 0, %v875
    %v877 = vrot.slane %v872, %v876
    %v878 = vlaneseq
    %v879 = vshrl.u32 %v878, 7
    %v880 = vsub.s32 1, %v879
    %v881 = vrot.slane %v872, %v880
    %v884 = vadd.f32 %v856, %v877
    %v885 = vadd.f32 %v857, %v881
    %v886 = vadd.f32 %v858, %v877
    %v887 = vadd.f32 %v859, %v881
    %v888 = vadd.f32 %v860, %v877
    %v889 = vadd.f32 %v861, %v881
    %v890 = vadd.f32 %v862, %v877
    %v891 = vadd.f32 %v863, %v881
    %v892 = vadd.f32 %v864, %v877
    %v893 = vadd.f32 %v865, %v881
    %v894 = vadd.f32 %v866, %v877
    %v895 = vadd.f32 %v867, %v881
    %v896 = vadd.f32 %v868, %v877
    %v897 = vadd.f32 %v869, %v881
    %v898 = vadd.f32 %v870, %v877
    %v899 = vadd.f32 %v871, %v881
    %v900 = vmax.f32 %v884, 0.0
    %v901 = vmax.f32 %v885, 0.0
    %v902 = vmax.f32 %v886, 0.0
    %v903 = vmax.f32 %v887, 0.0
    %v904 = vmax.f32 %v888, 0.0
    %v905 = vmax.f32 %v889, 0.0
    %v906 = vmax.f32 %v890, 0.0
    %v907 = vmax.f32 %v891, 0.0
    %v908 = vmax.f32 %v892, 0.0
    %v909 = vmax.f32 %v893, 0.0
    %v910 = vmax.f32 %v894, 0.0
    %v911 = vmax.f32 %v895, 0.0
    %v912 = vmax.f32 %v896, 0.0
    %v913 = vmax.f32 %v897, 0.0
    %v914 = vmax.f32 %v898, 0.0
    %v915 = vmax.f32 %v899, 0.0
    %v916 = vld [vmem:[%s3] sm:$0xff]
    %v917 = vld [vmem:[%s3 + $0x8] sm:$0xff]
    %v918 = vld [vmem:[%s3 + $0x10] sm:$0xff]
    %v919 = vld [vmem:[%s3 + $0x18] sm:$0xff]
    %vm920 = vcmask 490496
    %v922 = vsel %vm920, %v916, 0
    %v925 = vsel %vm920, %v917, 0
    %v928 = vsel %vm920, %v918, 0
    %v931 = vsel %vm920, %v919, 0
    %vm933 = vcmask 1043456
    %v935 = vsel %vm933, %v914, 0
    %v938 = vsel %vm933, %v915, 0
    %940 = vmatprep.subr.mxu0 %v901
    %941 = vmatpush1.msra.mxu0 %v900
    %942 = vmatprep.subr.mxu0 %v903
    %943 = vmatpush1.msra.mxu0 %v902
    %944 = vmatprep.subr.mxu0 %v905
    %945 = vmatpush1.msra.mxu0 %v904
    %946 = vmatprep.subr.mxu0 %v907
    %947 = vmatpush1.msra.mxu0 %v906
    %948 = vmatprep.subr.mxu0 %v909
    %949 = vmatpush1.msra.mxu0 %v908
    %950 = vmatprep.subr.mxu0 %v911
    %951 = vmatpush1.msra.mxu0 %v910
    %952 = vmatprep.subr.mxu0 %v913
    %953 = vmatpush1.msra.mxu0 %v912
    %954 = vmatprep.subr.mxu0 %v938
    %955 = vmatpush1.msra.mxu0 %v935
    %956 = vmatprep.subr.mxu0 0.0
    %957 = vmatpush1.msra.mxu0 0.0
    %958 = vmatprep.subr.mxu0 0.0
    %959 = vmatpush1.msra.mxu0 0.0
    %960 = vmatprep.subr.mxu0 0.0
    %961 = vmatpush1.msra.mxu0 0.0
    %962 = vmatprep.subr.mxu0 0.0
    %963 = vmatpush1.msra.mxu0 0.0
    %964 = vmatprep.subr.mxu0 0.0
    %965 = vmatpush1.msra.mxu0 0.0
    %966 = vmatprep.subr.mxu0 0.0
    %967 = vmatpush1.msra.mxu0 0.0
    %968 = vmatprep.subr.mxu0 0.0
    %969 = vmatpush1.msra.mxu0 0.0
    %970 = vmatprep.subr.mxu0 0.0
    %971 = vmatpush1.msra.mxu0 0.0
    %972 = vmatprep.subr.mxu0 0.0
    %973 = vmatpush1.msra.mxu0 0.0
    %974 = vmatprep.subr.mxu0 0.0
    %975 = vmatpush1.msra.mxu0 0.0
    %976 = vmatprep.subr.mxu0 0.0
    %977 = vmatpush1.msra.mxu0 0.0
    %978 = vmatprep.subr.mxu0 0.0
    %979 = vmatpush1.msra.mxu0 0.0
    %980 = vmatprep.subr.mxu0 0.0
    %981 = vmatpush1.msra.mxu0 0.0
    %982 = vmatprep.subr.mxu0 0.0
    %983 = vmatpush1.msra.mxu0 0.0
    %984 = vmatprep.subr.mxu0 0.0
    %985 = vmatpush1.msra.mxu0 0.0
    %986 = vmatprep.subr.mxu0 0.0
    %987 = vmatpush1.msra.mxu0 0.0
    %988 = vmatprep.subr.mxu0 0.0
    %989 = vmatpush1.msra.mxu0 0.0
    %990 = vmatprep.subr.mxu0 0.0
    %991 = vmatpush1.msra.mxu0 0.0
    %992 = vmatprep.subr.mxu0 0.0
    %993 = vmatpush1.msra.mxu0 0.0
    %994 = vmatprep.subr.mxu0 0.0
    %995 = vmatpush1.msra.mxu0 0.0
    %996 = vmatprep.subr.mxu0 0.0
    %997 = vmatpush1.msra.mxu0 0.0
    %998 = vmatprep.subr.mxu0 0.0
    %999 = vmatpush1.msra.mxu0 0.0
    %1000 = vmatprep.subr.mxu0 0.0
    %1001 = vmatpush1.msra.mxu0 0.0
    %1002 = vmatprep.subr.mxu0 0.0
    %1003 = vmatpush1.msra.mxu0 0.0
    %1004 = vmatprep.mubr.f32.mxu0 0.0
    %1005 = vmatmul.mubr.f32.gmra.mrb[0].mxu0 %v922
    %v1006 = vpop.f32.mrb[0].mxu0
    %v1007 = vadd.f32 0.0, %v1006
    %v1008 = vpop.f32.mrb[0].mxu0
    %v1009 = vadd.f32 0.0, %v1008
    %1010 = vmatprep.mubr.f32.mxu0 0.0
    %1011 = vmatmul.mubr.f32.gmra.mrb[0].mxu0 %v925
    %v1012 = vpop.f32.mrb[0].mxu0
    %v1013 = vadd.f32 0.0, %v1012
    %v1014 = vpop.f32.mrb[0].mxu0
    %v1015 = vadd.f32 0.0, %v1014
    %1016 = vmatprep.mubr.f32.mxu0 0.0
    %1017 = vmatmul.mubr.f32.gmra.mrb[0].mxu0 %v928
    %v1018 = vpop.f32.mrb[0].mxu0
    %v1019 = vadd.f32 0.0, %v1018
    %v1020 = vpop.f32.mrb[0].mxu0
    %v1021 = vadd.f32 0.0, %v1020
    %1022 = vmatprep.mubr.f32.mxu0 0.0
    %1023 = vmatmul.mubr.f32.gmra.mrb[0].mxu0 %v931
    %v1024 = vpop.f32.mrb[0].mxu0
    %v1025 = vadd.f32 0.0, %v1024
    %v1026 = vpop.f32.mrb[0].mxu0
    %v1027 = vadd.f32 0.0, %v1026
    %1028 = vdwg.mxu0
    %v1029 = vld [vmem:[%s4] sm:$0xff]
    %v1030 = vld [vmem:[%s4 + $0x8] sm:$0xff]
    %v1031 = vld [vmem:[%s4 + $0x10] sm:$0xff]
    %v1032 = vld [vmem:[%s4 + $0x18] sm:$0xff]
    %v1033 = vld [vmem:[%s4 + $0x20] sm:$0xff]
    %v1034 = vld [vmem:[%s4 + $0x28] sm:$0xff]
    %v1035 = vld [vmem:[%s4 + $0x30] sm:$0xff]
    %v1036 = vld [vmem:[%s4 + $0x38] sm:$0xff]
    %v1037 = vld [vmem:[%s4 + $0x40] sm:$0xff]
    %v1038 = vld [vmem:[%s4 + $0x48] sm:$0xff]
    %v1039 = vld [vmem:[%s4 + $0x50] sm:$0xff]
    %v1040 = vld [vmem:[%s4 + $0x58] sm:$0xff]
    %v1041 = vld [vmem:[%s4 + $0x60] sm:$0xff]
    %v1042 = vld [vmem:[%s4 + $0x68] sm:$0xff]
    %v1043 = vld [vmem:[%s4 + $0x70] sm:$0xff]
    %v1044 = vld [vmem:[%s4 + $0x78] sm:$0xff]
    %v1045 = vld [vmem:[%s4 + $0x80] sm:$0xff]
    %v1046 = vld [vmem:[%s4 + $0x88] sm:$0xff]
    %v1047 = vld [vmem:[%s4 + $0x90] sm:$0xff]
    %v1048 = vld [vmem:[%s4 + $0x98] sm:$0xff]
    %v1049 = vld [vmem:[%s4 + $0xa0] sm:$0xff]
    %vm1050 = vcmask 326656
    %v1052 = vsel %vm1050, %v1009, 0
    %v1055 = vsel %vm1050, %v1015, 0
    %v1058 = vsel %vm1050, %v1021, 0
    %v1061 = vsel %vm1050, %v1027, 0
    %1063 = vmatprep.subr.mxu0 0.0
    %1064 = vmatpush1.msra.mxu0 %v1029
    %1065 = vmatprep.subr.mxu0 0.0
    %1066 = vmatpush1.msra.mxu0 %v1030
    %1067 = vmatprep.subr.mxu0 0.0
    %1068 = vmatpush1.msra.mxu0 %v1031
    %1069 = vmatprep.subr.mxu0 0.0
    %1070 = vmatpush1.msra.mxu0 %v1032
    %1071 = vmatprep.subr.mxu0 0.0
    %1072 = vmatpush1.msra.mxu0 %v1033
    %1073 = vmatprep.subr.mxu0 0.0
    %1074 = vmatpush1.msra.mxu0 %v1034
    %1075 = vmatprep.subr.mxu0 0.0
    %1076 = vmatpush1.msra.mxu0 %v1035
    %1077 = vmatprep.subr.mxu0 0.0
    %1078 = vmatpush1.msra.mxu0 %v1036
    %1079 = vmatprep.subr.mxu0 0.0
    %1080 = vmatpush1.msra.mxu0 %v1037
    %1081 = vmatprep.subr.mxu0 0.0
    %1082 = vmatpush1.msra.mxu0 %v1038
    %1083 = vmatprep.subr.mxu0 0.0
    %1084 = vmatpush1.msra.mxu0 %v1039
    %1085 = vmatprep.subr.mxu0 0.0
    %1086 = vmatpush1.msra.mxu0 %v1040
    %1087 = vmatprep.subr.mxu0 0.0
    %1088 = vmatpush1.msra.mxu0 %v1041
    %1089 = vmatprep.subr.mxu0 0.0
    %1090 = vmatpush1.msra.mxu0 %v1042
    %1091 = vmatprep.subr.mxu0 0.0
    %1092 = vmatpush1.msra.mxu0 %v1043
    %1093 = vmatprep.subr.mxu0 0.0
    %1094 = vmatpush1.msra.mxu0 %v1044
    %1095 = vmatprep.subr.mxu0 0.0
    %1096 = vmatpush1.msra.mxu0 %v1045
    %1097 = vmatprep.subr.mxu0 0.0
    %1098 = vmatpush1.msra.mxu0 %v1046
    %1099 = vmatprep.subr.mxu0 0.0
    %1100 = vmatpush1.msra.mxu0 %v1047
    %1101 = vmatprep.subr.mxu0 0.0
    %1102 = vmatpush1.msra.mxu0 %v1048
    %1103 = vmatprep.subr.mxu0 0.0
    %1104 = vmatpush1.msra.mxu0 %v1049
    %1105 = vmatprep.subr.mxu0 0.0
    %1106 = vmatpush1.msra.mxu0 0.0
    %1107 = vmatprep.subr.mxu0 0.0
    %1108 = vmatpush1.msra.mxu0 0.0
    %1109 = vmatprep.subr.mxu0 0.0
    %1110 = vmatpush1.msra.mxu0 0.0
    %1111 = vmatprep.subr.mxu0 0.0
    %1112 = vmatpush1.msra.mxu0 0.0
    %1113 = vmatprep.subr.mxu0 0.0
    %1114 = vmatpush1.msra.mxu0 0.0
    %1115 = vmatprep.subr.mxu0 0.0
    %1116 = vmatpush1.msra.mxu0 0.0
    %1117 = vmatprep.subr.mxu0 0.0
    %1118 = vmatpush1.msra.mxu0 0.0
    %1119 = vmatprep.subr.mxu0 0.0
    %1120 = vmatpush1.msra.mxu0 0.0
    %1121 = vmatprep.subr.mxu0 0.0
    %1122 = vmatpush1.msra.mxu0 0.0
    %1123 = vmatprep.subr.mxu0 0.0
    %1124 = vmatpush1.msra.mxu0 0.0
    %1125 = vmatprep.subr.mxu0 0.0
    %1126 = vmatpush1.msra.mxu0 0.0
    %1127 = vmatprep.mubr.f32.mxu0 %v1052
    %1128 = vmatmul.mubr.f32.gmra.mrb[0].mxu0 %v1007
    %v1129 = vpop.f32.mrb[0].mxu0
    %v1130 = vadd.f32 0.0, %v1129
    %v1131 = vpop.f32.mrb[0].mxu0
    %1132 = vmatprep.mubr.f32.mxu0 %v1055
    %1133 = vmatmul.mubr.f32.gmra.mrb[0].mxu0 %v1013
    %v1134 = vpop.f32.mrb[0].mxu0
    %v1135 = vadd.f32 0.0, %v1134
    %v1136 = vpop.f32.mrb[0].mxu0
    %1137 = vmatprep.mubr.f32.mxu0 %v1058
    %1138 = vmatmul.mubr.f32.gmra.mrb[0].mxu0 %v1019
    %v1139 = vpop.f32.mrb[0].mxu0
    %v1140 = vadd.f32 0.0, %v1139
    %v1141 = vpop.f32.mrb[0].mxu0
    %1142 = vmatprep.mubr.f32.mxu0 %v1061
    %1143 = vmatmul.mubr.f32.gmra.mrb[0].mxu0 %v1025
    %v1144 = vpop.f32.mrb[0].mxu0
    %v1145 = vadd.f32 0.0, %v1144
    %v1146 = vpop.f32.mrb[0].mxu0
    %1147 = vdwg.mxu0
    %vm1148 = vcmask 687104
    %1149 = vst.msk [vmem:[#allocation2] sm:$0xff] %vm1148, %v1130
    %1150 = vst.msk [vmem:[#allocation2 + $0x8] sm:$0xff] %vm1148, %v1135
    %1151 = vst.msk [vmem:[#allocation2 + $0x10] sm:$0xff] %vm1148, %v1140
    %1152 = vst.msk [vmem:[#allocation2 + $0x18] sm:$0xff] %vm1148, %v1145
    %v1153 = vld [vmem:[#allocation2] sm:$0xff]
    %v1154 = vld [vmem:[#allocation2 + $0x8] sm:$0xff]
    %v1155 = vld [vmem:[#allocation2 + $0x10] sm:$0xff]
    %v1156 = vld [vmem:[#allocation2 + $0x18] sm:$0xf]
    %v1157 = vld [vmem:[%s5] sm:$0xff]
    %v1158 = vld [vmem:[%s5 + $0x8] sm:$0xff]
    %v1159 = vld [vmem:[%s5 + $0x10] sm:$0xff]
    %v1160 = vld [vmem:[%s5 + $0x18] sm:$0xff]
    %v1161 = vld [vmem:[%s5 + $0x20] sm:$0xff]
    %v1162 = vld [vmem:[%s5 + $0x28] sm:$0xff]
    %v1163 = vld [vmem:[%s5 + $0x30] sm:$0xff]
    %v1164 = vld [vmem:[%s5 + $0x38] sm:$0xff]
    %v1165 = vld [vmem:[%s5 + $0x40] sm:$0xff]
    %v1166 = vld [vmem:[%s5 + $0x48] sm:$0xff]
    %v1167 = vld [vmem:[%s5 + $0x50] sm:$0xff]
    %v1168 = vld [vmem:[%s5 + $0x58] sm:$0xff]
    %v1169 = vld [vmem:[%s5 + $0x60] sm:$0xff]
    %v1170 = vld [vmem:[%s5 + $0x68] sm:$0xff]
    %v1171 = vld [vmem:[%s5 + $0x70] sm:$0xff]
    %v1172 = vld [vmem:[%s5 + $0x78] sm:$0xff]
    %v1173 = vld [vmem:[%s5 + $0x80] sm:$0xff]
    %v1174 = vld [vmem:[%s5 + $0x88] sm:$0xff]
    %v1175 = vld [vmem:[%s5 + $0x90] sm:$0xff]
    %v1176 = vld [vmem:[%s5 + $0x98] sm:$0xff]
    %v1177 = vld [vmem:[%s5 + $0xa0] sm:$0xf]
    %v1178 = vld [vmem:[%s5 + $0xa8] sm:$0xf]
    %v1179 = vld [vmem:[#allocation2 + $0x1] sm:$0xff]
    %v1180 = vld [vmem:[#allocation2 + $0x9] sm:$0xff]
    %v1181 = vld [vmem:[#allocation2 + $0x11] sm:$0xff]
    %v1182 = vld [vmem:[#allocation2 + $0x19] sm:$0xf]
    %s1183 = scalar_lea.vmem %s5, 176
    %v1184 = vld [vmem:[%s1183] sm:$0xff]
    %v1185 = vld [vmem:[%s1183 + $0x8] sm:$0xff]
    %v1186 = vld [vmem:[%s1183 + $0x10] sm:$0xff]
    %v1187 = vld [vmem:[%s1183 + $0x18] sm:$0xff]
    %v1188 = vld [vmem:[%s1183 + $0x20] sm:$0xff]
    %v1189 = vld [vmem:[%s1183 + $0x28] sm:$0xff]
    %v1190 = vld [vmem:[%s1183 + $0x30] sm:$0xff]
    %v1191 = vld [vmem:[%s1183 + $0x38] sm:$0xff]
    %v1192 = vld [vmem:[%s1183 + $0x40] sm:$0xff]
    %v1193 = vld [vmem:[%s1183 + $0x48] sm:$0xff]
    %v1194 = vld [vmem:[%s1183 + $0x50] sm:$0xff]
    %v1195 = vld [vmem:[%s1183 + $0x58] sm:$0xff]
    %v1196 = vld [vmem:[%s1183 + $0x60] sm:$0xff]
    %v1197 = vld [vmem:[%s1183 + $0x68] sm:$0xff]
    %v1198 = vld [vmem:[%s1183 + $0x70] sm:$0xff]
    %v1199 = vld [vmem:[%s1183 + $0x78] sm:$0xff]
    %v1200 = vld [vmem:[%s1183 + $0x80] sm:$0xff]
    %v1201 = vld [vmem:[%s1183 + $0x88] sm:$0xff]
    %v1202 = vld [vmem:[%s1183 + $0x90] sm:$0xff]
    %v1203 = vld [vmem:[%s1183 + $0x98] sm:$0xff]
    %v1204 = vld [vmem:[%s1183 + $0xa0] sm:$0xf]
    %v1205 = vld [vmem:[%s1183 + $0xa8] sm:$0xf]
    %v1207 = vsel %vm1148, %v1179, 0
    %v1210 = vsel %vm1148, %v1180, 0
    %v1213 = vsel %vm1148, %v1181, 0
    %v1216 = vsel %vm1148, %v1182, 0
    %v1219 = vsel %vm933, %v1204, 0
    %v1222 = vsel %vm933, %v1205, 0
    %1224 = vmatprep.subr.mxu0 %v1185
    %1225 = vmatpush1.msra.mxu0 %v1184
    %1226 = vmatprep.subr.mxu0 %v1187
    %1227 = vmatpush1.msra.mxu0 %v1186
    %1228 = vmatprep.subr.mxu0 %v1189
    %1229 = vmatpush1.msra.mxu0 %v1188
    %1230 = vmatprep.subr.mxu0 %v1191
    %1231 = vmatpush1.msra.mxu0 %v1190
    %1232 = vmatprep.subr.mxu0 %v1193
    %1233 = vmatpush1.msra.mxu0 %v1192
    %1234 = vmatprep.subr.mxu0 %v1195
    %1235 = vmatpush1.msra.mxu0 %v1194
    %1236 = vmatprep.subr.mxu0 %v1197
    %1237 = vmatpush1.msra.mxu0 %v1196
    %1238 = vmatprep.subr.mxu0 %v1199
    %1239 = vmatpush1.msra.mxu0 %v1198
    %1240 = vmatprep.subr.mxu0 %v1201
    %1241 = vmatpush1.msra.mxu0 %v1200
    %1242 = vmatprep.subr.mxu0 %v1203
    %1243 = vmatpush1.msra.mxu0 %v1202
    %1244 = vmatprep.subr.mxu0 %v1222
    %1245 = vmatpush1.msra.mxu0 %v1219
    %1246 = vmatprep.subr.mxu0 0.0
    %1247 = vmatpush1.msra.mxu0 0.0
    %1248 = vmatprep.subr.mxu0 0.0
    %1249 = vmatpush1.msra.mxu0 0.0
    %1250 = vmatprep.subr.mxu0 0.0
    %1251 = vmatpush1.msra.mxu0 0.0
    %1252 = vmatprep.subr.mxu0 0.0
    %1253 = vmatpush1.msra.mxu0 0.0
    %1254 = vmatprep.subr.mxu0 0.0
    %1255 = vmatpush1.msra.mxu0 0.0
    %1256 = vmatprep.subr.mxu0 0.0
    %1257 = vmatpush1.msra.mxu0 0.0
    %1258 = vmatprep.subr.mxu0 0.0
    %1259 = vmatpush1.msra.mxu0 0.0
    %1260 = vmatprep.subr.mxu0 0.0
    %1261 = vmatpush1.msra.mxu0 0.0
    %1262 = vmatprep.subr.mxu0 0.0
    %1263 = vmatpush1.msra.mxu0 0.0
    %1264 = vmatprep.subr.mxu0 0.0
    %1265 = vmatpush1.msra.mxu0 0.0
    %1266 = vmatprep.subr.mxu0 0.0
    %1267 = vmatpush1.msra.mxu0 0.0
    %1268 = vmatprep.subr.mxu0 0.0
    %1269 = vmatpush1.msra.mxu0 0.0
    %1270 = vmatprep.subr.mxu0 0.0
    %1271 = vmatpush1.msra.mxu0 0.0
    %1272 = vmatprep.subr.mxu0 0.0
    %1273 = vmatpush1.msra.mxu0 0.0
    %1274 = vmatprep.subr.mxu0 0.0
    %1275 = vmatpush1.msra.mxu0 0.0
    %1276 = vmatprep.subr.mxu0 0.0
    %1277 = vmatpush1.msra.mxu0 0.0
    %1278 = vmatprep.subr.mxu0 0.0
    %1279 = vmatpush1.msra.mxu0 0.0
    %1280 = vmatprep.subr.mxu0 0.0
    %1281 = vmatpush1.msra.mxu0 0.0
    %1282 = vmatprep.subr.mxu0 0.0
    %1283 = vmatpush1.msra.mxu0 0.0
    %1284 = vmatprep.subr.mxu0 0.0
    %1285 = vmatpush1.msra.mxu0 0.0
    %1286 = vmatprep.subr.mxu0 0.0
    %1287 = vmatpush1.msra.mxu0 0.0
    %1288 = vmatprep.mubr.f32.mxu0 0.0
    %1289 = vmatmul.mubr.f32.gmra.mrb[0].mxu0 %v1207
    %v1290 = vpop.f32.mrb[0].mxu0
    %v1291 = vadd.f32 0.0, %v1290
    %v1292 = vpop.f32.mrb[0].mxu0
    %v1293 = vadd.f32 0.0, %v1292
    %1294 = vmatprep.mubr.f32.mxu0 0.0
    %1295 = vmatmul.mubr.f32.gmra.mrb[0].mxu0 %v1210
    %v1296 = vpop.f32.mrb[0].mxu0
    %v1297 = vadd.f32 0.0, %v1296
    %v1298 = vpop.f32.mrb[0].mxu0
    %v1299 = vadd.f32 0.0, %v1298
    %1300 = vmatprep.mubr.f32.mxu0 0.0
    %1301 = vmatmul.mubr.f32.gmra.mrb[0].mxu0 %v1213
    %v1302 = vpop.f32.mrb[0].mxu0
    %v1303 = vadd.f32 0.0, %v1302
    %v1304 = vpop.f32.mrb[0].mxu0
    %v1305 = vadd.f32 0.0, %v1304
    %1306 = vmatprep.mubr.f32.mxu0 0.0
    %1307 = vmatmul.mubr.f32.gmra.mrb[0].mxu0 %v1216
    %v1308 = vpop.f32.mrb[0].mxu0
    %v1309 = vadd.f32 0.0, %v1308
    %v1310 = vpop.f32.mrb[0].mxu0
    %v1311 = vadd.f32 0.0, %v1310
    %1312 = vdwg.mxu0
    %v1314 = vsel %vm1148, %v1153, 0
    %v1317 = vsel %vm1148, %v1154, 0
    %v1320 = vsel %vm1148, %v1155, 0
    %v1323 = vsel %vm1148, %v1156, 0
    %v1326 = vsel %vm933, %v1177, 0
    %v1329 = vsel %vm933, %v1178, 0
    %1331 = vmatprep.subr.mxu0 %v1158
    %1332 = vmatpush1.msra.mxu0 %v1157
    %1333 = vmatprep.subr.mxu0 %v1160
    %1334 = vmatpush1.msra.mxu0 %v1159
    %1335 = vmatprep.subr.mxu0 %v1162
    %1336 = vmatpush1.msra.mxu0 %v1161
    %1337 = vmatprep.subr.mxu0 %v1164
    %1338 = vmatpush1.msra.mxu0 %v1163
    %1339 = vmatprep.subr.mxu0 %v1166
    %1340 = vmatpush1.msra.mxu0 %v1165
    %1341 = vmatprep.subr.mxu0 %v1168
    %1342 = vmatpush1.msra.mxu0 %v1167
    %1343 = vmatprep.subr.mxu0 %v1170
    %1344 = vmatpush1.msra.mxu0 %v1169
    %1345 = vmatprep.subr.mxu0 %v1172
    %1346 = vmatpush1.msra.mxu0 %v1171
    %1347 = vmatprep.subr.mxu0 %v1174
    %1348 = vmatpush1.msra.mxu0 %v1173
    %1349 = vmatprep.subr.mxu0 %v1176
    %1350 = vmatpush1.msra.mxu0 %v1175
    %1351 = vmatprep.subr.mxu0 %v1329
    %1352 = vmatpush1.msra.mxu0 %v1326
    %1353 = vmatprep.subr.mxu0 0.0
    %1354 = vmatpush1.msra.mxu0 0.0
    %1355 = vmatprep.subr.mxu0 0.0
    %1356 = vmatpush1.msra.mxu0 0.0
    %1357 = vmatprep.subr.mxu0 0.0
    %1358 = vmatpush1.msra.mxu0 0.0
    %1359 = vmatprep.subr.mxu0 0.0
    %1360 = vmatpush1.msra.mxu0 0.0
    %1361 = vmatprep.subr.mxu0 0.0
    %1362 = vmatpush1.msra.mxu0 0.0
    %1363 = vmatprep.subr.mxu0 0.0
    %1364 = vmatpush1.msra.mxu0 0.0
    %1365 = vmatprep.subr.mxu0 0.0
    %1366 = vmatpush1.msra.mxu0 0.0
    %1367 = vmatprep.subr.mxu0 0.0
    %1368 = vmatpush1.msra.mxu0 0.0
    %1369 = vmatprep.subr.mxu0 0.0
    %1370 = vmatpush1.msra.mxu0 0.0
    %1371 = vmatprep.subr.mxu0 0.0
    %1372 = vmatpush1.msra.mxu0 0.0
    %1373 = vmatprep.subr.mxu0 0.0
    %1374 = vmatpush1.msra.mxu0 0.0
    %1375 = vmatprep.subr.mxu0 0.0
    %1376 = vmatpush1.msra.mxu0 0.0
    %1377 = vmatprep.subr.mxu0 0.0
    %1378 = vmatpush1.msra.mxu0 0.0
    %1379 = vmatprep.subr.mxu0 0.0
    %1380 = vmatpush1.msra.mxu0 0.0
    %1381 = vmatprep.subr.mxu0 0.0
    %1382 = vmatpush1.msra.mxu0 0.0
    %1383 = vmatprep.subr.mxu0 0.0
    %1384 = vmatpush1.msra.mxu0 0.0
    %1385 = vmatprep.subr.mxu0 0.0
    %1386 = vmatpush1.msra.mxu0 0.0
    %1387 = vmatprep.subr.mxu0 0.0
    %1388 = vmatpush1.msra.mxu0 0.0
    %1389 = vmatprep.subr.mxu0 0.0
    %1390 = vmatpush1.msra.mxu0 0.0
    %1391 = vmatprep.subr.mxu0 0.0
    %1392 = vmatpush1.msra.mxu0 0.0
    %1393 = vmatprep.subr.mxu0 0.0
    %1394 = vmatpush1.msra.mxu0 0.0
    %1395 = vmatprep.mubr.f32.mxu0 0.0
    %1396 = vmatmul.mubr.f32.gmra.mrb[0].mxu0 %v1314
    %v1397 = vpop.f32.mrb[0].mxu0
    %v1398 = vadd.f32 %v1291, %v1397
    %v1399 = vpop.f32.mrb[0].mxu0
    %v1400 = vadd.f32 %v1293, %v1399
    %1401 = vmatprep.mubr.f32.mxu0 0.0
    %1402 = vmatmul.mubr.f32.gmra.mrb[0].mxu0 %v1317
    %v1403 = vpop.f32.mrb[0].mxu0
    %v1404 = vadd.f32 %v1297, %v1403
    %v1405 = vpop.f32.mrb[0].mxu0
    %v1406 = vadd.f32 %v1299, %v1405
    %1407 = vmatprep.mubr.f32.mxu0 0.0
    %1408 = vmatmul.mubr.f32.gmra.mrb[0].mxu0 %v1320
    %v1409 = vpop.f32.mrb[0].mxu0
    %v1410 = vadd.f32 %v1303, %v1409
    %v1411 = vpop.f32.mrb[0].mxu0
    %v1412 = vadd.f32 %v1305, %v1411
    %1413 = vmatprep.mubr.f32.mxu0 0.0
    %1414 = vmatmul.mubr.f32.gmra.mrb[0].mxu0 %v1323
    %v1415 = vpop.f32.mrb[0].mxu0
    %v1416 = vadd.f32 %v1309, %v1415
    %v1417 = vpop.f32.mrb[0].mxu0
    %v1418 = vadd.f32 %v1311, %v1417
    %1419 = vdwg.mxu0
    %v1420 = vld [vmem:[#allocation2 + $0x2] sm:$0xff]
    %v1421 = vld [vmem:[#allocation2 + $0xa] sm:$0xff]
    %v1422 = vld [vmem:[#allocation2 + $0x12] sm:$0xff]
    %v1423 = vld [vmem:[#allocation2 + $0x1a] sm:$0xf]
    %s1424 = scalar_lea.vmem %s5, 352
    %v1425 = vld [vmem:[%s1424] sm:$0xff]
    %v1426 = vld [vmem:[%s1424 + $0x8] sm:$0xff]
    %v1427 = vld [vmem:[%s1424 + $0x10] sm:$0xff]
    %v1428 = vld [vmem:[%s1424 + $0x18] sm:$0xff]
    %v1429 = vld [vmem:[%s1424 + $0x20] sm:$0xff]
    %v1430 = vld [vmem:[%s1424 + $0x28] sm:$0xff]
    %v1431 = vld [vmem:[%s1424 + $0x30] sm:$0xff]
    %v1432 = vld [vmem:[%s1424 + $0x38] sm:$0xff]
    %v1433 = vld [vmem:[%s1424 + $0x40] sm:$0xff]
    %v1434 = vld [vmem:[%s1424 + $0x48] sm:$0xff]
    %v1435 = vld [vmem:[%s1424 + $0x50] sm:$0xff]
    %v1436 = vld [vmem:[%s1424 + $0x58] sm:$0xff]
    %v1437 = vld [vmem:[%s1424 + $0x60] sm:$0xff]
    %v1438 = vld [vmem:[%s1424 + $0x68] sm:$0xff]
    %v1439 = vld [vmem:[%s1424 + $0x70] sm:$0xff]
    %v1440 = vld [vmem:[%s1424 + $0x78] sm:$0xff]
    %v1441 = vld [vmem:[%s1424 + $0x80] sm:$0xff]
    %v1442 = vld [vmem:[%s1424 + $0x88] sm:$0xff]
    %v1443 = vld [vmem:[%s1424 + $0x90] sm:$0xff]
    %v1444 = vld [vmem:[%s1424 + $0x98] sm:$0xff]
    %v1445 = vld [vmem:[%s1424 + $0xa0] sm:$0xf]
    %v1446 = vld [vmem:[%s1424 + $0xa8] sm:$0xf]
    %v1448 = vsel %vm1148, %v1420, 0
    %v1451 = vsel %vm1148, %v1421, 0
    %v1454 = vsel %vm1148, %v1422, 0
    %v1457 = vsel %vm1148, %v1423, 0
    %v1460 = vsel %vm933, %v1445, 0
    %v1463 = vsel %vm933, %v1446, 0
    %1465 = vmatprep.subr.mxu0 %v1426
    %1466 = vmatpush1.msra.mxu0 %v1425
    %1467 = vmatprep.subr.mxu0 %v1428
    %1468 = vmatpush1.msra.mxu0 %v1427
    %1469 = vmatprep.subr.mxu0 %v1430
    %1470 = vmatpush1.msra.mxu0 %v1429
    %1471 = vmatprep.subr.mxu0 %v1432
    %1472 = vmatpush1.msra.mxu0 %v1431
    %1473 = vmatprep.subr.mxu0 %v1434
    %1474 = vmatpush1.msra.mxu0 %v1433
    %1475 = vmatprep.subr.mxu0 %v1436
    %1476 = vmatpush1.msra.mxu0 %v1435
    %1477 = vmatprep.subr.mxu0 %v1438
    %1478 = vmatpush1.msra.mxu0 %v1437
    %1479 = vmatprep.subr.mxu0 %v1440
    %1480 = vmatpush1.msra.mxu0 %v1439
    %1481 = vmatprep.subr.mxu0 %v1442
    %1482 = vmatpush1.msra.mxu0 %v1441
    %1483 = vmatprep.subr.mxu0 %v1444
    %1484 = vmatpush1.msra.mxu0 %v1443
    %1485 = vmatprep.subr.mxu0 %v1463
    %1486 = vmatpush1.msra.mxu0 %v1460
    %1487 = vmatprep.subr.mxu0 0.0
    %1488 = vmatpush1.msra.mxu0 0.0
    %1489 = vmatprep.subr.mxu0 0.0
    %1490 = vmatpush1.msra.mxu0 0.0
    %1491 = vmatprep.subr.mxu0 0.0
    %1492 = vmatpush1.msra.mxu0 0.0
    %1493 = vmatprep.subr.mxu0 0.0
    %1494 = vmatpush1.msra.mxu0 0.0
    %1495 = vmatprep.subr.mxu0 0.0
    %1496 = vmatpush1.msra.mxu0 0.0
    %1497 = vmatprep.subr.mxu0 0.0
    %1498 = vmatpush1.msra.mxu0 0.0
    %1499 = vmatprep.subr.mxu0 0.0
    %1500 = vmatpush1.msra.mxu0 0.0
    %1501 = vmatprep.subr.mxu0 0.0
    %1502 = vmatpush1.msra.mxu0 0.0
    %1503 = vmatprep.subr.mxu0 0.0
    %1504 = vmatpush1.msra.mxu0 0.0
    %1505 = vmatprep.subr.mxu0 0.0
    %1506 = vmatpush1.msra.mxu0 0.0
    %1507 = vmatprep.subr.mxu0 0.0
    %1508 = vmatpush1.msra.mxu0 0.0
    %1509 = vmatprep.subr.mxu0 0.0
    %1510 = vmatpush1.msra.mxu0 0.0
    %1511 = vmatprep.subr.mxu0 0.0
    %1512 = vmatpush1.msra.mxu0 0.0
    %1513 = vmatprep.subr.mxu0 0.0
    %1514 = vmatpush1.msra.mxu0 0.0
    %1515 = vmatprep.subr.mxu0 0.0
    %1516 = vmatpush1.msra.mxu0 0.0
    %1517 = vmatprep.subr.mxu0 0.0
    %1518 = vmatpush1.msra.mxu0 0.0
    %1519 = vmatprep.subr.mxu0 0.0
    %1520 = vmatpush1.msra.mxu0 0.0
    %1521 = vmatprep.subr.mxu0 0.0
    %1522 = vmatpush1.msra.mxu0 0.0
    %1523 = vmatprep.subr.mxu0 0.0
    %1524 = vmatpush1.msra.mxu0 0.0
    %1525 = vmatprep.subr.mxu0 0.0
    %1526 = vmatpush1.msra.mxu0 0.0
    %1527 = vmatprep.subr.mxu0 0.0
    %1528 = vmatpush1.msra.mxu0 0.0
    %1529 = vmatprep.mubr.f32.mxu0 0.0
    %1530 = vmatmul.mubr.f32.gmra.mrb[0].mxu0 %v1448
    %v1531 = vpop.f32.mrb[0].mxu0
    %v1532 = vadd.f32 0.0, %v1531
    %v1533 = vpop.f32.mrb[0].mxu0
    %v1534 = vadd.f32 0.0, %v1533
    %1535 = vmatprep.mubr.f32.mxu0 0.0
    %1536 = vmatmul.mubr.f32.gmra.mrb[0].mxu0 %v1451
    %v1537 = vpop.f32.mrb[0].mxu0
    %v1538 = vadd.f32 0.0, %v1537
    %v1539 = vpop.f32.mrb[0].mxu0
    %v1540 = vadd.f32 0.0, %v1539
    %1541 = vmatprep.mubr.f32.mxu0 0.0
    %1542 = vmatmul.mubr.f32.gmra.mrb[0].mxu0 %v1454
    %v1543 = vpop.f32.mrb[0].mxu0
    %v1544 = vadd.f32 0.0, %v1543
    %v1545 = vpop.f32.mrb[0].mxu0
    %v1546 = vadd.f32 0.0, %v1545
    %1547 = vmatprep.mubr.f32.mxu0 0.0
    %1548 = vmatmul.mubr.f32.gmra.mrb[0].mxu0 %v1457
    %v1549 = vpop.f32.mrb[0].mxu0
    %v1550 = vadd.f32 0.0, %v1549
    %v1551 = vpop.f32.mrb[0].mxu0
    %v1552 = vadd.f32 0.0, %v1551
    %1553 = vdwg.mxu0
    %v1554 = vadd.f32 %v1398, %v1532
    %v1555 = vadd.f32 %v1400, %v1534
    %v1556 = vadd.f32 %v1404, %v1538
    %v1557 = vadd.f32 %v1406, %v1540
    %v1558 = vadd.f32 %v1410, %v1544
    %v1559 = vadd.f32 %v1412, %v1546
    %v1560 = vadd.f32 %v1416, %v1550
    %v1561 = vadd.f32 %v1418, %v1552
    %v1562 = vld [vmem:[#allocation2 + $0x3] sm:$0xff]
    %v1563 = vld [vmem:[#allocation2 + $0xb] sm:$0xff]
    %v1564 = vld [vmem:[#allocation2 + $0x13] sm:$0xff]
    %v1565 = vld [vmem:[#allocation2 + $0x1b] sm:$0xf]
    %s1566 = scalar_lea.vmem %s5, 528
    %v1567 = vld [vmem:[%s1566] sm:$0xff]
    %v1568 = vld [vmem:[%s1566 + $0x8] sm:$0xff]
    %v1569 = vld [vmem:[%s1566 + $0x10] sm:$0xff]
    %v1570 = vld [vmem:[%s1566 + $0x18] sm:$0xff]
    %v1571 = vld [vmem:[%s1566 + $0x20] sm:$0xff]
    %v1572 = vld [vmem:[%s1566 + $0x28] sm:$0xff]
    %v1573 = vld [vmem:[%s1566 + $0x30] sm:$0xff]
    %v1574 = vld [vmem:[%s1566 + $0x38] sm:$0xff]
    %v1575 = vld [vmem:[%s1566 + $0x40] sm:$0xff]
    %v1576 = vld [vmem:[%s1566 + $0x48] sm:$0xff]
    %v1577 = vld [vmem:[%s1566 + $0x50] sm:$0xff]
    %v1578 = vld [vmem:[%s1566 + $0x58] sm:$0xff]
    %v1579 = vld [vmem:[%s1566 + $0x60] sm:$0xff]
    %v1580 = vld [vmem:[%s1566 + $0x68] sm:$0xff]
    %v1581 = vld [vmem:[%s1566 + $0x70] sm:$0xff]
    %v1582 = vld [vmem:[%s1566 + $0x78] sm:$0xff]
    %v1583 = vld [vmem:[%s1566 + $0x80] sm:$0xff]
    %v1584 = vld [vmem:[%s1566 + $0x88] sm:$0xff]
    %v1585 = vld [vmem:[%s1566 + $0x90] sm:$0xff]
    %v1586 = vld [vmem:[%s1566 + $0x98] sm:$0xff]
    %v1587 = vld [vmem:[%s1566 + $0xa0] sm:$0xf]
    %v1588 = vld [vmem:[%s1566 + $0xa8] sm:$0xf]
    %v1590 = vsel %vm1148, %v1562, 0
    %v1593 = vsel %vm1148, %v1563, 0
    %v1596 = vsel %vm1148, %v1564, 0
    %v1599 = vsel %vm1148, %v1565, 0
    %v1602 = vsel %vm933, %v1587, 0
    %v1605 = vsel %vm933, %v1588, 0
    %1607 = vmatprep.subr.mxu0 %v1568
    %1608 = vmatpush1.msra.mxu0 %v1567
    %1609 = vmatprep.subr.mxu0 %v1570
    %1610 = vmatpush1.msra.mxu0 %v1569
    %1611 = vmatprep.subr.mxu0 %v1572
    %1612 = vmatpush1.msra.mxu0 %v1571
    %1613 = vmatprep.subr.mxu0 %v1574
    %1614 = vmatpush1.msra.mxu0 %v1573
    %1615 = vmatprep.subr.mxu0 %v1576
    %1616 = vmatpush1.msra.mxu0 %v1575
    %1617 = vmatprep.subr.mxu0 %v1578
    %1618 = vmatpush1.msra.mxu0 %v1577
    %1619 = vmatprep.subr.mxu0 %v1580
    %1620 = vmatpush1.msra.mxu0 %v1579
    %1621 = vmatprep.subr.mxu0 %v1582
    %1622 = vmatpush1.msra.mxu0 %v1581
    %1623 = vmatprep.subr.mxu0 %v1584
    %1624 = vmatpush1.msra.mxu0 %v1583
    %1625 = vmatprep.subr.mxu0 %v1586
    %1626 = vmatpush1.msra.mxu0 %v1585
    %1627 = vmatprep.subr.mxu0 %v1605
    %1628 = vmatpush1.msra.mxu0 %v1602
    %1629 = vmatprep.subr.mxu0 0.0
    %1630 = vmatpush1.msra.mxu0 0.0
    %1631 = vmatprep.subr.mxu0 0.0
    %1632 = vmatpush1.msra.mxu0 0.0
    %1633 = vmatprep.subr.mxu0 0.0
    %1634 = vmatpush1.msra.mxu0 0.0
    %1635 = vmatprep.subr.mxu0 0.0
    %1636 = vmatpush1.msra.mxu0 0.0
    %1637 = vmatprep.subr.mxu0 0.0
    %1638 = vmatpush1.msra.mxu0 0.0
    %1639 = vmatprep.subr.mxu0 0.0
    %1640 = vmatpush1.msra.mxu0 0.0
    %1641 = vmatprep.subr.mxu0 0.0
    %1642 = vmatpush1.msra.mxu0 0.0
    %1643 = vmatprep.subr.mxu0 0.0
    %1644 = vmatpush1.msra.mxu0 0.0
    %1645 = vmatprep.subr.mxu0 0.0
    %1646 = vmatpush1.msra.mxu0 0.0
    %1647 = vmatprep.subr.mxu0 0.0
    %1648 = vmatpush1.msra.mxu0 0.0
    %1649 = vmatprep.subr.mxu0 0.0
    %1650 = vmatpush1.msra.mxu0 0.0
    %1651 = vmatprep.subr.mxu0 0.0
    %1652 = vmatpush1.msra.mxu0 0.0
    %1653 = vmatprep.subr.mxu0 0.0
    %1654 = vmatpush1.msra.mxu0 0.0
    %1655 = vmatprep.subr.mxu0 0.0
    %1656 = vmatpush1.msra.mxu0 0.0
    %1657 = vmatprep.subr.mxu0 0.0
    %1658 = vmatpush1.msra.mxu0 0.0
    %1659 = vmatprep.subr.mxu0 0.0
    %1660 = vmatpush1.msra.mxu0 0.0
    %1661 = vmatprep.subr.mxu0 0.0
    %1662 = vmatpush1.msra.mxu0 0.0
    %1663 = vmatprep.subr.mxu0 0.0
    %1664 = vmatpush1.msra.mxu0 0.0
    %1665 = vmatprep.subr.mxu0 0.0
    %1666 = vmatpush1.msra.mxu0 0.0
    %1667 = vmatprep.subr.mxu0 0.0
    %1668 = vmatpush1.msra.mxu0 0.0
    %1669 = vmatprep.subr.mxu0 0.0
    %1670 = vmatpush1.msra.mxu0 0.0
    %1671 = vmatprep.mubr.f32.mxu0 0.0
    %1672 = vmatmul.mubr.f32.gmra.mrb[0].mxu0 %v1590
    %v1673 = vpop.f32.mrb[0].mxu0
    %v1674 = vadd.f32 0.0, %v1673
    %v1675 = vpop.f32.mrb[0].mxu0
    %v1676 = vadd.f32 0.0, %v1675
    %1677 = vmatprep.mubr.f32.mxu0 0.0
    %1678 = vmatmul.mubr.f32.gmra.mrb[0].mxu0 %v1593
    %v1679 = vpop.f32.mrb[0].mxu0
    %v1680 = vadd.f32 0.0, %v1679
    %v1681 = vpop.f32.mrb[0].mxu0
    %v1682 = vadd.f32 0.0, %v1681
    %1683 = vmatprep.mubr.f32.mxu0 0.0
    %1684 = vmatmul.mubr.f32.gmra.mrb[0].mxu0 %v1596
    %v1685 = vpop.f32.mrb[0].mxu0
    %v1686 = vadd.f32 0.0, %v1685
    %v1687 = vpop.f32.mrb[0].mxu0
    %v1688 = vadd.f32 0.0, %v1687
    %1689 = vmatprep.mubr.f32.mxu0 0.0
    %1690 = vmatmul.mubr.f32.gmra.mrb[0].mxu0 %v1599
    %v1691 = vpop.f32.mrb[0].mxu0
    %v1692 = vadd.f32 0.0, %v1691
    %v1693 = vpop.f32.mrb[0].mxu0
    %v1694 = vadd.f32 0.0, %v1693
    %1695 = vdwg.mxu0
    %v1696 = vadd.f32 %v1554, %v1674
    %v1697 = vadd.f32 %v1555, %v1676
    %v1698 = vadd.f32 %v1556, %v1680
    %v1699 = vadd.f32 %v1557, %v1682
    %v1700 = vadd.f32 %v1558, %v1686
    %v1701 = vadd.f32 %v1559, %v1688
    %v1702 = vadd.f32 %v1560, %v1692
    %v1703 = vadd.f32 %v1561, %v1694
    %v1704 = vld [vmem:[#allocation2 + $0x4] sm:$0xff]
    %v1705 = vld [vmem:[#allocation2 + $0xc] sm:$0xff]
    %v1706 = vld [vmem:[#allocation2 + $0x14] sm:$0xff]
    %v1707 = vld [vmem:[#allocation2 + $0x1c] sm:$0xf]
    %s1708 = scalar_lea.vmem %s5, 704
    %v1709 = vld [vmem:[%s1708] sm:$0xff]
    %v1710 = vld [vmem:[%s1708 + $0x8] sm:$0xff]
    %v1711 = vld [vmem:[%s1708 + $0x10] sm:$0xff]
    %v1712 = vld [vmem:[%s1708 + $0x18] sm:$0xff]
    %v1713 = vld [vmem:[%s1708 + $0x20] sm:$0xff]
    %v1714 = vld [vmem:[%s1708 + $0x28] sm:$0xff]
    %v1715 = vld [vmem:[%s1708 + $0x30] sm:$0xff]
    %v1716 = vld [vmem:[%s1708 + $0x38] sm:$0xff]
    %v1717 = vld [vmem:[%s1708 + $0x40] sm:$0xff]
    %v1718 = vld [vmem:[%s1708 + $0x48] sm:$0xff]
    %v1719 = vld [vmem:[%s1708 + $0x50] sm:$0xff]
    %v1720 = vld [vmem:[%s1708 + $0x58] sm:$0xff]
    %v1721 = vld [vmem:[%s1708 + $0x60] sm:$0xff]
    %v1722 = vld [vmem:[%s1708 + $0x68] sm:$0xff]
    %v1723 = vld [vmem:[%s1708 + $0x70] sm:$0xff]
    %v1724 = vld [vmem:[%s1708 + $0x78] sm:$0xff]
    %v1725 = vld [vmem:[%s1708 + $0x80] sm:$0xff]
    %v1726 = vld [vmem:[%s1708 + $0x88] sm:$0xff]
    %v1727 = vld [vmem:[%s1708 + $0x90] sm:$0xff]
    %v1728 = vld [vmem:[%s1708 + $0x98] sm:$0xff]
    %v1729 = vld [vmem:[%s1708 + $0xa0] sm:$0xf]
    %v1730 = vld [vmem:[%s1708 + $0xa8] sm:$0xf]
    %v1732 = vsel %vm1148, %v1704, 0
    %v1735 = vsel %vm1148, %v1705, 0
    %v1738 = vsel %vm1148, %v1706, 0
    %v1741 = vsel %vm1148, %v1707, 0
    %v1744 = vsel %vm933, %v1729, 0
    %v1747 = vsel %vm933, %v1730, 0
    %1749 = vmatprep.subr.mxu0 %v1710
    %1750 = vmatpush1.msra.mxu0 %v1709
    %1751 = vmatprep.subr.mxu0 %v1712
    %1752 = vmatpush1.msra.mxu0 %v1711
    %1753 = vmatprep.subr.mxu0 %v1714
    %1754 = vmatpush1.msra.mxu0 %v1713
    %1755 = vmatprep.subr.mxu0 %v1716
    %1756 = vmatpush1.msra.mxu0 %v1715
    %1757 = vmatprep.subr.mxu0 %v1718
    %1758 = vmatpush1.msra.mxu0 %v1717
    %1759 = vmatprep.subr.mxu0 %v1720
    %1760 = vmatpush1.msra.mxu0 %v1719
    %1761 = vmatprep.subr.mxu0 %v1722
    %1762 = vmatpush1.msra.mxu0 %v1721
    %1763 = vmatprep.subr.mxu0 %v1724
    %1764 = vmatpush1.msra.mxu0 %v1723
    %1765 = vmatprep.subr.mxu0 %v1726
    %1766 = vmatpush1.msra.mxu0 %v1725
    %1767 = vmatprep.subr.mxu0 %v1728
    %1768 = vmatpush1.msra.mxu0 %v1727
    %1769 = vmatprep.subr.mxu0 %v1747
    %1770 = vmatpush1.msra.mxu0 %v1744
    %1771 = vmatprep.subr.mxu0 0.0
    %1772 = vmatpush1.msra.mxu0 0.0
    %1773 = vmatprep.subr.mxu0 0.0
    %1774 = vmatpush1.msra.mxu0 0.0
    %1775 = vmatprep.subr.mxu0 0.0
    %1776 = vmatpush1.msra.mxu0 0.0
    %1777 = vmatprep.subr.mxu0 0.0
    %1778 = vmatpush1.msra.mxu0 0.0
    %1779 = vmatprep.subr.mxu0 0.0
    %1780 = vmatpush1.msra.mxu0 0.0
    %1781 = vmatprep.subr.mxu0 0.0
    %1782 = vmatpush1.msra.mxu0 0.0
    %1783 = vmatprep.subr.mxu0 0.0
    %1784 = vmatpush1.msra.mxu0 0.0
    %1785 = vmatprep.subr.mxu0 0.0
    %1786 = vmatpush1.msra.mxu0 0.0
    %1787 = vmatprep.subr.mxu0 0.0
    %1788 = vmatpush1.msra.mxu0 0.0
    %1789 = vmatprep.subr.mxu0 0.0
    %1790 = vmatpush1.msra.mxu0 0.0
    %1791 = vmatprep.subr.mxu0 0.0
    %1792 = vmatpush1.msra.mxu0 0.0
    %1793 = vmatprep.subr.mxu0 0.0
    %1794 = vmatpush1.msra.mxu0 0.0
    %1795 = vmatprep.subr.mxu0 0.0
    %1796 = vmatpush1.msra.mxu0 0.0
    %1797 = vmatprep.subr.mxu0 0.0
    %1798 = vmatpush1.msra.mxu0 0.0
    %1799 = vmatprep.subr.mxu0 0.0
    %1800 = vmatpush1.msra.mxu0 0.0
    %1801 = vmatprep.subr.mxu0 0.0
    %1802 = vmatpush1.msra.mxu0 0.0
    %1803 = vmatprep.subr.mxu0 0.0
    %1804 = vmatpush1.msra.mxu0 0.0
    %1805 = vmatprep.subr.mxu0 0.0
    %1806 = vmatpush1.msra.mxu0 0.0
    %1807 = vmatprep.subr.mxu0 0.0
    %1808 = vmatpush1.msra.mxu0 0.0
    %1809 = vmatprep.subr.mxu0 0.0
    %1810 = vmatpush1.msra.mxu0 0.0
    %1811 = vmatprep.subr.mxu0 0.0
    %1812 = vmatpush1.msra.mxu0 0.0
    %1813 = vmatprep.mubr.f32.mxu0 0.0
    %1814 = vmatmul.mubr.f32.gmra.mrb[0].mxu0 %v1732
    %v1815 = vpop.f32.mrb[0].mxu0
    %v1816 = vadd.f32 0.0, %v1815
    %v1817 = vpop.f32.mrb[0].mxu0
    %v1818 = vadd.f32 0.0, %v1817
    %1819 = vmatprep.mubr.f32.mxu0 0.0
    %1820 = vmatmul.mubr.f32.gmra.mrb[0].mxu0 %v1735
    %v1821 = vpop.f32.mrb[0].mxu0
    %v1822 = vadd.f32 0.0, %v1821
    %v1823 = vpop.f32.mrb[0].mxu0
    %v1824 = vadd.f32 0.0, %v1823
    %1825 = vmatprep.mubr.f32.mxu0 0.0
    %1826 = vmatmul.mubr.f32.gmra.mrb[0].mxu0 %v1738
    %v1827 = vpop.f32.mrb[0].mxu0
    %v1828 = vadd.f32 0.0, %v1827
    %v1829 = vpop.f32.mrb[0].mxu0
    %v1830 = vadd.f32 0.0, %v1829
    %1831 = vmatprep.mubr.f32.mxu0 0.0
    %1832 = vmatmul.mubr.f32.gmra.mrb[0].mxu0 %v1741
    %v1833 = vpop.f32.mrb[0].mxu0
    %v1834 = vadd.f32 0.0, %v1833
    %v1835 = vpop.f32.mrb[0].mxu0
    %v1836 = vadd.f32 0.0, %v1835
    %1837 = vdwg.mxu0
    %v1838 = vadd.f32 %v1696, %v1816
    %v1839 = vadd.f32 %v1697, %v1818
    %v1840 = vadd.f32 %v1698, %v1822
    %v1841 = vadd.f32 %v1699, %v1824
    %v1842 = vadd.f32 %v1700, %v1828
    %v1843 = vadd.f32 %v1701, %v1830
    %v1844 = vadd.f32 %v1702, %v1834
    %v1845 = vadd.f32 %v1703, %v1836
    %v1846 = vld [vmem:[%s6] sm:$0x3]
    %v1848 = vlaneseq
    %v1849 = vshrl.u32 %v1848, 7
    %v1850 = vsub.s32 0, %v1849
    %v1851 = vrot.slane %v1846, %v1850
    %v1852 = vlaneseq
    %v1853 = vshrl.u32 %v1852, 7
    %v1854 = vsub.s32 1, %v1853
    %v1855 = vrot.slane %v1846, %v1854
    %v1858 = vadd.f32 %v1838, %v1851
    %v1859 = vadd.f32 %v1839, %v1855
    %v1860 = vadd.f32 %v1840, %v1851
    %v1861 = vadd.f32 %v1841, %v1855
    %v1862 = vadd.f32 %v1842, %v1851
    %v1863 = vadd.f32 %v1843, %v1855
    %v1864 = vadd.f32 %v1844, %v1851
    %v1865 = vadd.f32 %v1845, %v1855
    %v1866 = vmax.f32 %v1858, 0.0
    %v1867 = vmax.f32 %v1859, 0.0
    %v1868 = vmax.f32 %v1860, 0.0
    %v1869 = vmax.f32 %v1861, 0.0
    %v1870 = vmax.f32 %v1862, 0.0
    %v1871 = vmax.f32 %v1863, 0.0
    %v1872 = vmax.f32 %v1864, 0.0
    %v1873 = vmax.f32 %v1865, 0.0
    %v1874 = vld [vmem:[%s7] sm:$0xff]
    %v1875 = vld [vmem:[%s7 + $0x8] sm:$0xff]
    %vm1876 = vcmask 228352
    %v1878 = vsel %vm1876, %v1874, 0
    %v1881 = vsel %vm1876, %v1875, 0
    %v1884 = vsel %vm933, %v1872, 0
    %v1887 = vsel %vm933, %v1873, 0
    %1889 = vmatprep.subr.mxu0 %v1867
    %1890 = vmatpush1.msra.mxu0 %v1866
    %1891 = vmatprep.subr.mxu0 %v1869
    %1892 = vmatpush1.msra.mxu0 %v1868
    %1893 = vmatprep.subr.mxu0 %v1871
    %1894 = vmatpush1.msra.mxu0 %v1870
    %1895 = vmatprep.subr.mxu0 %v1887
    %1896 = vmatpush1.msra.mxu0 %v1884
    %1897 = vmatprep.subr.mxu0 0.0
    %1898 = vmatpush1.msra.mxu0 0.0
    %1899 = vmatprep.subr.mxu0 0.0
    %1900 = vmatpush1.msra.mxu0 0.0
    %1901 = vmatprep.subr.mxu0 0.0
    %1902 = vmatpush1.msra.mxu0 0.0
    %1903 = vmatprep.subr.mxu0 0.0
    %1904 = vmatpush1.msra.mxu0 0.0
    %1905 = vmatprep.subr.mxu0 0.0
    %1906 = vmatpush1.msra.mxu0 0.0
    %1907 = vmatprep.subr.mxu0 0.0
    %1908 = vmatpush1.msra.mxu0 0.0
    %1909 = vmatprep.subr.mxu0 0.0
    %1910 = vmatpush1.msra.mxu0 0.0
    %1911 = vmatprep.subr.mxu0 0.0
    %1912 = vmatpush1.msra.mxu0 0.0
    %1913 = vmatprep.subr.mxu0 0.0
    %1914 = vmatpush1.msra.mxu0 0.0
    %1915 = vmatprep.subr.mxu0 0.0
    %1916 = vmatpush1.msra.mxu0 0.0
    %1917 = vmatprep.subr.mxu0 0.0
    %1918 = vmatpush1.msra.mxu0 0.0
    %1919 = vmatprep.subr.mxu0 0.0
    %1920 = vmatpush1.msra.mxu0 0.0
    %1921 = vmatprep.subr.mxu0 0.0
    %1922 = vmatpush1.msra.mxu0 0.0
    %1923 = vmatprep.subr.mxu0 0.0
    %1924 = vmatpush1.msra.mxu0 0.0
    %1925 = vmatprep.subr.mxu0 0.0
    %1926 = vmatpush1.msra.mxu0 0.0
    %1927 = vmatprep.subr.mxu0 0.0
    %1928 = vmatpush1.msra.mxu0 0.0
    %1929 = vmatprep.subr.mxu0 0.0
    %1930 = vmatpush1.msra.mxu0 0.0
    %1931 = vmatprep.subr.mxu0 0.0
    %1932 = vmatpush1.msra.mxu0 0.0
    %1933 = vmatprep.subr.mxu0 0.0
    %1934 = vmatpush1.msra.mxu0 0.0
    %1935 = vmatprep.subr.mxu0 0.0
    %1936 = vmatpush1.msra.mxu0 0.0
    %1937 = vmatprep.subr.mxu0 0.0
    %1938 = vmatpush1.msra.mxu0 0.0
    %1939 = vmatprep.subr.mxu0 0.0
    %1940 = vmatpush1.msra.mxu0 0.0
    %1941 = vmatprep.subr.mxu0 0.0
    %1942 = vmatpush1.msra.mxu0 0.0
    %1943 = vmatprep.subr.mxu0 0.0
    %1944 = vmatpush1.msra.mxu0 0.0
    %1945 = vmatprep.subr.mxu0 0.0
    %1946 = vmatpush1.msra.mxu0 0.0
    %1947 = vmatprep.subr.mxu0 0.0
    %1948 = vmatpush1.msra.mxu0 0.0
    %1949 = vmatprep.subr.mxu0 0.0
    %1950 = vmatpush1.msra.mxu0 0.0
    %1951 = vmatprep.subr.mxu0 0.0
    %1952 = vmatpush1.msra.mxu0 0.0
    %1953 = vmatprep.mubr.f32.mxu0 0.0
    %1954 = vmatmul.mubr.f32.gmra.mrb[0].mxu0 %v1878
    %v1955 = vpop.f32.mrb[0].mxu0
    %v1956 = vadd.f32 0.0, %v1955
    %v1957 = vpop.f32.mrb[0].mxu0
    %v1958 = vadd.f32 0.0, %v1957
    %1959 = vmatprep.mubr.f32.mxu0 0.0
    %1960 = vmatmul.mubr.f32.gmra.mrb[0].mxu0 %v1881
    %v1961 = vpop.f32.mrb[0].mxu0
    %v1962 = vadd.f32 0.0, %v1961
    %v1963 = vpop.f32.mrb[0].mxu0
    %v1964 = vadd.f32 0.0, %v1963
    %1965 = vdwg.mxu0
    %v1966 = vld [vmem:[%s8] sm:$0xff]
    %v1967 = vld [vmem:[%s8 + $0x8] sm:$0xff]
    %v1968 = vld [vmem:[%s8 + $0x10] sm:$0xff]
    %v1969 = vld [vmem:[%s8 + $0x18] sm:$0xff]
    %v1970 = vld [vmem:[%s8 + $0x20] sm:$0xff]
    %v1971 = vld [vmem:[%s8 + $0x28] sm:$0xff]
    %v1972 = vld [vmem:[%s8 + $0x30] sm:$0xff]
    %v1973 = vld [vmem:[%s8 + $0x38] sm:$0xff]
    %v1974 = vld [vmem:[%s8 + $0x40] sm:$0xff]
    %v1975 = vld [vmem:[%s8 + $0x48] sm:$0xff]
    %v1976 = vld [vmem:[%s8 + $0x50] sm:$0xff]
    %v1977 = vld [vmem:[%s8 + $0x58] sm:$0xff]
    %v1978 = vld [vmem:[%s8 + $0x60] sm:$0xff]
    %v1979 = vld [vmem:[%s8 + $0x68] sm:$0xff]
    %v1980 = vld [vmem:[%s8 + $0x70] sm:$0xff]
    %v1981 = vld [vmem:[%s8 + $0x78] sm:$0xff]
    %v1982 = vld [vmem:[%s8 + $0x80] sm:$0xff]
    %v1983 = vld [vmem:[%s8 + $0x88] sm:$0xff]
    %v1984 = vld [vmem:[%s8 + $0x90] sm:$0xff]
    %v1985 = vld [vmem:[%s8 + $0x98] sm:$0xff]
    %v1987 = vsel %vm87, %v1958, 0
    %v1990 = vsel %vm87, %v1964, 0
    %1992 = vmatprep.subr.mxu0 0.0
    %1993 = vmatpush1.msra.mxu0 %v1966
    %1994 = vmatprep.subr.mxu0 0.0
    %1995 = vmatpush1.msra.mxu0 %v1967
    %1996 = vmatprep.subr.mxu0 0.0
    %1997 = vmatpush1.msra.mxu0 %v1968
    %1998 = vmatprep.subr.mxu0 0.0
    %1999 = vmatpush1.msra.mxu0 %v1969
    %2000 = vmatprep.subr.mxu0 0.0
    %2001 = vmatpush1.msra.mxu0 %v1970
    %2002 = vmatprep.subr.mxu0 0.0
    %2003 = vmatpush1.msra.mxu0 %v1971
    %2004 = vmatprep.subr.mxu0 0.0
    %2005 = vmatpush1.msra.mxu0 %v1972
    %2006 = vmatprep.subr.mxu0 0.0
    %2007 = vmatpush1.msra.mxu0 %v1973
    %2008 = vmatprep.subr.mxu0 0.0
    %2009 = vmatpush1.msra.mxu0 %v1974
    %2010 = vmatprep.subr.mxu0 0.0
    %2011 = vmatpush1.msra.mxu0 %v1975
    %2012 = vmatprep.subr.mxu0 0.0
    %2013 = vmatpush1.msra.mxu0 %v1976
    %2014 = vmatprep.subr.mxu0 0.0
    %2015 = vmatpush1.msra.mxu0 %v1977
    %2016 = vmatprep.subr.mxu0 0.0
    %2017 = vmatpush1.msra.mxu0 %v1978
    %2018 = vmatprep.subr.mxu0 0.0
    %2019 = vmatpush1.msra.mxu0 %v1979
    %2020 = vmatprep.subr.mxu0 0.0
    %2021 = vmatpush1.msra.mxu0 %v1980
    %2022 = vmatprep.subr.mxu0 0.0
    %2023 = vmatpush1.msra.mxu0 %v1981
    %2024 = vmatprep.subr.mxu0 0.0
    %2025 = vmatpush1.msra.mxu0 %v1982
    %2026 = vmatprep.subr.mxu0 0.0
    %2027 = vmatpush1.msra.mxu0 %v1983
    %2028 = vmatprep.subr.mxu0 0.0
    %2029 = vmatpush1.msra.mxu0 %v1984
    %2030 = vmatprep.subr.mxu0 0.0
    %2031 = vmatpush1.msra.mxu0 %v1985
    %2032 = vmatprep.subr.mxu0 0.0
    %2033 = vmatpush1.msra.mxu0 0.0
    %2034 = vmatprep.subr.mxu0 0.0
    %2035 = vmatpush1.msra.mxu0 0.0
    %2036 = vmatprep.subr.mxu0 0.0
    %2037 = vmatpush1.msra.mxu0 0.0
    %2038 = vmatprep.subr.mxu0 0.0
    %2039 = vmatpush1.msra.mxu0 0.0
    %2040 = vmatprep.subr.mxu0 0.0
    %2041 = vmatpush1.msra.mxu0 0.0
    %2042 = vmatprep.subr.mxu0 0.0
    %2043 = vmatpush1.msra.mxu0 0.0
    %2044 = vmatprep.subr.mxu0 0.0
    %2045 = vmatpush1.msra.mxu0 0.0
    %2046 = vmatprep.subr.mxu0 0.0
    %2047 = vmatpush1.msra.mxu0 0.0
    %2048 = vmatprep.subr.mxu0 0.0
    %2049 = vmatpush1.msra.mxu0 0.0
    %2050 = vmatprep.subr.mxu0 0.0
    %2051 = vmatpush1.msra.mxu0 0.0
    %2052 = vmatprep.subr.mxu0 0.0
    %2053 = vmatpush1.msra.mxu0 0.0
    %2054 = vmatprep.subr.mxu0 0.0
    %2055 = vmatpush1.msra.mxu0 0.0
    %2056 = vmatprep.mubr.f32.mxu0 %v1987
    %2057 = vmatmul.mubr.f32.gmra.mrb[0].mxu0 %v1956
    %v2058 = vpop.f32.mrb[0].mxu0
    %v2059 = vadd.f32 0.0, %v2058
    %v2060 = vpop.f32.mrb[0].mxu0
    %2061 = vmatprep.mubr.f32.mxu0 %v1990
    %2062 = vmatmul.mubr.f32.gmra.mrb[0].mxu0 %v1962
    %v2063 = vpop.f32.mrb[0].mxu0
    %v2064 = vadd.f32 0.0, %v2063
    %v2065 = vpop.f32.mrb[0].mxu0
    %2066 = vdwg.mxu0
    %vm2067 = vcmask 654336
    %2068 = vst.msk [vmem:[#allocation3] sm:$0xff] %vm2067, %v2059
    %2069 = vst.msk [vmem:[#allocation3 + $0x8] sm:$0xff] %vm2067, %v2064
    %v2070 = vld [vmem:[#allocation3] sm:$0xff]
    %v2071 = vld [vmem:[#allocation3 + $0x8] sm:$0xf]
    %v2072 = vld [vmem:[%s9] sm:$0xff]
    %v2073 = vld [vmem:[%s9 + $0x8] sm:$0xff]
    %v2074 = vld [vmem:[%s9 + $0x10] sm:$0xff]
    %v2075 = vld [vmem:[%s9 + $0x18] sm:$0xff]
    %v2076 = vld [vmem:[%s9 + $0x20] sm:$0xff]
    %v2077 = vld [vmem:[%s9 + $0x28] sm:$0xff]
    %v2078 = vld [vmem:[%s9 + $0x30] sm:$0xff]
    %v2079 = vld [vmem:[%s9 + $0x38] sm:$0xff]
    %v2080 = vld [vmem:[%s9 + $0x40] sm:$0xff]
    %v2081 = vld [vmem:[%s9 + $0x48] sm:$0xff]
    %v2082 = vld [vmem:[#allocation3 + $0x1] sm:$0xff]
    %v2083 = vld [vmem:[#allocation3 + $0x9] sm:$0xf]
    %s2084 = scalar_lea.vmem %s9, 80
    %v2085 = vld [vmem:[%s2084] sm:$0xff]
    %v2086 = vld [vmem:[%s2084 + $0x8] sm:$0xff]
    %v2087 = vld [vmem:[%s2084 + $0x10] sm:$0xff]
    %v2088 = vld [vmem:[%s2084 + $0x18] sm:$0xff]
    %v2089 = vld [vmem:[%s2084 + $0x20] sm:$0xff]
    %v2090 = vld [vmem:[%s2084 + $0x28] sm:$0xff]
    %v2091 = vld [vmem:[%s2084 + $0x30] sm:$0xff]
    %v2092 = vld [vmem:[%s2084 + $0x38] sm:$0xff]
    %v2093 = vld [vmem:[%s2084 + $0x40] sm:$0xff]
    %v2094 = vld [vmem:[%s2084 + $0x48] sm:$0xff]
    %v2096 = vsel %vm2067, %v2082, 0
    %v2099 = vsel %vm2067, %v2083, 0
    %2101 = vmatprep.subr.mxu0 0.0
    %2102 = vmatpush1.msra.mxu0 %v2085
    %2103 = vmatprep.subr.mxu0 0.0
    %2104 = vmatpush1.msra.mxu0 %v2086
    %2105 = vmatprep.subr.mxu0 0.0
    %2106 = vmatpush1.msra.mxu0 %v2087
    %2107 = vmatprep.subr.mxu0 0.0
    %2108 = vmatpush1.msra.mxu0 %v2088
    %2109 = vmatprep.subr.mxu0 0.0
    %2110 = vmatpush1.msra.mxu0 %v2089
    %2111 = vmatprep.subr.mxu0 0.0
    %2112 = vmatpush1.msra.mxu0 %v2090
    %2113 = vmatprep.subr.mxu0 0.0
    %2114 = vmatpush1.msra.mxu0 %v2091
    %2115 = vmatprep.subr.mxu0 0.0
    %2116 = vmatpush1.msra.mxu0 %v2092
    %2117 = vmatprep.subr.mxu0 0.0
    %2118 = vmatpush1.msra.mxu0 %v2093
    %2119 = vmatprep.subr.mxu0 0.0
    %2120 = vmatpush1.msra.mxu0 %v2094
    %2121 = vmatprep.subr.mxu0 0.0
    %2122 = vmatpush1.msra.mxu0 0.0
    %2123 = vmatprep.subr.mxu0 0.0
    %2124 = vmatpush1.msra.mxu0 0.0
    %2125 = vmatprep.subr.mxu0 0.0
    %2126 = vmatpush1.msra.mxu0 0.0
    %2127 = vmatprep.subr.mxu0 0.0
    %2128 = vmatpush1.msra.mxu0 0.0
    %2129 = vmatprep.subr.mxu0 0.0
    %2130 = vmatpush1.msra.mxu0 0.0
    %2131 = vmatprep.subr.mxu0 0.0
    %2132 = vmatpush1.msra.mxu0 0.0
    %2133 = vmatprep.subr.mxu0 0.0
    %2134 = vmatpush1.msra.mxu0 0.0
    %2135 = vmatprep.subr.mxu0 0.0
    %2136 = vmatpush1.msra.mxu0 0.0
    %2137 = vmatprep.subr.mxu0 0.0
    %2138 = vmatpush1.msra.mxu0 0.0
    %2139 = vmatprep.subr.mxu0 0.0
    %2140 = vmatpush1.msra.mxu0 0.0
    %2141 = vmatprep.subr.mxu0 0.0
    %2142 = vmatpush1.msra.mxu0 0.0
    %2143 = vmatprep.subr.mxu0 0.0
    %2144 = vmatpush1.msra.mxu0 0.0
    %2145 = vmatprep.subr.mxu0 0.0
    %2146 = vmatpush1.msra.mxu0 0.0
    %2147 = vmatprep.subr.mxu0 0.0
    %2148 = vmatpush1.msra.mxu0 0.0
    %2149 = vmatprep.subr.mxu0 0.0
    %2150 = vmatpush1.msra.mxu0 0.0
    %2151 = vmatprep.subr.mxu0 0.0
    %2152 = vmatpush1.msra.mxu0 0.0
    %2153 = vmatprep.subr.mxu0 0.0
    %2154 = vmatpush1.msra.mxu0 0.0
    %2155 = vmatprep.subr.mxu0 0.0
    %2156 = vmatpush1.msra.mxu0 0.0
    %2157 = vmatprep.subr.mxu0 0.0
    %2158 = vmatpush1.msra.mxu0 0.0
    %2159 = vmatprep.subr.mxu0 0.0
    %2160 = vmatpush1.msra.mxu0 0.0
    %2161 = vmatprep.subr.mxu0 0.0
    %2162 = vmatpush1.msra.mxu0 0.0
    %2163 = vmatprep.subr.mxu0 0.0
    %2164 = vmatpush1.msra.mxu0 0.0
    %2165 = vmatprep.mubr.f32.mxu0 0.0
    %2166 = vmatmul.mubr.f32.gmra.mrb[0].mxu0 %v2096
    %v2167 = vpop.f32.mrb[0].mxu0
    %v2168 = vadd.f32 0.0, %v2167
    %v2169 = vpop.f32.mrb[0].mxu0
    %2170 = vmatprep.mubr.f32.mxu0 0.0
    %2171 = vmatmul.mubr.f32.gmra.mrb[0].mxu0 %v2099
    %v2172 = vpop.f32.mrb[0].mxu0
    %v2173 = vadd.f32 0.0, %v2172
    %v2174 = vpop.f32.mrb[0].mxu0
    %2175 = vdwg.mxu0
    %v2177 = vsel %vm2067, %v2070, 0
    %v2180 = vsel %vm2067, %v2071, 0
    %2182 = vmatprep.subr.mxu0 0.0
    %2183 = vmatpush1.msra.mxu0 %v2072
    %2184 = vmatprep.subr.mxu0 0.0
    %2185 = vmatpush1.msra.mxu0 %v2073
    %2186 = vmatprep.subr.mxu0 0.0
    %2187 = vmatpush1.msra.mxu0 %v2074
    %2188 = vmatprep.subr.mxu0 0.0
    %2189 = vmatpush1.msra.mxu0 %v2075
    %2190 = vmatprep.subr.mxu0 0.0
    %2191 = vmatpush1.msra.mxu0 %v2076
    %2192 = vmatprep.subr.mxu0 0.0
    %2193 = vmatpush1.msra.mxu0 %v2077
    %2194 = vmatprep.subr.mxu0 0.0
    %2195 = vmatpush1.msra.mxu0 %v2078
    %2196 = vmatprep.subr.mxu0 0.0
    %2197 = vmatpush1.msra.mxu0 %v2079
    %2198 = vmatprep.subr.mxu0 0.0
    %2199 = vmatpush1.msra.mxu0 %v2080
    %2200 = vmatprep.subr.mxu0 0.0
    %2201 = vmatpush1.msra.mxu0 %v2081
    %2202 = vmatprep.subr.mxu0 0.0
    %2203 = vmatpush1.msra.mxu0 0.0
    %2204 = vmatprep.subr.mxu0 0.0
    %2205 = vmatpush1.msra.mxu0 0.0
    %2206 = vmatprep.subr.mxu0 0.0
    %2207 = vmatpush1.msra.mxu0 0.0
    %2208 = vmatprep.subr.mxu0 0.0
    %2209 = vmatpush1.msra.mxu0 0.0
    %2210 = vmatprep.subr.mxu0 0.0
    %2211 = vmatpush1.msra.mxu0 0.0
    %2212 = vmatprep.subr.mxu0 0.0
    %2213 = vmatpush1.msra.mxu0 0.0
    %2214 = vmatprep.subr.mxu0 0.0
    %2215 = vmatpush1.msra.mxu0 0.0
    %2216 = vmatprep.subr.mxu0 0.0
    %2217 = vmatpush1.msra.mxu0 0.0
    %2218 = vmatprep.subr.mxu0 0.0
    %2219 = vmatpush1.msra.mxu0 0.0
    %2220 = vmatprep.subr.mxu0 0.0
    %2221 = vmatpush1.msra.mxu0 0.0
    %2222 = vmatprep.subr.mxu0 0.0
    %2223 = vmatpush1.msra.mxu0 0.0
    %2224 = vmatprep.subr.mxu0 0.0
    %2225 = vmatpush1.msra.mxu0 0.0
    %2226 = vmatprep.subr.mxu0 0.0
    %2227 = vmatpush1.msra.mxu0 0.0
    %2228 = vmatprep.subr.mxu0 0.0
    %2229 = vmatpush1.msra.mxu0 0.0
    %2230 = vmatprep.subr.mxu0 0.0
    %2231 = vmatpush1.msra.mxu0 0.0
    %2232 = vmatprep.subr.mxu0 0.0
    %2233 = vmatpush1.msra.mxu0 0.0
    %2234 = vmatprep.subr.mxu0 0.0
    %2235 = vmatpush1.msra.mxu0 0.0
    %2236 = vmatprep.subr.mxu0 0.0
    %2237 = vmatpush1.msra.mxu0 0.0
    %2238 = vmatprep.subr.mxu0 0.0
    %2239 = vmatpush1.msra.mxu0 0.0
    %2240 = vmatprep.subr.mxu0 0.0
    %2241 = vmatpush1.msra.mxu0 0.0
    %2242 = vmatprep.subr.mxu0 0.0
    %2243 = vmatpush1.msra.mxu0 0.0
    %2244 = vmatprep.subr.mxu0 0.0
    %2245 = vmatpush1.msra.mxu0 0.0
    %2246 = vmatprep.mubr.f32.mxu0 0.0
    %2247 = vmatmul.mubr.f32.gmra.mrb[0].mxu0 %v2177
    %v2248 = vpop.f32.mrb[0].mxu0
    %v2249 = vadd.f32 %v2168, %v2248
    %v2250 = vpop.f32.mrb[0].mxu0
    %2251 = vmatprep.mubr.f32.mxu0 0.0
    %2252 = vmatmul.mubr.f32.gmra.mrb[0].mxu0 %v2180
    %v2253 = vpop.f32.mrb[0].mxu0
    %v2254 = vadd.f32 %v2173, %v2253
    %v2255 = vpop.f32.mrb[0].mxu0
    %2256 = vdwg.mxu0
    %v2257 = vld [vmem:[#allocation3 + $0x2] sm:$0xff]
    %v2258 = vld [vmem:[#allocation3 + $0xa] sm:$0xf]
    %s2259 = scalar_lea.vmem %s9, 160
    %v2260 = vld [vmem:[%s2259] sm:$0xff]
    %v2261 = vld [vmem:[%s2259 + $0x8] sm:$0xff]
    %v2262 = vld [vmem:[%s2259 + $0x10] sm:$0xff]
    %v2263 = vld [vmem:[%s2259 + $0x18] sm:$0xff]
    %v2264 = vld [vmem:[%s2259 + $0x20] sm:$0xff]
    %v2265 = vld [vmem:[%s2259 + $0x28] sm:$0xff]
    %v2266 = vld [vmem:[%s2259 + $0x30] sm:$0xff]
    %v2267 = vld [vmem:[%s2259 + $0x38] sm:$0xff]
    %v2268 = vld [vmem:[%s2259 + $0x40] sm:$0xff]
    %v2269 = vld [vmem:[%s2259 + $0x48] sm:$0xff]
    %v2271 = vsel %vm2067, %v2257, 0
    %v2274 = vsel %vm2067, %v2258, 0
    %2276 = vmatprep.subr.mxu0 0.0
    %2277 = vmatpush1.msra.mxu0 %v2260
    %2278 = vmatprep.subr.mxu0 0.0
    %2279 = vmatpush1.msra.mxu0 %v2261
    %2280 = vmatprep.subr.mxu0 0.0
    %2281 = vmatpush1.msra.mxu0 %v2262
    %2282 = vmatprep.subr.mxu0 0.0
    %2283 = vmatpush1.msra.mxu0 %v2263
    %2284 = vmatprep.subr.mxu0 0.0
    %2285 = vmatpush1.msra.mxu0 %v2264
    %2286 = vmatprep.subr.mxu0 0.0
    %2287 = vmatpush1.msra.mxu0 %v2265
    %2288 = vmatprep.subr.mxu0 0.0
    %2289 = vmatpush1.msra.mxu0 %v2266
    %2290 = vmatprep.subr.mxu0 0.0
    %2291 = vmatpush1.msra.mxu0 %v2267
    %2292 = vmatprep.subr.mxu0 0.0
    %2293 = vmatpush1.msra.mxu0 %v2268
    %2294 = vmatprep.subr.mxu0 0.0
    %2295 = vmatpush1.msra.mxu0 %v2269
    %2296 = vmatprep.subr.mxu0 0.0
    %2297 = vmatpush1.msra.mxu0 0.0
    %2298 = vmatprep.subr.mxu0 0.0
    %2299 = vmatpush1.msra.mxu0 0.0
    %2300 = vmatprep.subr.mxu0 0.0
    %2301 = vmatpush1.msra.mxu0 0.0
    %2302 = vmatprep.subr.mxu0 0.0
    %2303 = vmatpush1.msra.mxu0 0.0
    %2304 = vmatprep.subr.mxu0 0.0
    %2305 = vmatpush1.msra.mxu0 0.0
    %2306 = vmatprep.subr.mxu0 0.0
    %2307 = vmatpush1.msra.mxu0 0.0
    %2308 = vmatprep.subr.mxu0 0.0
    %2309 = vmatpush1.msra.mxu0 0.0
    %2310 = vmatprep.subr.mxu0 0.0
    %2311 = vmatpush1.msra.mxu0 0.0
    %2312 = vmatprep.subr.mxu0 0.0
    %2313 = vmatpush1.msra.mxu0 0.0
    %2314 = vmatprep.subr.mxu0 0.0
    %2315 = vmatpush1.msra.mxu0 0.0
    %2316 = vmatprep.subr.mxu0 0.0
    %2317 = vmatpush1.msra.mxu0 0.0
    %2318 = vmatprep.subr.mxu0 0.0
    %2319 = vmatpush1.msra.mxu0 0.0
    %2320 = vmatprep.subr.mxu0 0.0
    %2321 = vmatpush1.msra.mxu0 0.0
    %2322 = vmatprep.subr.mxu0 0.0
    %2323 = vmatpush1.msra.mxu0 0.0
    %2324 = vmatprep.subr.mxu0 0.0
    %2325 = vmatpush1.msra.mxu0 0.0
    %2326 = vmatprep.subr.mxu0 0.0
    %2327 = vmatpush1.msra.mxu0 0.0
    %2328 = vmatprep.subr.mxu0 0.0
    %2329 = vmatpush1.msra.mxu0 0.0
    %2330 = vmatprep.subr.mxu0 0.0
    %2331 = vmatpush1.msra.mxu0 0.0
    %2332 = vmatprep.subr.mxu0 0.0
    %2333 = vmatpush1.msra.mxu0 0.0
    %2334 = vmatprep.subr.mxu0 0.0
    %2335 = vmatpush1.msra.mxu0 0.0
    %2336 = vmatprep.subr.mxu0 0.0
    %2337 = vmatpush1.msra.mxu0 0.0
    %2338 = vmatprep.subr.mxu0 0.0
    %2339 = vmatpush1.msra.mxu0 0.0
    %2340 = vmatprep.mubr.f32.mxu0 0.0
    %2341 = vmatmul.mubr.f32.gmra.mrb[0].mxu0 %v2271
    %v2342 = vpop.f32.mrb[0].mxu0
    %v2343 = vadd.f32 0.0, %v2342
    %v2344 = vpop.f32.mrb[0].mxu0
    %2345 = vmatprep.mubr.f32.mxu0 0.0
    %2346 = vmatmul.mubr.f32.gmra.mrb[0].mxu0 %v2274
    %v2347 = vpop.f32.mrb[0].mxu0
    %v2348 = vadd.f32 0.0, %v2347
    %v2349 = vpop.f32.mrb[0].mxu0
    %2350 = vdwg.mxu0
    %v2351 = vadd.f32 %v2249, %v2343
    %v2352 = vadd.f32 %v2254, %v2348
    %v2353 = vld [vmem:[#allocation3 + $0x3] sm:$0xff]
    %v2354 = vld [vmem:[#allocation3 + $0xb] sm:$0xf]
    %s2355 = scalar_lea.vmem %s9, 240
    %v2356 = vld [vmem:[%s2355] sm:$0xff]
    %v2357 = vld [vmem:[%s2355 + $0x8] sm:$0xff]
    %v2358 = vld [vmem:[%s2355 + $0x10] sm:$0xff]
    %v2359 = vld [vmem:[%s2355 + $0x18] sm:$0xff]
    %v2360 = vld [vmem:[%s2355 + $0x20] sm:$0xff]
    %v2361 = vld [vmem:[%s2355 + $0x28] sm:$0xff]
    %v2362 = vld [vmem:[%s2355 + $0x30] sm:$0xff]
    %v2363 = vld [vmem:[%s2355 + $0x38] sm:$0xff]
    %v2364 = vld [vmem:[%s2355 + $0x40] sm:$0xff]
    %v2365 = vld [vmem:[%s2355 + $0x48] sm:$0xff]
    %v2367 = vsel %vm2067, %v2353, 0
    %v2370 = vsel %vm2067, %v2354, 0
    %2372 = vmatprep.subr.mxu0 0.0
    %2373 = vmatpush1.msra.mxu0 %v2356
    %2374 = vmatprep.subr.mxu0 0.0
    %2375 = vmatpush1.msra.mxu0 %v2357
    %2376 = vmatprep.subr.mxu0 0.0
    %2377 = vmatpush1.msra.mxu0 %v2358
    %2378 = vmatprep.subr.mxu0 0.0
    %2379 = vmatpush1.msra.mxu0 %v2359
    %2380 = vmatprep.subr.mxu0 0.0
    %2381 = vmatpush1.msra.mxu0 %v2360
    %2382 = vmatprep.subr.mxu0 0.0
    %2383 = vmatpush1.msra.mxu0 %v2361
    %2384 = vmatprep.subr.mxu0 0.0
    %2385 = vmatpush1.msra.mxu0 %v2362
    %2386 = vmatprep.subr.mxu0 0.0
    %2387 = vmatpush1.msra.mxu0 %v2363
    %2388 = vmatprep.subr.mxu0 0.0
    %2389 = vmatpush1.msra.mxu0 %v2364
    %2390 = vmatprep.subr.mxu0 0.0
    %2391 = vmatpush1.msra.mxu0 %v2365
    %2392 = vmatprep.subr.mxu0 0.0
    %2393 = vmatpush1.msra.mxu0 0.0
    %2394 = vmatprep.subr.mxu0 0.0
    %2395 = vmatpush1.msra.mxu0 0.0
    %2396 = vmatprep.subr.mxu0 0.0
    %2397 = vmatpush1.msra.mxu0 0.0
    %2398 = vmatprep.subr.mxu0 0.0
    %2399 = vmatpush1.msra.mxu0 0.0
    %2400 = vmatprep.subr.mxu0 0.0
    %2401 = vmatpush1.msra.mxu0 0.0
    %2402 = vmatprep.subr.mxu0 0.0
    %2403 = vmatpush1.msra.mxu0 0.0
    %2404 = vmatprep.subr.mxu0 0.0
    %2405 = vmatpush1.msra.mxu0 0.0
    %2406 = vmatprep.subr.mxu0 0.0
    %2407 = vmatpush1.msra.mxu0 0.0
    %2408 = vmatprep.subr.mxu0 0.0
    %2409 = vmatpush1.msra.mxu0 0.0
    %2410 = vmatprep.subr.mxu0 0.0
    %2411 = vmatpush1.msra.mxu0 0.0
    %2412 = vmatprep.subr.mxu0 0.0
    %2413 = vmatpush1.msra.mxu0 0.0
    %2414 = vmatprep.subr.mxu0 0.0
    %2415 = vmatpush1.msra.mxu0 0.0
    %2416 = vmatprep.subr.mxu0 0.0
    %2417 = vmatpush1.msra.mxu0 0.0
    %2418 = vmatprep.subr.mxu0 0.0
    %2419 = vmatpush1.msra.mxu0 0.0
    %2420 = vmatprep.subr.mxu0 0.0
    %2421 = vmatpush1.msra.mxu0 0.0
    %2422 = vmatprep.subr.mxu0 0.0
    %2423 = vmatpush1.msra.mxu0 0.0
    %2424 = vmatprep.subr.mxu0 0.0
    %2425 = vmatpush1.msra.mxu0 0.0
    %2426 = vmatprep.subr.mxu0 0.0
    %2427 = vmatpush1.msra.mxu0 0.0
    %2428 = vmatprep.subr.mxu0 0.0
    %2429 = vmatpush1.msra.mxu0 0.0
    %2430 = vmatprep.subr.mxu0 0.0
    %2431 = vmatpush1.msra.mxu0 0.0
    %2432 = vmatprep.subr.mxu0 0.0
    %2433 = vmatpush1.msra.mxu0 0.0
    %2434 = vmatprep.subr.mxu0 0.0
    %2435 = vmatpush1.msra.mxu0 0.0
    %2436 = vmatprep.mubr.f32.mxu0 0.0
    %2437 = vmatmul.mubr.f32.gmra.mrb[0].mxu0 %v2367
    %v2438 = vpop.f32.mrb[0].mxu0
    %v2439 = vadd.f32 0.0, %v2438
    %v2440 = vpop.f32.mrb[0].mxu0
    %2441 = vmatprep.mubr.f32.mxu0 0.0
    %2442 = vmatmul.mubr.f32.gmra.mrb[0].mxu0 %v2370
    %v2443 = vpop.f32.mrb[0].mxu0
    %v2444 = vadd.f32 0.0, %v2443
    %v2445 = vpop.f32.mrb[0].mxu0
    %2446 = vdwg.mxu0
    %v2447 = vadd.f32 %v2351, %v2439
    %v2448 = vadd.f32 %v2352, %v2444
    %v2449 = vld [vmem:[#allocation3 + $0x4] sm:$0xff]
    %v2450 = vld [vmem:[#allocation3 + $0xc] sm:$0xf]
    %s2451 = scalar_lea.vmem %s9, 320
    %v2452 = vld [vmem:[%s2451] sm:$0xff]
    %v2453 = vld [vmem:[%s2451 + $0x8] sm:$0xff]
    %v2454 = vld [vmem:[%s2451 + $0x10] sm:$0xff]
    %v2455 = vld [vmem:[%s2451 + $0x18] sm:$0xff]
    %v2456 = vld [vmem:[%s2451 + $0x20] sm:$0xff]
    %v2457 = vld [vmem:[%s2451 + $0x28] sm:$0xff]
    %v2458 = vld [vmem:[%s2451 + $0x30] sm:$0xff]
    %v2459 = vld [vmem:[%s2451 + $0x38] sm:$0xff]
    %v2460 = vld [vmem:[%s2451 + $0x40] sm:$0xff]
    %v2461 = vld [vmem:[%s2451 + $0x48] sm:$0xff]
    %v2463 = vsel %vm2067, %v2449, 0
    %v2466 = vsel %vm2067, %v2450, 0
    %2468 = vmatprep.subr.mxu0 0.0
    %2469 = vmatpush1.msra.mxu0 %v2452
    %2470 = vmatprep.subr.mxu0 0.0
    %2471 = vmatpush1.msra.mxu0 %v2453
    %2472 = vmatprep.subr.mxu0 0.0
    %2473 = vmatpush1.msra.mxu0 %v2454
    %2474 = vmatprep.subr.mxu0 0.0
    %2475 = vmatpush1.msra.mxu0 %v2455
    %2476 = vmatprep.subr.mxu0 0.0
    %2477 = vmatpush1.msra.mxu0 %v2456
    %2478 = vmatprep.subr.mxu0 0.0
    %2479 = vmatpush1.msra.mxu0 %v2457
    %2480 = vmatprep.subr.mxu0 0.0
    %2481 = vmatpush1.msra.mxu0 %v2458
    %2482 = vmatprep.subr.mxu0 0.0
    %2483 = vmatpush1.msra.mxu0 %v2459
    %2484 = vmatprep.subr.mxu0 0.0
    %2485 = vmatpush1.msra.mxu0 %v2460
    %2486 = vmatprep.subr.mxu0 0.0
    %2487 = vmatpush1.msra.mxu0 %v2461
    %2488 = vmatprep.subr.mxu0 0.0
    %2489 = vmatpush1.msra.mxu0 0.0
    %2490 = vmatprep.subr.mxu0 0.0
    %2491 = vmatpush1.msra.mxu0 0.0
    %2492 = vmatprep.subr.mxu0 0.0
    %2493 = vmatpush1.msra.mxu0 0.0
    %2494 = vmatprep.subr.mxu0 0.0
    %2495 = vmatpush1.msra.mxu0 0.0
    %2496 = vmatprep.subr.mxu0 0.0
    %2497 = vmatpush1.msra.mxu0 0.0
    %2498 = vmatprep.subr.mxu0 0.0
    %2499 = vmatpush1.msra.mxu0 0.0
    %2500 = vmatprep.subr.mxu0 0.0
    %2501 = vmatpush1.msra.mxu0 0.0
    %2502 = vmatprep.subr.mxu0 0.0
    %2503 = vmatpush1.msra.mxu0 0.0
    %2504 = vmatprep.subr.mxu0 0.0
    %2505 = vmatpush1.msra.mxu0 0.0
    %2506 = vmatprep.subr.mxu0 0.0
    %2507 = vmatpush1.msra.mxu0 0.0
    %2508 = vmatprep.subr.mxu0 0.0
    %2509 = vmatpush1.msra.mxu0 0.0
    %2510 = vmatprep.subr.mxu0 0.0
    %2511 = vmatpush1.msra.mxu0 0.0
    %2512 = vmatprep.subr.mxu0 0.0
    %2513 = vmatpush1.msra.mxu0 0.0
    %2514 = vmatprep.subr.mxu0 0.0
    %2515 = vmatpush1.msra.mxu0 0.0
    %2516 = vmatprep.subr.mxu0 0.0
    %2517 = vmatpush1.msra.mxu0 0.0
    %2518 = vmatprep.subr.mxu0 0.0
    %2519 = vmatpush1.msra.mxu0 0.0
    %2520 = vmatprep.subr.mxu0 0.0
    %2521 = vmatpush1.msra.mxu0 0.0
    %2522 = vmatprep.subr.mxu0 0.0
    %2523 = vmatpush1.msra.mxu0 0.0
    %2524 = vmatprep.subr.mxu0 0.0
    %2525 = vmatpush1.msra.mxu0 0.0
    %2526 = vmatprep.subr.mxu0 0.0
    %2527 = vmatpush1.msra.mxu0 0.0
    %2528 = vmatprep.subr.mxu0 0.0
    %2529 = vmatpush1.msra.mxu0 0.0
    %2530 = vmatprep.subr.mxu0 0.0
    %2531 = vmatpush1.msra.mxu0 0.0
    %2532 = vmatprep.mubr.f32.mxu0 0.0
    %2533 = vmatmul.mubr.f32.gmra.mrb[0].mxu0 %v2463
    %v2534 = vpop.f32.mrb[0].mxu0
    %v2535 = vadd.f32 0.0, %v2534
    %v2536 = vpop.f32.mrb[0].mxu0
    %2537 = vmatprep.mubr.f32.mxu0 0.0
    %2538 = vmatmul.mubr.f32.gmra.mrb[0].mxu0 %v2466
    %v2539 = vpop.f32.mrb[0].mxu0
    %v2540 = vadd.f32 0.0, %v2539
    %v2541 = vpop.f32.mrb[0].mxu0
    %2542 = vdwg.mxu0
    %v2543 = vadd.f32 %v2447, %v2535
    %v2544 = vadd.f32 %v2448, %v2540
    %v2545 = vld [vmem:[%s10] sm:$0x1]
    %v2547 = vlaneseq
    %v2548 = vshrl.u32 %v2547, 7
    %v2549 = vsub.s32 0, %v2548
    %v2550 = vrot.slane %v2545, %v2549
    %v2552 = vadd.f32 %v2543, %v2550
    %v2553 = vadd.f32 %v2544, %v2550
    %v2554 = vmax.f32 %v2552, 0.0
    %v2555 = vmax.f32 %v2553, 0.0
    %v2556 = vld [vmem:[%s11] sm:$0x3]
    %vm2557 = vcmask 97280
    %v2559 = vsel %vm2557, %v2556, 0
    %v2562 = vsel %vm933, %v2555, 0
    %2564 = vmatprep.subr.mxu0 0.0
    %2565 = vmatpush1.msra.mxu0 %v2554
    %2566 = vmatprep.subr.mxu0 0.0
    %2567 = vmatpush1.msra.mxu0 %v2562
    %2568 = vmatprep.subr.mxu0 0.0
    %2569 = vmatpush1.msra.mxu0 0.0
    %2570 = vmatprep.subr.mxu0 0.0
    %2571 = vmatpush1.msra.mxu0 0.0
    %2572 = vmatprep.subr.mxu0 0.0
    %2573 = vmatpush1.msra.mxu0 0.0
    %2574 = vmatprep.subr.mxu0 0.0
    %2575 = vmatpush1.msra.mxu0 0.0
    %2576 = vmatprep.subr.mxu0 0.0
    %2577 = vmatpush1.msra.mxu0 0.0
    %2578 = vmatprep.subr.mxu0 0.0
    %2579 = vmatpush1.msra.mxu0 0.0
    %2580 = vmatprep.subr.mxu0 0.0
    %2581 = vmatpush1.msra.mxu0 0.0
    %2582 = vmatprep.subr.mxu0 0.0
    %2583 = vmatpush1.msra.mxu0 0.0
    %2584 = vmatprep.subr.mxu0 0.0
    %2585 = vmatpush1.msra.mxu0 0.0
    %2586 = vmatprep.subr.mxu0 0.0
    %2587 = vmatpush1.msra.mxu0 0.0
    %2588 = vmatprep.subr.mxu0 0.0
    %2589 = vmatpush1.msra.mxu0 0.0
    %2590 = vmatprep.subr.mxu0 0.0
    %2591 = vmatpush1.msra.mxu0 0.0
    %2592 = vmatprep.subr.mxu0 0.0
    %2593 = vmatpush1.msra.mxu0 0.0
    %2594 = vmatprep.subr.mxu0 0.0
    %2595 = vmatpush1.msra.mxu0 0.0
    %2596 = vmatprep.subr.mxu0 0.0
    %2597 = vmatpush1.msra.mxu0 0.0
    %2598 = vmatprep.subr.mxu0 0.0
    %2599 = vmatpush1.msra.mxu0 0.0
    %2600 = vmatprep.subr.mxu0 0.0
    %2601 = vmatpush1.msra.mxu0 0.0
    %2602 = vmatprep.subr.mxu0 0.0
    %2603 = vmatpush1.msra.mxu0 0.0
    %2604 = vmatprep.subr.mxu0 0.0
    %2605 = vmatpush1.msra.mxu0 0.0
    %2606 = vmatprep.subr.mxu0 0.0
    %2607 = vmatpush1.msra.mxu0 0.0
    %2608 = vmatprep.subr.mxu0 0.0
    %2609 = vmatpush1.msra.mxu0 0.0
    %2610 = vmatprep.subr.mxu0 0.0
    %2611 = vmatpush1.msra.mxu0 0.0
    %2612 = vmatprep.subr.mxu0 0.0
    %2613 = vmatpush1.msra.mxu0 0.0
    %2614 = vmatprep.subr.mxu0 0.0
    %2615 = vmatpush1.msra.mxu0 0.0
    %2616 = vmatprep.subr.mxu0 0.0
    %2617 = vmatpush1.msra.mxu0 0.0
    %2618 = vmatprep.subr.mxu0 0.0
    %2619 = vmatpush1.msra.mxu0 0.0
    %2620 = vmatprep.subr.mxu0 0.0
    %2621 = vmatpush1.msra.mxu0 0.0
    %2622 = vmatprep.subr.mxu0 0.0
    %2623 = vmatpush1.msra.mxu0 0.0
    %2624 = vmatprep.subr.mxu0 0.0
    %2625 = vmatpush1.msra.mxu0 0.0
    %2626 = vmatprep.subr.mxu0 0.0
    %2627 = vmatpush1.msra.mxu0 0.0
    %2628 = vmatprep.mubr.f32.mxu0 0.0
    %2629 = vmatmul.mubr.f32.gmra.mrb[0].mxu0 %v2559
    %v2630 = vpop.f32.mrb[0].mxu0
    %v2631 = vadd.f32 0.0, %v2630
    %v2632 = vpop.f32.mrb[0].mxu0
    %2633 = vdwg.mxu0
    %v2634 = vld [vmem:[%s12] sm:$0xff]
    %v2635 = vld [vmem:[%s12 + $0x8] sm:$0xff]
    %v2636 = vld [vmem:[%s12 + $0x10] sm:$0xff]
    %v2637 = vld [vmem:[%s12 + $0x18] sm:$0xff]
    %v2638 = vld [vmem:[%s12 + $0x20] sm:$0xff]
    %v2639 = vld [vmem:[%s12 + $0x28] sm:$0xff]
    %v2640 = vld [vmem:[%s12 + $0x30] sm:$0xff]
    %v2641 = vld [vmem:[%s12 + $0x38] sm:$0xff]
    %v2642 = vld [vmem:[%s12 + $0x40] sm:$0xff]
    %v2643 = vld [vmem:[%s12 + $0x48] sm:$0xff]
    %v2644 = vld [vmem:[%s12 + $0x50] sm:$0xff]
    %v2645 = vld [vmem:[%s12 + $0x58] sm:$0xff]
    %v2646 = vld [vmem:[%s12 + $0x60] sm:$0xff]
    %v2647 = vld [vmem:[%s12 + $0x68] sm:$0xff]
    %v2648 = vld [vmem:[%s12 + $0x70] sm:$0xff]
    %v2649 = vld [vmem:[%s13] sm:$0x1]
    %v2651 = vlaneseq
    %v2652 = vshrl.u32 %v2651, 7
    %v2653 = vsub.s32 0, %v2652
    %v2654 = vrot.slane %v2649, %v2653
    %vm2656 = vcmask 982016
    %v2658 = vsel %vm2656, %v2631, 0
    %2660 = vmatprep.subr.mxu0 0.0
    %2661 = vmatpush1.msra.mxu0 %v2634
    %2662 = vmatprep.subr.mxu0 0.0
    %2663 = vmatpush1.msra.mxu0 %v2635
    %2664 = vmatprep.subr.mxu0 0.0
    %2665 = vmatpush1.msra.mxu0 %v2636
    %2666 = vmatprep.subr.mxu0 0.0
    %2667 = vmatpush1.msra.mxu0 %v2637
    %2668 = vmatprep.subr.mxu0 0.0
    %2669 = vmatpush1.msra.mxu0 %v2638
    %2670 = vmatprep.subr.mxu0 0.0
    %2671 = vmatpush1.msra.mxu0 %v2639
    %2672 = vmatprep.subr.mxu0 0.0
    %2673 = vmatpush1.msra.mxu0 %v2640
    %2674 = vmatprep.subr.mxu0 0.0
    %2675 = vmatpush1.msra.mxu0 %v2641
    %2676 = vmatprep.subr.mxu0 0.0
    %2677 = vmatpush1.msra.mxu0 %v2642
    %2678 = vmatprep.subr.mxu0 0.0
    %2679 = vmatpush1.msra.mxu0 %v2643
    %2680 = vmatprep.subr.mxu0 0.0
    %2681 = vmatpush1.msra.mxu0 %v2644
    %2682 = vmatprep.subr.mxu0 0.0
    %2683 = vmatpush1.msra.mxu0 %v2645
    %2684 = vmatprep.subr.mxu0 0.0
    %2685 = vmatpush1.msra.mxu0 %v2646
    %2686 = vmatprep.subr.mxu0 0.0
    %2687 = vmatpush1.msra.mxu0 %v2647
    %2688 = vmatprep.subr.mxu0 0.0
    %2689 = vmatpush1.msra.mxu0 %v2648
    %2690 = vmatprep.subr.mxu0 0.0
    %2691 = vmatpush1.msra.mxu0 0.0
    %2692 = vmatprep.subr.mxu0 0.0
    %2693 = vmatpush1.msra.mxu0 0.0
    %2694 = vmatprep.subr.mxu0 0.0
    %2695 = vmatpush1.msra.mxu0 0.0
    %2696 = vmatprep.subr.mxu0 0.0
    %2697 = vmatpush1.msra.mxu0 0.0
    %2698 = vmatprep.subr.mxu0 0.0
    %2699 = vmatpush1.msra.mxu0 0.0
    %2700 = vmatprep.subr.mxu0 0.0
    %2701 = vmatpush1.msra.mxu0 0.0
    %2702 = vmatprep.subr.mxu0 0.0
    %2703 = vmatpush1.msra.mxu0 0.0
    %2704 = vmatprep.subr.mxu0 0.0
    %2705 = vmatpush1.msra.mxu0 0.0
    %2706 = vmatprep.subr.mxu0 0.0
    %2707 = vmatpush1.msra.mxu0 0.0
    %2708 = vmatprep.subr.mxu0 0.0
    %2709 = vmatpush1.msra.mxu0 0.0
    %2710 = vmatprep.subr.mxu0 0.0
    %2711 = vmatpush1.msra.mxu0 0.0
    %2712 = vmatprep.subr.mxu0 0.0
    %2713 = vmatpush1.msra.mxu0 0.0
    %2714 = vmatprep.subr.mxu0 0.0
    %2715 = vmatpush1.msra.mxu0 0.0
    %2716 = vmatprep.subr.mxu0 0.0
    %2717 = vmatpush1.msra.mxu0 0.0
    %2718 = vmatprep.subr.mxu0 0.0
    %2719 = vmatpush1.msra.mxu0 0.0
    %2720 = vmatprep.subr.mxu0 0.0
    %2721 = vmatpush1.msra.mxu0 0.0
    %2722 = vmatprep.subr.mxu0 0.0
    %2723 = vmatpush1.msra.mxu0 0.0
    %2724 = vmatprep.mubr.f32.mxu0 0.0
    %2725 = vmatmul.mubr.f32.gmra.mrb[0].mxu0 %v2658
    %v2726 = vpop.f32.mrb[0].mxu0
    %v2727 = vadd.f32 %v2654, %v2726
    %v2728 = vpop.f32.mrb[0].mxu0
    %2729 = vdwg.mxu0
    %v2730 = vmax.f32 %v2727, 0.0
    %v2731 = vld [vmem:[%s14] sm:$0xff]
    %v2732 = vld [vmem:[%s14 + $0x8] sm:$0xff]
    %v2733 = vld [vmem:[%s14 + $0x10] sm:$0xff]
    %v2734 = vld [vmem:[%s14 + $0x18] sm:$0xff]
    %v2735 = vld [vmem:[%s14 + $0x20] sm:$0xff]
    %v2736 = vld [vmem:[%s14 + $0x28] sm:$0xff]
    %v2737 = vld [vmem:[%s14 + $0x30] sm:$0xff]
    %v2738 = vld [vmem:[%s14 + $0x38] sm:$0xff]
    %v2739 = vld [vmem:[%s14 + $0x40] sm:$0xff]
    %v2740 = vld [vmem:[%s14 + $0x48] sm:$0xff]
    %v2741 = vld [vmem:[%s14 + $0x50] sm:$0xf]
    %v2742 = vld [vmem:[%s15] sm:$0x1]
    %v2744 = vlaneseq
    %v2745 = vshrl.u32 %v2744, 7
    %v2746 = vsub.s32 0, %v2745
    %v2747 = vrot.slane %v2742, %v2746
    %v2750 = vsel %vm1148, %v2730, 0
    %v2753 = vsel %vm933, %v2741, 0
    %2755 = vmatprep.subr.mxu0 0.0
    %2756 = vmatpush1.msra.mxu0 %v2731
    %2757 = vmatprep.subr.mxu0 0.0
    %2758 = vmatpush1.msra.mxu0 %v2732
    %2759 = vmatprep.subr.mxu0 0.0
    %2760 = vmatpush1.msra.mxu0 %v2733
    %2761 = vmatprep.subr.mxu0 0.0
    %2762 = vmatpush1.msra.mxu0 %v2734
    %2763 = vmatprep.subr.mxu0 0.0
    %2764 = vmatpush1.msra.mxu0 %v2735
    %2765 = vmatprep.subr.mxu0 0.0
    %2766 = vmatpush1.msra.mxu0 %v2736
    %2767 = vmatprep.subr.mxu0 0.0
    %2768 = vmatpush1.msra.mxu0 %v2737
    %2769 = vmatprep.subr.mxu0 0.0
    %2770 = vmatpush1.msra.mxu0 %v2738
    %2771 = vmatprep.subr.mxu0 0.0
    %2772 = vmatpush1.msra.mxu0 %v2739
    %2773 = vmatprep.subr.mxu0 0.0
    %2774 = vmatpush1.msra.mxu0 %v2740
    %2775 = vmatprep.subr.mxu0 0.0
    %2776 = vmatpush1.msra.mxu0 %v2753
    %2777 = vmatprep.subr.mxu0 0.0
    %2778 = vmatpush1.msra.mxu0 0.0
    %2779 = vmatprep.subr.mxu0 0.0
    %2780 = vmatpush1.msra.mxu0 0.0
    %2781 = vmatprep.subr.mxu0 0.0
    %2782 = vmatpush1.msra.mxu0 0.0
    %2783 = vmatprep.subr.mxu0 0.0
    %2784 = vmatpush1.msra.mxu0 0.0
    %2785 = vmatprep.subr.mxu0 0.0
    %2786 = vmatpush1.msra.mxu0 0.0
    %2787 = vmatprep.subr.mxu0 0.0
    %2788 = vmatpush1.msra.mxu0 0.0
    %2789 = vmatprep.subr.mxu0 0.0
    %2790 = vmatpush1.msra.mxu0 0.0
    %2791 = vmatprep.subr.mxu0 0.0
    %2792 = vmatpush1.msra.mxu0 0.0
    %2793 = vmatprep.subr.mxu0 0.0
    %2794 = vmatpush1.msra.mxu0 0.0
    %2795 = vmatprep.subr.mxu0 0.0
    %2796 = vmatpush1.msra.mxu0 0.0
    %2797 = vmatprep.subr.mxu0 0.0
    %2798 = vmatpush1.msra.mxu0 0.0
    %2799 = vmatprep.subr.mxu0 0.0
    %2800 = vmatpush1.msra.mxu0 0.0
    %2801 = vmatprep.subr.mxu0 0.0
    %2802 = vmatpush1.msra.mxu0 0.0
    %2803 = vmatprep.subr.mxu0 0.0
    %2804 = vmatpush1.msra.mxu0 0.0
    %2805 = vmatprep.subr.mxu0 0.0
    %2806 = vmatpush1.msra.mxu0 0.0
    %2807 = vmatprep.subr.mxu0 0.0
    %2808 = vmatpush1.msra.mxu0 0.0
    %2809 = vmatprep.subr.mxu0 0.0
    %2810 = vmatpush1.msra.mxu0 0.0
    %2811 = vmatprep.subr.mxu0 0.0
    %2812 = vmatpush1.msra.mxu0 0.0
    %2813 = vmatprep.subr.mxu0 0.0
    %2814 = vmatpush1.msra.mxu0 0.0
    %2815 = vmatprep.subr.mxu0 0.0
    %2816 = vmatpush1.msra.mxu0 0.0
    %2817 = vmatprep.subr.mxu0 0.0
    %2818 = vmatpush1.msra.mxu0 0.0
    %2819 = vmatprep.mubr.f32.mxu0 0.0
    %2820 = vmatmul.mubr.f32.gmra.mrb[0].mxu0 %v2750
    %v2821 = vpop.f32.mrb[0].mxu0
    %v2822 = vadd.f32 %v2747, %v2821
    %v2823 = vpop.f32.mrb[0].mxu0
    %2824 = vdwg.mxu0
    %vm2825 = vcmask 74752
    %v2826 = vsel %vm2825, %v2822, -inf
    %v2827 = vrot.slane %v2826, 4
    %v2828 = vmax.f32 %v2826, %v2827
    %v2829 = vrot.slane %v2828, 2
    %v2830 = vmax.f32 %v2828, %v2829
    %v2831 = vrot.slane %v2830, 1
    %v2832 = vmax.f32 %v2830, %v2831
    %v2833 = vsub.f32 %v2822, %v2832
    %v2834 = vmul.f32 %v2833, 1.442695
    %v2835 = vpow.pop %v2834
    %v2836 = vsel %vm2825, %v2835, 0.0
    %v2837 = vrot.slane %v2836, 4
    %v2838 = vadd.f32 %v2836, %v2837
    %v2839 = vrot.slane %v2838, 2
    %v2840 = vadd.f32 %v2838, %v2839
    %v2841 = vrot.slane %v2840, 1
    %v2842 = vadd.f32 %v2840, %v2841
    %v2843 = vrcp.pop %v2842
    %v2844 = vmul.f32 %v2835, %v2843
    %2845 = vst.msk [vmem:[#allocation4] sm:$0x3] %vm2825, %v2844
    // Predicated region
    $region66: #{lenet_forward.1} parent=1 // pred_check
      _
    $region67: #{lenet_forward.1} parent=1 // pred_check_branch
      %2847 = sbr.rel (0) target = $region69
    $region68: #{lenet_forward.1} parent=1 // pred_region
      %s2849 = ssub.s32 32, 32
      %2850 = vsyncadd [#allocation5], %s2849
      %s2852 = sshll.u32 [#allocation4], 4
      %s2853 = int_to_ptr.vmem [resolvable:$true] %s2852
      %2855 = dma.vmem_to_hbm [thread:$0]  %s2853, 32, %s16, [#allocation5]
    $region69: #{lenet_forward.1} parent=1 // pred_fallthru
      _
    // Predicated region
    $region70: #{lenet_forward.1} parent=1 // pred_check
      _
    $region71: #{lenet_forward.1} parent=1 // pred_check_branch
      %2857 = sbr.rel (0) target = $region73
    $region72: #{lenet_forward.1} parent=1 // pred_region
      %2858 = dma.done [#allocation5], 32
    $region73: #{lenet_forward.1} parent=1 // pred_fallthru
      _
    %2859 = vsyncpa [#allocation5], 1

</llo_original>
